<compile_context>
chip_gen: v5e
topology: v5e:2x2
jax: 0.10.0
libtpu: 0.0.40
codegen_flags: <defaults>
</compile_context>

<pallas_src>
import math

import jax
import jax.numpy as jnp
import numpy as np
from jax import lax
from jax.experimental import pallas as pl
from jax.experimental.pallas import tpu as pltpu

LN_EPS = 1e-5
NUM_HEADS = 8
NEG_INF = -1e9


def _full_spec(shape):
    nd = len(shape)
    # index_map receives (grid_idx, *scalar_prefetch_refs); absorb them all.
    return pl.BlockSpec(shape, lambda *_: (0,) * nd)


def _ln(y, g, beta):
    mu = jnp.mean(y, axis=-1, keepdims=True)
    var = jnp.mean((y - mu) ** 2, axis=-1, keepdims=True)
    return (y - mu) * lax.rsqrt(var + LN_EPS) * g + beta


def _lin_ln_relu(x, w_ref, b_ref, g_ref, be_ref):
    y = jnp.dot(x, w_ref[...], preferred_element_type=jnp.float32) + b_ref[...]
    return jnp.maximum(_ln(y, g_ref[...], be_ref[...]), 0.0)


# --------------------------- fully fused forward kernel ---------------------------
def _fused_kernel(lengths_ref,                              # SMEM (B,) int32  (prefetch)
                  brand_ref, seq_ref,                       # (B,Db), (T*B,Dg) time-major
                  wh_ref, bh_ref, gh_ref, beh_ref,          # brand_to_h  Linear+LN
                  wc_ref, bc_ref, gc_ref, bec_ref,          # brand_to_c  Linear+LN
                  wp_ref, bp_ref, gp_ref, bep_ref,          # grid projection Linear+LN
                  wih_ref, whh_ref, bl_ref,                 # LSTM (W_ih^T, W_hh^T, b_ih+b_hh)
                  wqkv_ref, bqkv_ref, wo_ref, bo_ref,       # MHA (W_o pre-split (NH,hd,H))
                  g1_ref, be1_ref,                          # norm1
                  wout_ref, bout_ref,                       # output head
                  o_ref,                                    # out (B, num_grids)
                  gx_ref, hflat_ref):                       # VMEM scratch
    B = brand_ref.shape[0]
    H = whh_ref.shape[0]
    TB = seq_ref.shape[0]
    T = TB // B
    hd = H // NUM_HEADS
    scale = 1.0 / math.sqrt(hd)

    # ----- initial LSTM state from brand embedding -----
    brand = brand_ref[...]
    h0 = _lin_ln_relu(brand, wh_ref, bh_ref, gh_ref, beh_ref)            # (B, H)
    c0 = _lin_ln_relu(brand, wc_ref, bc_ref, gc_ref, bec_ref)            # (B, H)

    # ----- grid projection + hoisted input-gate matmul for ALL timesteps -----
    proj = _lin_ln_relu(seq_ref[...], wp_ref, bp_ref, gp_ref, bep_ref)   # (T*B, H) time-major
    gx_ref[...] = (jnp.dot(proj, wih_ref[...], preferred_element_type=jnp.float32)
                   + bl_ref[...])                                        # (T*B, 4H)

    whh = whh_ref[...]                                                   # resident weight

    # ----- recurrent LSTM: only h @ W_hh left on the serial path -----
    def lstm_step(t, carry):
        h, c = carry
        start = pl.multiple_of(t * B, B)
        gates = gx_ref[pl.ds(start, B), :] + jnp.dot(
            h, whh, preferred_element_type=jnp.float32)                  # (B, 4H) [i,f,g,o]
        sig = jax.nn.sigmoid(gates)        # full-vreg EUP pass
        th = jnp.tanh(gates)               # full-vreg EUP pass
        i = sig[:, 0:H]
        f = sig[:, H:2 * H]
        g = th[:, 2 * H:3 * H]
        o = sig[:, 3 * H:4 * H]
        c = f * c + i * g
        h = o * jnp.tanh(c)
        # batch-major layout (row = b*T + t) so attention reads contiguous slabs
        for b in range(B):
            hflat_ref[pl.ds(b * T + t, 1), :] = h[b:b + 1, :]
        return (h, c)

    lax.fori_loop(0, T, lstm_step, (h0, c0), unroll=True)

    # NOTE: LSTM state keeps updating past each sequence's true length; those
    # outputs are never consumed (only valid positions feed the final gather).

    # ----- 8-head self-attention + residual + LayerNorm + last-step gather -----
    hs = hflat_ref[...]                                                  # (B*T, H) batch-major
    qkv = (jnp.dot(hs, wqkv_ref[...], preferred_element_type=jnp.float32)
           + bqkv_ref[...])                                              # (B*T, 3H)
    wo3 = wo_ref[...]                                                    # (NH, hd, H)
    bo = bo_ref[...]
    g1 = g1_ref[...]
    be1 = be1_ref[...]
    kpos = lax.broadcasted_iota(jnp.int32, (1, 1, T), 2)                 # key positions
    qpos = lax.broadcasted_iota(jnp.int32, (T, 1), 0)                    # query positions

    finals = []
    for b in range(B):                       # short unrolled loop over batch
        L = lengths_ref[b]
        x_b = hs[b * T:(b + 1) * T, :]                                   # (T, H)
        qkv_b = qkv[b * T:(b + 1) * T, :]                                # (T, 3H)
        # head split via static lane slices stacked on a new leading (batch) axis
        q_h = jnp.stack([qkv_b[:, h * hd:(h + 1) * hd]
                         for h in range(NUM_HEADS)], axis=0)             # (NH, T, hd)
        k_h = jnp.stack([qkv_b[:, H + h * hd:H + (h + 1) * hd]
                         for h in range(NUM_HEADS)], axis=0)
        v_h = jnp.stack([qkv_b[:, 2 * H + h * hd:2 * H + (h + 1) * hd]
                         for h in range(NUM_HEADS)], axis=0)
        # heads batched on the MXU
        s = jnp.einsum('hqd,hkd->hqk', q_h, k_h,
                       preferred_element_type=jnp.float32) * scale       # (NH, T, T)
        s = s + jnp.where(kpos < L, 0.0, NEG_INF)                        # key padding mask
        m = jnp.max(s, axis=-1, keepdims=True)
        p = jnp.exp(s - m)
        p = p / jnp.sum(p, axis=-1, keepdims=True)
        ao = jnp.einsum('hqk,hkd->hqd', p, v_h,
                        preferred_element_type=jnp.float32)              # (NH, T, hd)
        # output projection: head-batched matmul + head-sum (no concatenate)
        attn = jnp.sum(jnp.einsum('hqd,hdk->hqk', ao, wo3,
                                  preferred_element_type=jnp.float32),
                       axis=0) + bo                                      # (T, H)
        y = _ln(x_b + attn, g1, be1)                                     # (T, H)
        # gather row (L-1) via one-hot reduce; zero row if L == 0
        onehot = jnp.where((qpos == jnp.maximum(L - 1, 0)) & (L > 0), 1.0, 0.0)
        finals.append(jnp.sum(y * onehot, axis=0, keepdims=True))        # (1, H)

    final = jnp.concatenate(finals, axis=0)                              # (B, H)
    o_ref[...] = (jnp.dot(final, wout_ref[...], preferred_element_type=jnp.float32)
                  + bout_ref[...]).astype(o_ref.dtype)                   # (B, G) lane-dense


# --------------------------------- wrapper ---------------------------------
def site_selection_forward(params, brand_vecs, seq_grid_embeds, seq_lengths):
    B, T, Dg = seq_grid_embeds.shape
    H = params['norm1'][0].shape[1]
    G = params['out'][0].shape[1]
    hd = H // NUM_HEADS

    # time-major flattened grid features: row = t*B + b (single XLA pass over raw input)
    seq_tb = jnp.transpose(seq_grid_embeds, (1, 0, 2)).reshape(T * B, Dg)
    lengths = seq_lengths.astype(jnp.int32)

    wh, bh, gh, beh = params['brand_to_h']
    wc, bc, gc, bec = params['brand_to_c']
    wp, bp, gp, bep = params['grid_proj']
    wih, whh, bl = params['lstm']
    wqkv, bqkv, wo, bo = params['mha']
    g1, be1 = params['norm1']
    wout, bout = params['out']
    wo3 = wo.reshape(NUM_HEADS, hd, H)      # one-time host/XLA-side head split of W_o

    args = (lengths, brand_vecs, seq_tb,
            wh, bh, gh, beh, wc, bc, gc, bec, wp, bp, gp, bep,
            wih, whh, bl, wqkv, bqkv, wo3, bo, g1, be1, wout, bout)

    grid_spec = pltpu.PrefetchScalarGridSpec(
        num_scalar_prefetch=1,                       # seq_lengths -> SMEM
        grid=(1,),
        in_specs=[_full_spec(a.shape) for a in args[1:]],
        out_specs=_full_spec((B, G)),
        scratch_shapes=[pltpu.VMEM((T * B, 4 * H), jnp.float32),   # hoisted input gates
                        pltpu.VMEM((B * T, H), jnp.float32)],      # lstm hidden states
    )
    return pl.pallas_call(
        _fused_kernel,
        out_shape=jax.ShapeDtypeStruct((B, G), jnp.float32),
        grid_spec=grid_spec,
        compiler_params=pltpu.CompilerParams(dimension_semantics=("arbitrary",)),
    )(*args)


# ------------------------------- parameters -------------------------------
def init_params(key, num_grids, brand_dim, grid_dim, hidden):
    ks = list(jax.random.split(key, 16))

    def u(k, shape, fan_in):
        s = 1.0 / math.sqrt(fan_in)
        return jax.random.uniform(k, shape, jnp.float32, -s, s)

    ones = jnp.ones((1, hidden), jnp.float32)
    zeros = jnp.zeros((1, hidden), jnp.float32)
    params = {
        'brand_to_h': (u(ks[0], (brand_dim, hidden), brand_dim),
                       u(ks[1], (1, hidden), brand_dim), ones, zeros),
        'brand_to_c': (u(ks[2], (brand_dim, hidden), brand_dim),
                       u(ks[3], (1, hidden), brand_dim), ones, zeros),
        'grid_proj': (u(ks[4], (grid_dim, hidden), grid_dim),
                      u(ks[5], (1, hidden), grid_dim), ones, zeros),
        'lstm': (u(ks[6], (hidden, 4 * hidden), hidden),          # W_ih^T
                 u(ks[7], (hidden, 4 * hidden), hidden),          # W_hh^T
                 u(ks[8], (1, 4 * hidden), hidden) + u(ks[9], (1, 4 * hidden), hidden)),
        'mha': (u(ks[10], (hidden, 3 * hidden), hidden),          # in_proj^T
                jnp.zeros((1, 3 * hidden), jnp.float32),
                u(ks[11], (hidden, hidden), hidden),              # out_proj^T
                jnp.zeros((1, hidden), jnp.float32)),
        'norm1': (ones, zeros),
        'out': (u(ks[12], (hidden, num_grids), hidden),
                u(ks[13], (1, num_grids), hidden)),
    }
    return params


# ---------------- pure-JAX reference (sanity check of the fused kernel) ----------------
def ref_forward(params, brand_vecs, seq, lengths):
    B, T, Dg = seq.shape
    H = params['norm1'][0].shape[1]

    def lin_ln_relu(x, w, b, g, be):
        y = x @ w + b[0]
        mu = y.mean(-1, keepdims=True)
        var = ((y - mu) ** 2).mean(-1, keepdims=True)
        return jnp.maximum((y - mu) / jnp.sqrt(var + LN_EPS) * g[0] + be[0], 0.0)

    h0 = lin_ln_relu(brand_vecs, *params['brand_to_h'])
    c0 = lin_ln_relu(brand_vecs, *params['brand_to_c'])
    proj = lin_ln_relu(seq.reshape(B * T, Dg), *params['grid_proj']).reshape(B, T, H)

    wih, whh, bl = params['lstm']

    def step(carry, x_t):
        h, c = carry
        gates = x_t @ wih + h @ whh + bl[0]
        i = jax.nn.sigmoid(gates[:, :H])
        f = jax.nn.sigmoid(gates[:, H:2 * H])
        g = jnp.tanh(gates[:, 2 * H:3 * H])
        o = jax.nn.sigmoid(gates[:, 3 * H:])
        c = f * c + i * g
        h = o * jnp.tanh(c)
        return (h, c), h

    _, ys = lax.scan(step, (h0, c0), jnp.transpose(proj, (1, 0, 2)))
    valid = jnp.arange(T)[None, :] < lengths[:, None]
    lstm_out = jnp.transpose(ys, (1, 0, 2)) * valid[..., None]

    wqkv, bqkv, wo, bo = params['mha']
    qkv = lstm_out @ wqkv + bqkv[0]
    q, k, v = jnp.split(qkv, 3, axis=-1)
    hd = H // NUM_HEADS

    def split_heads(x):
        return x.reshape(B, T, NUM_HEADS, hd).transpose(0, 2, 1, 3)

    qh, kh, vh = split_heads(q), split_heads(k), split_heads(v)
    s = jnp.einsum('bhqd,bhkd->bhqk', qh, kh) / math.sqrt(hd)
    s = s + jnp.where(valid, 0.0, NEG_INF)[:, None, None, :]
    p = jax.nn.softmax(s, axis=-1)
    ao = jnp.einsum('bhqk,bhkd->bhqd', p, vh).transpose(0, 2, 1, 3).reshape(B, T, H)
    ao = ao @ wo + bo[0]
    g1, b1 = params['norm1']
    y = lstm_out + ao
    mu = y.mean(-1, keepdims=True)
    var = ((y - mu) ** 2).mean(-1, keepdims=True)
    y = (y - mu) / jnp.sqrt(var + LN_EPS) * g1[0] + b1[0]

    idx = jnp.clip(lengths - 1, 0, T - 1).astype(jnp.int32)
    final = jnp.take_along_axis(y, idx[:, None, None], axis=1)[:, 0, :]
    final = jnp.where((lengths > 0)[:, None], final, 0.0)
    w_out, b_out = params['out']
    return final @ w_out + b_out[0]


if __name__ == "__main__":
    B, T = 2, 8
    brand_dim, grid_dim, hidden, num_grids = 16, 24, 32, 256

    key = jax.random.PRNGKey(0)
    kp, kb, ks = jax.random.split(key, 3)
    params = init_params(kp, num_grids, brand_dim, grid_dim, hidden)
    brand_vecs = jax.random.normal(kb, (B, brand_dim), jnp.float32)
    seq_embeds = jax.random.normal(ks, (B, T, grid_dim), jnp.float32)
    seq_lengths = jnp.array([8, 5], dtype=jnp.int32)

    logits = site_selection_forward(params, brand_vecs, seq_embeds, seq_lengths)
    logits = jax.block_until_ready(logits)
    assert logits.shape == (B, num_grids)

    ref = ref_forward(params, brand_vecs, seq_embeds, seq_lengths)
    np.testing.assert_allclose(np.asarray(logits), np.asarray(ref), rtol=2e-2, atol=2e-2)

    print("KERNEL_OK")
</pallas_src>

<mosaic_0001>
module attributes {stable_mosaic.version = 11 : i64} {
  func.func @_fused_kernel(%arg0: i32, %arg1: memref<2xi32, #tpu.memory_space<smem>>, %arg2: memref<2x16xf32, #tpu.memory_space<vmem>>, %arg3: memref<16x24xf32, #tpu.memory_space<vmem>>, %arg4: memref<16x32xf32, #tpu.memory_space<vmem>>, %arg5: memref<1x32xf32, #tpu.memory_space<vmem>>, %arg6: memref<1x32xf32, #tpu.memory_space<vmem>>, %arg7: memref<1x32xf32, #tpu.memory_space<vmem>>, %arg8: memref<16x32xf32, #tpu.memory_space<vmem>>, %arg9: memref<1x32xf32, #tpu.memory_space<vmem>>, %arg10: memref<1x32xf32, #tpu.memory_space<vmem>>, %arg11: memref<1x32xf32, #tpu.memory_space<vmem>>, %arg12: memref<24x32xf32, #tpu.memory_space<vmem>>, %arg13: memref<1x32xf32, #tpu.memory_space<vmem>>, %arg14: memref<1x32xf32, #tpu.memory_space<vmem>>, %arg15: memref<1x32xf32, #tpu.memory_space<vmem>>, %arg16: memref<32x128xf32, #tpu.memory_space<vmem>>, %arg17: memref<32x128xf32, #tpu.memory_space<vmem>>, %arg18: memref<1x128xf32, #tpu.memory_space<vmem>>, %arg19: memref<32x96xf32, #tpu.memory_space<vmem>>, %arg20: memref<1x96xf32, #tpu.memory_space<vmem>>, %arg21: memref<8x4x32xf32, #tpu.memory_space<vmem>>, %arg22: memref<1x32xf32, #tpu.memory_space<vmem>>, %arg23: memref<1x32xf32, #tpu.memory_space<vmem>>, %arg24: memref<1x32xf32, #tpu.memory_space<vmem>>, %arg25: memref<32x256xf32, #tpu.memory_space<vmem>>, %arg26: memref<1x256xf32, #tpu.memory_space<vmem>>, %arg27: memref<2x256xf32, #tpu.memory_space<vmem>>, %arg28: memref<16x128xf32, #tpu.memory_space<vmem>>, %arg29: memref<16x32xf32, #tpu.memory_space<vmem>>) attributes {dimension_semantics = [#tpu.dimension_semantics<arbitrary>], iteration_bounds = array<i64: 1>, scalar_prefetch = 1 : i64, scratch_operands = 2 : i64, tpu.core_type = #tpu.core_type<tc>, window_params = [{pipeline_mode = #tpu.pipeline_mode<synchronous>, transform_indices = @transform_0, window_bounds = array<i64: 2, 16>}, {pipeline_mode = #tpu.pipeline_mode<synchronous>, transform_indices = @transform_1, window_bounds = array<i64: 16, 24>}, {pipeline_mode = #tpu.pipeline_mode<synchronous>, transform_indices = @transform_2, window_bounds = array<i64: 16, 32>}, {pipeline_mode = #tpu.pipeline_mode<synchronous>, transform_indices = @transform_3, window_bounds = array<i64: 1, 32>}, {pipeline_mode = #tpu.pipeline_mode<synchronous>, transform_indices = @transform_4, window_bounds = array<i64: 1, 32>}, {pipeline_mode = #tpu.pipeline_mode<synchronous>, transform_indices = @transform_5, window_bounds = array<i64: 1, 32>}, {pipeline_mode = #tpu.pipeline_mode<synchronous>, transform_indices = @transform_6, window_bounds = array<i64: 16, 32>}, {pipeline_mode = #tpu.pipeline_mode<synchronous>, transform_indices = @transform_7, window_bounds = array<i64: 1, 32>}, {pipeline_mode = #tpu.pipeline_mode<synchronous>, transform_indices = @transform_8, window_bounds = array<i64: 1, 32>}, {pipeline_mode = #tpu.pipeline_mode<synchronous>, transform_indices = @transform_9, window_bounds = array<i64: 1, 32>}, {pipeline_mode = #tpu.pipeline_mode<synchronous>, transform_indices = @transform_10, window_bounds = array<i64: 24, 32>}, {pipeline_mode = #tpu.pipeline_mode<synchronous>, transform_indices = @transform_11, window_bounds = array<i64: 1, 32>}, {pipeline_mode = #tpu.pipeline_mode<synchronous>, transform_indices = @transform_12, window_bounds = array<i64: 1, 32>}, {pipeline_mode = #tpu.pipeline_mode<synchronous>, transform_indices = @transform_13, window_bounds = array<i64: 1, 32>}, {pipeline_mode = #tpu.pipeline_mode<synchronous>, transform_indices = @transform_14, window_bounds = array<i64: 32, 128>}, {pipeline_mode = #tpu.pipeline_mode<synchronous>, transform_indices = @transform_15, window_bounds = array<i64: 32, 128>}, {pipeline_mode = #tpu.pipeline_mode<synchronous>, transform_indices = @transform_16, window_bounds = array<i64: 1, 128>}, {pipeline_mode = #tpu.pipeline_mode<synchronous>, transform_indices = @transform_17, window_bounds = array<i64: 32, 96>}, {pipeline_mode = #tpu.pipeline_mode<synchronous>, transform_indices = @transform_18, window_bounds = array<i64: 1, 96>}, {pipeline_mode = #tpu.pipeline_mode<synchronous>, transform_indices = @transform_19, window_bounds = array<i64: 8, 4, 32>}, {pipeline_mode = #tpu.pipeline_mode<synchronous>, transform_indices = @transform_20, window_bounds = array<i64: 1, 32>}, {pipeline_mode = #tpu.pipeline_mode<synchronous>, transform_indices = @transform_21, window_bounds = array<i64: 1, 32>}, {pipeline_mode = #tpu.pipeline_mode<synchronous>, transform_indices = @transform_22, window_bounds = array<i64: 1, 32>}, {pipeline_mode = #tpu.pipeline_mode<synchronous>, transform_indices = @transform_23, window_bounds = array<i64: 32, 256>}, {pipeline_mode = #tpu.pipeline_mode<synchronous>, transform_indices = @transform_24, window_bounds = array<i64: 1, 256>}, {pipeline_mode = #tpu.pipeline_mode<synchronous>, transform_indices = @transform_25, window_bounds = array<i64: 2, 256>}]} {
    %c0 = arith.constant 0 : index
    %c0_0 = arith.constant 0 : index
    %0 = vector.load %arg2[%c0, %c0_0] : memref<2x16xf32, #tpu.memory_space<vmem>>, vector<2x16xf32>
    %c0_1 = arith.constant 0 : index
    %c0_2 = arith.constant 0 : index
    %1 = vector.load %arg4[%c0_1, %c0_2] : memref<16x32xf32, #tpu.memory_space<vmem>>, vector<16x32xf32>
    %cst = arith.constant dense<0.000000e+00> : vector<2x32xf32>
    %2 = tpu.matmul %0, %1, %cst {dimension_numbers = #tpu.dot_dimension_numbers<[1], [0], [0], [1], [0, 0, 1, 1], [], []>} : vector<2x16xf32>, vector<16x32xf32>, vector<2x32xf32> -> vector<2x32xf32>
    %c0_3 = arith.constant 0 : index
    %c0_4 = arith.constant 0 : index
    %3 = vector.load %arg5[%c0_3, %c0_4] : memref<1x32xf32, #tpu.memory_space<vmem>>, vector<1x32xf32>
    %4 = vector.broadcast %3 : vector<1x32xf32> to vector<2x32xf32>
    %5 = arith.addf %2, %4 : vector<2x32xf32>
    %c0_5 = arith.constant 0 : index
    %c0_6 = arith.constant 0 : index
    %6 = vector.load %arg6[%c0_5, %c0_6] : memref<1x32xf32, #tpu.memory_space<vmem>>, vector<1x32xf32>
    %c0_7 = arith.constant 0 : index
    %c0_8 = arith.constant 0 : index
    %7 = vector.load %arg7[%c0_7, %c0_8] : memref<1x32xf32, #tpu.memory_space<vmem>>, vector<1x32xf32>
    %cst_9 = arith.constant dense<0.000000e+00> : vector<2xf32>
    %8 = vector.multi_reduction <add>, %5, %cst_9 [1] : vector<2x32xf32> to vector<2xf32>
    %9 = vector.shape_cast %8 : vector<2xf32> to vector<2x1xf32>
    %cst_10 = arith.constant 3.200000e+01 : f32
    %10 = vector.broadcast %cst_10 : f32 to vector<2x1xf32>
    %11 = arith.divf %9, %10 : vector<2x1xf32>
    %12 = vector.broadcast %11 : vector<2x1xf32> to vector<2x32xf32>
    %13 = arith.subf %5, %12 : vector<2x32xf32>
    %14 = arith.mulf %13, %13 : vector<2x32xf32>
    %cst_11 = arith.constant dense<0.000000e+00> : vector<2xf32>
    %15 = vector.multi_reduction <add>, %14, %cst_11 [1] : vector<2x32xf32> to vector<2xf32>
    %16 = vector.shape_cast %15 : vector<2xf32> to vector<2x1xf32>
    %cst_12 = arith.constant 3.200000e+01 : f32
    %17 = vector.broadcast %cst_12 : f32 to vector<2x1xf32>
    %18 = arith.divf %16, %17 : vector<2x1xf32>
    %19 = vector.broadcast %11 : vector<2x1xf32> to vector<2x32xf32>
    %20 = arith.subf %5, %19 : vector<2x32xf32>
    %cst_13 = arith.constant 9.99999974E-6 : f32
    %21 = vector.broadcast %cst_13 : f32 to vector<2x1xf32>
    %22 = arith.addf %18, %21 : vector<2x1xf32>
    %23 = math.rsqrt %22 : vector<2x1xf32>
    %24 = vector.broadcast %23 : vector<2x1xf32> to vector<2x32xf32>
    %25 = arith.mulf %20, %24 : vector<2x32xf32>
    %26 = vector.broadcast %6 : vector<1x32xf32> to vector<2x32xf32>
    %27 = arith.mulf %25, %26 : vector<2x32xf32>
    %28 = vector.broadcast %7 : vector<1x32xf32> to vector<2x32xf32>
    %29 = arith.addf %27, %28 : vector<2x32xf32>
    %cst_14 = arith.constant 0.000000e+00 : f32
    %30 = vector.broadcast %cst_14 : f32 to vector<2x32xf32>
    %31 = arith.maximumf %29, %30 : vector<2x32xf32>
    %c0_15 = arith.constant 0 : index
    %c0_16 = arith.constant 0 : index
    %32 = vector.load %arg8[%c0_15, %c0_16] : memref<16x32xf32, #tpu.memory_space<vmem>>, vector<16x32xf32>
    %cst_17 = arith.constant dense<0.000000e+00> : vector<2x32xf32>
    %33 = tpu.matmul %0, %32, %cst_17 {dimension_numbers = #tpu.dot_dimension_numbers<[1], [0], [0], [1], [0, 0, 1, 1], [], []>} : vector<2x16xf32>, vector<16x32xf32>, vector<2x32xf32> -> vector<2x32xf32>
    %c0_18 = arith.constant 0 : index
    %c0_19 = arith.constant 0 : index
    %34 = vector.load %arg9[%c0_18, %c0_19] : memref<1x32xf32, #tpu.memory_space<vmem>>, vector<1x32xf32>
    %35 = vector.broadcast %34 : vector<1x32xf32> to vector<2x32xf32>
    %36 = arith.addf %33, %35 : vector<2x32xf32>
    %c0_20 = arith.constant 0 : index
    %c0_21 = arith.constant 0 : index
    %37 = vector.load %arg10[%c0_20, %c0_21] : memref<1x32xf32, #tpu.memory_space<vmem>>, vector<1x32xf32>
    %c0_22 = arith.constant 0 : index
    %c0_23 = arith.constant 0 : index
    %38 = vector.load %arg11[%c0_22, %c0_23] : memref<1x32xf32, #tpu.memory_space<vmem>>, vector<1x32xf32>
    %cst_24 = arith.constant dense<0.000000e+00> : vector<2xf32>
    %39 = vector.multi_reduction <add>, %36, %cst_24 [1] : vector<2x32xf32> to vector<2xf32>
    %40 = vector.shape_cast %39 : vector<2xf32> to vector<2x1xf32>
    %cst_25 = arith.constant 3.200000e+01 : f32
    %41 = vector.broadcast %cst_25 : f32 to vector<2x1xf32>
    %42 = arith.divf %40, %41 : vector<2x1xf32>
    %43 = vector.broadcast %42 : vector<2x1xf32> to vector<2x32xf32>
    %44 = arith.subf %36, %43 : vector<2x32xf32>
    %45 = arith.mulf %44, %44 : vector<2x32xf32>
    %cst_26 = arith.constant dense<0.000000e+00> : vector<2xf32>
    %46 = vector.multi_reduction <add>, %45, %cst_26 [1] : vector<2x32xf32> to vector<2xf32>
    %47 = vector.shape_cast %46 : vector<2xf32> to vector<2x1xf32>
    %cst_27 = arith.constant 3.200000e+01 : f32
    %48 = vector.broadcast %cst_27 : f32 to vector<2x1xf32>
    %49 = arith.divf %47, %48 : vector<2x1xf32>
    %50 = vector.broadcast %42 : vector<2x1xf32> to vector<2x32xf32>
    %51 = arith.subf %36, %50 : vector<2x32xf32>
    %cst_28 = arith.constant 9.99999974E-6 : f32
    %52 = vector.broadcast %cst_28 : f32 to vector<2x1xf32>
    %53 = arith.addf %49, %52 : vector<2x1xf32>
    %54 = math.rsqrt %53 : vector<2x1xf32>
    %55 = vector.broadcast %54 : vector<2x1xf32> to vector<2x32xf32>
    %56 = arith.mulf %51, %55 : vector<2x32xf32>
    %57 = vector.broadcast %37 : vector<1x32xf32> to vector<2x32xf32>
    %58 = arith.mulf %56, %57 : vector<2x32xf32>
    %59 = vector.broadcast %38 : vector<1x32xf32> to vector<2x32xf32>
    %60 = arith.addf %58, %59 : vector<2x32xf32>
    %cst_29 = arith.constant 0.000000e+00 : f32
    %61 = vector.broadcast %cst_29 : f32 to vector<2x32xf32>
    %62 = arith.maximumf %60, %61 : vector<2x32xf32>
    %c0_30 = arith.constant 0 : index
    %c0_31 = arith.constant 0 : index
    %63 = vector.load %arg3[%c0_30, %c0_31] : memref<16x24xf32, #tpu.memory_space<vmem>>, vector<16x24xf32>
    %c0_32 = arith.constant 0 : index
    %c0_33 = arith.constant 0 : index
    %64 = vector.load %arg12[%c0_32, %c0_33] : memref<24x32xf32, #tpu.memory_space<vmem>>, vector<24x32xf32>
    %cst_34 = arith.constant dense<0.000000e+00> : vector<16x32xf32>
    %65 = tpu.matmul %63, %64, %cst_34 {dimension_numbers = #tpu.dot_dimension_numbers<[1], [0], [0], [1], [0, 0, 1, 1], [], []>} : vector<16x24xf32>, vector<24x32xf32>, vector<16x32xf32> -> vector<16x32xf32>
    %c0_35 = arith.constant 0 : index
    %c0_36 = arith.constant 0 : index
    %66 = vector.load %arg13[%c0_35, %c0_36] : memref<1x32xf32, #tpu.memory_space<vmem>>, vector<1x32xf32>
    %67 = vector.broadcast %66 : vector<1x32xf32> to vector<16x32xf32>
    %68 = arith.addf %65, %67 : vector<16x32xf32>
    %c0_37 = arith.constant 0 : index
    %c0_38 = arith.constant 0 : index
    %69 = vector.load %arg14[%c0_37, %c0_38] : memref<1x32xf32, #tpu.memory_space<vmem>>, vector<1x32xf32>
    %c0_39 = arith.constant 0 : index
    %c0_40 = arith.constant 0 : index
    %70 = vector.load %arg15[%c0_39, %c0_40] : memref<1x32xf32, #tpu.memory_space<vmem>>, vector<1x32xf32>
    %cst_41 = arith.constant dense<0.000000e+00> : vector<16xf32>
    %71 = vector.multi_reduction <add>, %68, %cst_41 [1] : vector<16x32xf32> to vector<16xf32>
    %72 = vector.shape_cast %71 : vector<16xf32> to vector<16x1xf32>
    %cst_42 = arith.constant 3.200000e+01 : f32
    %73 = vector.broadcast %cst_42 : f32 to vector<16x1xf32>
    %74 = arith.divf %72, %73 : vector<16x1xf32>
    %75 = vector.broadcast %74 : vector<16x1xf32> to vector<16x32xf32>
    %76 = arith.subf %68, %75 : vector<16x32xf32>
    %77 = arith.mulf %76, %76 : vector<16x32xf32>
    %cst_43 = arith.constant dense<0.000000e+00> : vector<16xf32>
    %78 = vector.multi_reduction <add>, %77, %cst_43 [1] : vector<16x32xf32> to vector<16xf32>
    %79 = vector.shape_cast %78 : vector<16xf32> to vector<16x1xf32>
    %cst_44 = arith.constant 3.200000e+01 : f32
    %80 = vector.broadcast %cst_44 : f32 to vector<16x1xf32>
    %81 = arith.divf %79, %80 : vector<16x1xf32>
    %82 = vector.broadcast %74 : vector<16x1xf32> to vector<16x32xf32>
    %83 = arith.subf %68, %82 : vector<16x32xf32>
    %cst_45 = arith.constant 9.99999974E-6 : f32
    %84 = vector.broadcast %cst_45 : f32 to vector<16x1xf32>
    %85 = arith.addf %81, %84 : vector<16x1xf32>
    %86 = math.rsqrt %85 : vector<16x1xf32>
    %87 = vector.broadcast %86 : vector<16x1xf32> to vector<16x32xf32>
    %88 = arith.mulf %83, %87 : vector<16x32xf32>
    %89 = vector.broadcast %69 : vector<1x32xf32> to vector<16x32xf32>
    %90 = arith.mulf %88, %89 : vector<16x32xf32>
    %91 = vector.broadcast %70 : vector<1x32xf32> to vector<16x32xf32>
    %92 = arith.addf %90, %91 : vector<16x32xf32>
    %cst_46 = arith.constant 0.000000e+00 : f32
    %93 = vector.broadcast %cst_46 : f32 to vector<16x32xf32>
    %94 = arith.maximumf %92, %93 : vector<16x32xf32>
    %c0_47 = arith.constant 0 : index
    %c0_48 = arith.constant 0 : index
    %95 = vector.load %arg16[%c0_47, %c0_48] : memref<32x128xf32, #tpu.memory_space<vmem>>, vector<32x128xf32>
    %cst_49 = arith.constant dense<0.000000e+00> : vector<16x128xf32>
    %96 = tpu.matmul %94, %95, %cst_49 {dimension_numbers = #tpu.dot_dimension_numbers<[1], [0], [0], [1], [0, 0, 1, 1], [], []>} : vector<16x32xf32>, vector<32x128xf32>, vector<16x128xf32> -> vector<16x128xf32>
    %c0_50 = arith.constant 0 : index
    %c0_51 = arith.constant 0 : index
    %97 = vector.load %arg18[%c0_50, %c0_51] : memref<1x128xf32, #tpu.memory_space<vmem>>, vector<1x128xf32>
    %98 = vector.broadcast %97 : vector<1x128xf32> to vector<16x128xf32>
    %99 = arith.addf %96, %98 : vector<16x128xf32>
    %c0_52 = arith.constant 0 : index
    %c0_53 = arith.constant 0 : index
    %100 = vector.load %arg28[%c0_52, %c0_53] : memref<16x128xf32, #tpu.memory_space<vmem>>, vector<16x128xf32>
    tpu.vector_store %arg28[%c0_52, %c0_53], %99 {strides = array<i32>} : memref<16x128xf32, #tpu.memory_space<vmem>>, vector<16x128xf32>,
    %c0_54 = arith.constant 0 : index
    %c0_55 = arith.constant 0 : index
    %101 = vector.load %arg17[%c0_54, %c0_55] : memref<32x128xf32, #tpu.memory_space<vmem>>, vector<32x128xf32>
    %c0_i32 = arith.constant 0 : i32
    %c2_i32 = arith.constant 2 : i32
    %102 = arith.muli %c0_i32, %c2_i32 : i32
    %103 = tpu.assume_multiple %102, 2 : i32
    %104 = arith.index_cast %103 : i32 to index
    %c0_56 = arith.constant 0 : index
    %105 = vector.load %arg28[%104, %c0_56] : memref<16x128xf32, #tpu.memory_space<vmem>>, vector<2x128xf32>
    %cst_57 = arith.constant dense<0.000000e+00> : vector<2x128xf32>
    %106 = tpu.matmul %31, %101, %cst_57 {dimension_numbers = #tpu.dot_dimension_numbers<[1], [0], [0], [1], [0, 0, 1, 1], [], []>} : vector<2x32xf32>, vector<32x128xf32>, vector<2x128xf32> -> vector<2x128xf32>
    %107 = arith.addf %105, %106 : vector<2x128xf32>
    %108 = arith.negf %107 : vector<2x128xf32>
    %109 = math.exp %108 : vector<2x128xf32>
    %cst_58 = arith.constant 1.000000e+00 : f32
    %110 = vector.broadcast %cst_58 : f32 to vector<2x128xf32>
    %111 = arith.addf %110, %109 : vector<2x128xf32>
    %112 = arith.divf %110, %111 : vector<2x128xf32>
    %113 = math.tanh %107 : vector<2x128xf32>
    %114 = vector.extract_strided_slice %112 {offsets = [0, 0], sizes = [2, 32], strides = [1, 1]} : vector<2x128xf32> to vector<2x32xf32>
    %115 = vector.extract_strided_slice %112 {offsets = [0, 32], sizes = [2, 32], strides = [1, 1]} : vector<2x128xf32> to vector<2x32xf32>
    %116 = vector.extract_strided_slice %113 {offsets = [0, 64], sizes = [2, 32], strides = [1, 1]} : vector<2x128xf32> to vector<2x32xf32>
    %117 = vector.extract_strided_slice %112 {offsets = [0, 96], sizes = [2, 32], strides = [1, 1]} : vector<2x128xf32> to vector<2x32xf32>
    %118 = arith.mulf %115, %62 : vector<2x32xf32>
    %119 = arith.mulf %114, %116 : vector<2x32xf32>
    %120 = arith.addf %118, %119 : vector<2x32xf32>
    %121 = math.tanh %120 : vector<2x32xf32>
    %122 = arith.mulf %117, %121 : vector<2x32xf32>
    %123 = vector.extract_strided_slice %122 {offsets = [0, 0], sizes = [1, 32], strides = [1, 1]} : vector<2x32xf32> to vector<1x32xf32>
    %c0_i32_59 = arith.constant 0 : i32
    %124 = arith.addi %c0_i32_59, %c0_i32 : i32
    %125 = arith.index_cast %124 : i32 to index
    %c0_60 = arith.constant 0 : index
    %126 = vector.load %arg29[%125, %c0_60] : memref<16x32xf32, #tpu.memory_space<vmem>>, vector<1x32xf32>
    tpu.vector_store %arg29[%125, %c0_60], %123 {strides = array<i32>} : memref<16x32xf32, #tpu.memory_space<vmem>>, vector<1x32xf32>,
    %127 = vector.extract_strided_slice %122 {offsets = [1, 0], sizes = [1, 32], strides = [1, 1]} : vector<2x32xf32> to vector<1x32xf32>
    %c8_i32 = arith.constant 8 : i32
    %128 = arith.addi %c8_i32, %c0_i32 : i32
    %129 = arith.index_cast %128 : i32 to index
    %c0_61 = arith.constant 0 : index
    %130 = vector.load %arg29[%129, %c0_61] : memref<16x32xf32, #tpu.memory_space<vmem>>, vector<1x32xf32>
    tpu.vector_store %arg29[%129, %c0_61], %127 {strides = array<i32>} : memref<16x32xf32, #tpu.memory_space<vmem>>, vector<1x32xf32>,
    %c1_i32 = arith.constant 1 : i32
    %c2_i32_62 = arith.constant 2 : i32
    %131 = arith.muli %c1_i32, %c2_i32_62 : i32
    %132 = tpu.assume_multiple %131, 2 : i32
    %133 = arith.index_cast %132 : i32 to index
    %c0_63 = arith.constant 0 : index
    %134 = vector.load %arg28[%133, %c0_63] : memref<16x128xf32, #tpu.memory_space<vmem>>, vector<2x128xf32>
    %cst_64 = arith.constant dense<0.000000e+00> : vector<2x128xf32>
    %135 = tpu.matmul %122, %101, %cst_64 {dimension_numbers = #tpu.dot_dimension_numbers<[1], [0], [0], [1], [0, 0, 1, 1], [], []>} : vector<2x32xf32>, vector<32x128xf32>, vector<2x128xf32> -> vector<2x128xf32>
    %136 = arith.addf %134, %135 : vector<2x128xf32>
    %137 = arith.negf %136 : vector<2x128xf32>
    %138 = math.exp %137 : vector<2x128xf32>
    %cst_65 = arith.constant 1.000000e+00 : f32
    %139 = vector.broadcast %cst_65 : f32 to vector<2x128xf32>
    %140 = arith.addf %139, %138 : vector<2x128xf32>
    %141 = arith.divf %139, %140 : vector<2x128xf32>
    %142 = math.tanh %136 : vector<2x128xf32>
    %143 = vector.extract_strided_slice %141 {offsets = [0, 0], sizes = [2, 32], strides = [1, 1]} : vector<2x128xf32> to vector<2x32xf32>
    %144 = vector.extract_strided_slice %141 {offsets = [0, 32], sizes = [2, 32], strides = [1, 1]} : vector<2x128xf32> to vector<2x32xf32>
    %145 = vector.extract_strided_slice %142 {offsets = [0, 64], sizes = [2, 32], strides = [1, 1]} : vector<2x128xf32> to vector<2x32xf32>
    %146 = vector.extract_strided_slice %141 {offsets = [0, 96], sizes = [2, 32], strides = [1, 1]} : vector<2x128xf32> to vector<2x32xf32>
    %147 = arith.mulf %144, %120 : vector<2x32xf32>
    %148 = arith.mulf %143, %145 : vector<2x32xf32>
    %149 = arith.addf %147, %148 : vector<2x32xf32>
    %150 = math.tanh %149 : vector<2x32xf32>
    %151 = arith.mulf %146, %150 : vector<2x32xf32>
    %152 = vector.extract_strided_slice %151 {offsets = [0, 0], sizes = [1, 32], strides = [1, 1]} : vector<2x32xf32> to vector<1x32xf32>
    %c0_i32_66 = arith.constant 0 : i32
    %153 = arith.addi %c0_i32_66, %c1_i32 : i32
    %154 = arith.index_cast %153 : i32 to index
    %c0_67 = arith.constant 0 : index
    %155 = vector.load %arg29[%154, %c0_67] : memref<16x32xf32, #tpu.memory_space<vmem>>, vector<1x32xf32>
    tpu.vector_store %arg29[%154, %c0_67], %152 {strides = array<i32>} : memref<16x32xf32, #tpu.memory_space<vmem>>, vector<1x32xf32>,
    %156 = vector.extract_strided_slice %151 {offsets = [1, 0], sizes = [1, 32], strides = [1, 1]} : vector<2x32xf32> to vector<1x32xf32>
    %c8_i32_68 = arith.constant 8 : i32
    %157 = arith.addi %c8_i32_68, %c1_i32 : i32
    %158 = arith.index_cast %157 : i32 to index
    %c0_69 = arith.constant 0 : index
    %159 = vector.load %arg29[%158, %c0_69] : memref<16x32xf32, #tpu.memory_space<vmem>>, vector<1x32xf32>
    tpu.vector_store %arg29[%158, %c0_69], %156 {strides = array<i32>} : memref<16x32xf32, #tpu.memory_space<vmem>>, vector<1x32xf32>,
    %c2_i32_70 = arith.constant 2 : i32
    %c2_i32_71 = arith.constant 2 : i32
    %160 = arith.muli %c2_i32_70, %c2_i32_71 : i32
    %161 = tpu.assume_multiple %160, 2 : i32
    %162 = arith.index_cast %161 : i32 to index
    %c0_72 = arith.constant 0 : index
    %163 = vector.load %arg28[%162, %c0_72] : memref<16x128xf32, #tpu.memory_space<vmem>>, vector<2x128xf32>
    %cst_73 = arith.constant dense<0.000000e+00> : vector<2x128xf32>
    %164 = tpu.matmul %151, %101, %cst_73 {dimension_numbers = #tpu.dot_dimension_numbers<[1], [0], [0], [1], [0, 0, 1, 1], [], []>} : vector<2x32xf32>, vector<32x128xf32>, vector<2x128xf32> -> vector<2x128xf32>
    %165 = arith.addf %163, %164 : vector<2x128xf32>
    %166 = arith.negf %165 : vector<2x128xf32>
    %167 = math.exp %166 : vector<2x128xf32>
    %cst_74 = arith.constant 1.000000e+00 : f32
    %168 = vector.broadcast %cst_74 : f32 to vector<2x128xf32>
    %169 = arith.addf %168, %167 : vector<2x128xf32>
    %170 = arith.divf %168, %169 : vector<2x128xf32>
    %171 = math.tanh %165 : vector<2x128xf32>
    %172 = vector.extract_strided_slice %170 {offsets = [0, 0], sizes = [2, 32], strides = [1, 1]} : vector<2x128xf32> to vector<2x32xf32>
    %173 = vector.extract_strided_slice %170 {offsets = [0, 32], sizes = [2, 32], strides = [1, 1]} : vector<2x128xf32> to vector<2x32xf32>
    %174 = vector.extract_strided_slice %171 {offsets = [0, 64], sizes = [2, 32], strides = [1, 1]} : vector<2x128xf32> to vector<2x32xf32>
    %175 = vector.extract_strided_slice %170 {offsets = [0, 96], sizes = [2, 32], strides = [1, 1]} : vector<2x128xf32> to vector<2x32xf32>
    %176 = arith.mulf %173, %149 : vector<2x32xf32>
    %177 = arith.mulf %172, %174 : vector<2x32xf32>
    %178 = arith.addf %176, %177 : vector<2x32xf32>
    %179 = math.tanh %178 : vector<2x32xf32>
    %180 = arith.mulf %175, %179 : vector<2x32xf32>
    %181 = vector.extract_strided_slice %180 {offsets = [0, 0], sizes = [1, 32], strides = [1, 1]} : vector<2x32xf32> to vector<1x32xf32>
    %c0_i32_75 = arith.constant 0 : i32
    %182 = arith.addi %c0_i32_75, %c2_i32_70 : i32
    %183 = arith.index_cast %182 : i32 to index
    %c0_76 = arith.constant 0 : index
    %184 = vector.load %arg29[%183, %c0_76] : memref<16x32xf32, #tpu.memory_space<vmem>>, vector<1x32xf32>
    tpu.vector_store %arg29[%183, %c0_76], %181 {strides = array<i32>} : memref<16x32xf32, #tpu.memory_space<vmem>>, vector<1x32xf32>,
    %185 = vector.extract_strided_slice %180 {offsets = [1, 0], sizes = [1, 32], strides = [1, 1]} : vector<2x32xf32> to vector<1x32xf32>
    %c8_i32_77 = arith.constant 8 : i32
    %186 = arith.addi %c8_i32_77, %c2_i32_70 : i32
    %187 = arith.index_cast %186 : i32 to index
    %c0_78 = arith.constant 0 : index
    %188 = vector.load %arg29[%187, %c0_78] : memref<16x32xf32, #tpu.memory_space<vmem>>, vector<1x32xf32>
    tpu.vector_store %arg29[%187, %c0_78], %185 {strides = array<i32>} : memref<16x32xf32, #tpu.memory_space<vmem>>, vector<1x32xf32>,
    %c3_i32 = arith.constant 3 : i32
    %c2_i32_79 = arith.constant 2 : i32
    %189 = arith.muli %c3_i32, %c2_i32_79 : i32
    %190 = tpu.assume_multiple %189, 2 : i32
    %191 = arith.index_cast %190 : i32 to index
    %c0_80 = arith.constant 0 : index
    %192 = vector.load %arg28[%191, %c0_80] : memref<16x128xf32, #tpu.memory_space<vmem>>, vector<2x128xf32>
    %cst_81 = arith.constant dense<0.000000e+00> : vector<2x128xf32>
    %193 = tpu.matmul %180, %101, %cst_81 {dimension_numbers = #tpu.dot_dimension_numbers<[1], [0], [0], [1], [0, 0, 1, 1], [], []>} : vector<2x32xf32>, vector<32x128xf32>, vector<2x128xf32> -> vector<2x128xf32>
    %194 = arith.addf %192, %193 : vector<2x128xf32>
    %195 = arith.negf %194 : vector<2x128xf32>
    %196 = math.exp %195 : vector<2x128xf32>
    %cst_82 = arith.constant 1.000000e+00 : f32
    %197 = vector.broadcast %cst_82 : f32 to vector<2x128xf32>
    %198 = arith.addf %197, %196 : vector<2x128xf32>
    %199 = arith.divf %197, %198 : vector<2x128xf32>
    %200 = math.tanh %194 : vector<2x128xf32>
    %201 = vector.extract_strided_slice %199 {offsets = [0, 0], sizes = [2, 32], strides = [1, 1]} : vector<2x128xf32> to vector<2x32xf32>
    %202 = vector.extract_strided_slice %199 {offsets = [0, 32], sizes = [2, 32], strides = [1, 1]} : vector<2x128xf32> to vector<2x32xf32>
    %203 = vector.extract_strided_slice %200 {offsets = [0, 64], sizes = [2, 32], strides = [1, 1]} : vector<2x128xf32> to vector<2x32xf32>
    %204 = vector.extract_strided_slice %199 {offsets = [0, 96], sizes = [2, 32], strides = [1, 1]} : vector<2x128xf32> to vector<2x32xf32>
    %205 = arith.mulf %202, %178 : vector<2x32xf32>
    %206 = arith.mulf %201, %203 : vector<2x32xf32>
    %207 = arith.addf %205, %206 : vector<2x32xf32>
    %208 = math.tanh %207 : vector<2x32xf32>
    %209 = arith.mulf %204, %208 : vector<2x32xf32>
    %210 = vector.extract_strided_slice %209 {offsets = [0, 0], sizes = [1, 32], strides = [1, 1]} : vector<2x32xf32> to vector<1x32xf32>
    %c0_i32_83 = arith.constant 0 : i32
    %211 = arith.addi %c0_i32_83, %c3_i32 : i32
    %212 = arith.index_cast %211 : i32 to index
    %c0_84 = arith.constant 0 : index
    %213 = vector.load %arg29[%212, %c0_84] : memref<16x32xf32, #tpu.memory_space<vmem>>, vector<1x32xf32>
    tpu.vector_store %arg29[%212, %c0_84], %210 {strides = array<i32>} : memref<16x32xf32, #tpu.memory_space<vmem>>, vector<1x32xf32>,
    %214 = vector.extract_strided_slice %209 {offsets = [1, 0], sizes = [1, 32], strides = [1, 1]} : vector<2x32xf32> to vector<1x32xf32>
    %c8_i32_85 = arith.constant 8 : i32
    %215 = arith.addi %c8_i32_85, %c3_i32 : i32
    %216 = arith.index_cast %215 : i32 to index
    %c0_86 = arith.constant 0 : index
    %217 = vector.load %arg29[%216, %c0_86] : memref<16x32xf32, #tpu.memory_space<vmem>>, vector<1x32xf32>
    tpu.vector_store %arg29[%216, %c0_86], %214 {strides = array<i32>} : memref<16x32xf32, #tpu.memory_space<vmem>>, vector<1x32xf32>,
    %c4_i32 = arith.constant 4 : i32
    %c2_i32_87 = arith.constant 2 : i32
    %218 = arith.muli %c4_i32, %c2_i32_87 : i32
    %219 = tpu.assume_multiple %218, 2 : i32
    %220 = arith.index_cast %219 : i32 to index
    %c0_88 = arith.constant 0 : index
    %221 = vector.load %arg28[%220, %c0_88] : memref<16x128xf32, #tpu.memory_space<vmem>>, vector<2x128xf32>
    %cst_89 = arith.constant dense<0.000000e+00> : vector<2x128xf32>
    %222 = tpu.matmul %209, %101, %cst_89 {dimension_numbers = #tpu.dot_dimension_numbers<[1], [0], [0], [1], [0, 0, 1, 1], [], []>} : vector<2x32xf32>, vector<32x128xf32>, vector<2x128xf32> -> vector<2x128xf32>
    %223 = arith.addf %221, %222 : vector<2x128xf32>
    %224 = arith.negf %223 : vector<2x128xf32>
    %225 = math.exp %224 : vector<2x128xf32>
    %cst_90 = arith.constant 1.000000e+00 : f32
    %226 = vector.broadcast %cst_90 : f32 to vector<2x128xf32>
    %227 = arith.addf %226, %225 : vector<2x128xf32>
    %228 = arith.divf %226, %227 : vector<2x128xf32>
    %229 = math.tanh %223 : vector<2x128xf32>
    %230 = vector.extract_strided_slice %228 {offsets = [0, 0], sizes = [2, 32], strides = [1, 1]} : vector<2x128xf32> to vector<2x32xf32>
    %231 = vector.extract_strided_slice %228 {offsets = [0, 32], sizes = [2, 32], strides = [1, 1]} : vector<2x128xf32> to vector<2x32xf32>
    %232 = vector.extract_strided_slice %229 {offsets = [0, 64], sizes = [2, 32], strides = [1, 1]} : vector<2x128xf32> to vector<2x32xf32>
    %233 = vector.extract_strided_slice %228 {offsets = [0, 96], sizes = [2, 32], strides = [1, 1]} : vector<2x128xf32> to vector<2x32xf32>
    %234 = arith.mulf %231, %207 : vector<2x32xf32>
    %235 = arith.mulf %230, %232 : vector<2x32xf32>
    %236 = arith.addf %234, %235 : vector<2x32xf32>
    %237 = math.tanh %236 : vector<2x32xf32>
    %238 = arith.mulf %233, %237 : vector<2x32xf32>
    %239 = vector.extract_strided_slice %238 {offsets = [0, 0], sizes = [1, 32], strides = [1, 1]} : vector<2x32xf32> to vector<1x32xf32>
    %c0_i32_91 = arith.constant 0 : i32
    %240 = arith.addi %c0_i32_91, %c4_i32 : i32
    %241 = arith.index_cast %240 : i32 to index
    %c0_92 = arith.constant 0 : index
    %242 = vector.load %arg29[%241, %c0_92] : memref<16x32xf32, #tpu.memory_space<vmem>>, vector<1x32xf32>
    tpu.vector_store %arg29[%241, %c0_92], %239 {strides = array<i32>} : memref<16x32xf32, #tpu.memory_space<vmem>>, vector<1x32xf32>,
    %243 = vector.extract_strided_slice %238 {offsets = [1, 0], sizes = [1, 32], strides = [1, 1]} : vector<2x32xf32> to vector<1x32xf32>
    %c8_i32_93 = arith.constant 8 : i32
    %244 = arith.addi %c8_i32_93, %c4_i32 : i32
    %245 = arith.index_cast %244 : i32 to index
    %c0_94 = arith.constant 0 : index
    %246 = vector.load %arg29[%245, %c0_94] : memref<16x32xf32, #tpu.memory_space<vmem>>, vector<1x32xf32>
    tpu.vector_store %arg29[%245, %c0_94], %243 {strides = array<i32>} : memref<16x32xf32, #tpu.memory_space<vmem>>, vector<1x32xf32>,
    %c5_i32 = arith.constant 5 : i32
    %c2_i32_95 = arith.constant 2 : i32
    %247 = arith.muli %c5_i32, %c2_i32_95 : i32
    %248 = tpu.assume_multiple %247, 2 : i32
    %249 = arith.index_cast %248 : i32 to index
    %c0_96 = arith.constant 0 : index
    %250 = vector.load %arg28[%249, %c0_96] : memref<16x128xf32, #tpu.memory_space<vmem>>, vector<2x128xf32>
    %cst_97 = arith.constant dense<0.000000e+00> : vector<2x128xf32>
    %251 = tpu.matmul %238, %101, %cst_97 {dimension_numbers = #tpu.dot_dimension_numbers<[1], [0], [0], [1], [0, 0, 1, 1], [], []>} : vector<2x32xf32>, vector<32x128xf32>, vector<2x128xf32> -> vector<2x128xf32>
    %252 = arith.addf %250, %251 : vector<2x128xf32>
    %253 = arith.negf %252 : vector<2x128xf32>
    %254 = math.exp %253 : vector<2x128xf32>
    %cst_98 = arith.constant 1.000000e+00 : f32
    %255 = vector.broadcast %cst_98 : f32 to vector<2x128xf32>
    %256 = arith.addf %255, %254 : vector<2x128xf32>
    %257 = arith.divf %255, %256 : vector<2x128xf32>
    %258 = math.tanh %252 : vector<2x128xf32>
    %259 = vector.extract_strided_slice %257 {offsets = [0, 0], sizes = [2, 32], strides = [1, 1]} : vector<2x128xf32> to vector<2x32xf32>
    %260 = vector.extract_strided_slice %257 {offsets = [0, 32], sizes = [2, 32], strides = [1, 1]} : vector<2x128xf32> to vector<2x32xf32>
    %261 = vector.extract_strided_slice %258 {offsets = [0, 64], sizes = [2, 32], strides = [1, 1]} : vector<2x128xf32> to vector<2x32xf32>
    %262 = vector.extract_strided_slice %257 {offsets = [0, 96], sizes = [2, 32], strides = [1, 1]} : vector<2x128xf32> to vector<2x32xf32>
    %263 = arith.mulf %260, %236 : vector<2x32xf32>
    %264 = arith.mulf %259, %261 : vector<2x32xf32>
    %265 = arith.addf %263, %264 : vector<2x32xf32>
    %266 = math.tanh %265 : vector<2x32xf32>
    %267 = arith.mulf %262, %266 : vector<2x32xf32>
    %268 = vector.extract_strided_slice %267 {offsets = [0, 0], sizes = [1, 32], strides = [1, 1]} : vector<2x32xf32> to vector<1x32xf32>
    %c0_i32_99 = arith.constant 0 : i32
    %269 = arith.addi %c0_i32_99, %c5_i32 : i32
    %270 = arith.index_cast %269 : i32 to index
    %c0_100 = arith.constant 0 : index
    %271 = vector.load %arg29[%270, %c0_100] : memref<16x32xf32, #tpu.memory_space<vmem>>, vector<1x32xf32>
    tpu.vector_store %arg29[%270, %c0_100], %268 {strides = array<i32>} : memref<16x32xf32, #tpu.memory_space<vmem>>, vector<1x32xf32>,
    %272 = vector.extract_strided_slice %267 {offsets = [1, 0], sizes = [1, 32], strides = [1, 1]} : vector<2x32xf32> to vector<1x32xf32>
    %c8_i32_101 = arith.constant 8 : i32
    %273 = arith.addi %c8_i32_101, %c5_i32 : i32
    %274 = arith.index_cast %273 : i32 to index
    %c0_102 = arith.constant 0 : index
    %275 = vector.load %arg29[%274, %c0_102] : memref<16x32xf32, #tpu.memory_space<vmem>>, vector<1x32xf32>
    tpu.vector_store %arg29[%274, %c0_102], %272 {strides = array<i32>} : memref<16x32xf32, #tpu.memory_space<vmem>>, vector<1x32xf32>,
    %c6_i32 = arith.constant 6 : i32
    %c2_i32_103 = arith.constant 2 : i32
    %276 = arith.muli %c6_i32, %c2_i32_103 : i32
    %277 = tpu.assume_multiple %276, 2 : i32
    %278 = arith.index_cast %277 : i32 to index
    %c0_104 = arith.constant 0 : index
    %279 = vector.load %arg28[%278, %c0_104] : memref<16x128xf32, #tpu.memory_space<vmem>>, vector<2x128xf32>
    %cst_105 = arith.constant dense<0.000000e+00> : vector<2x128xf32>
    %280 = tpu.matmul %267, %101, %cst_105 {dimension_numbers = #tpu.dot_dimension_numbers<[1], [0], [0], [1], [0, 0, 1, 1], [], []>} : vector<2x32xf32>, vector<32x128xf32>, vector<2x128xf32> -> vector<2x128xf32>
    %281 = arith.addf %279, %280 : vector<2x128xf32>
    %282 = arith.negf %281 : vector<2x128xf32>
    %283 = math.exp %282 : vector<2x128xf32>
    %cst_106 = arith.constant 1.000000e+00 : f32
    %284 = vector.broadcast %cst_106 : f32 to vector<2x128xf32>
    %285 = arith.addf %284, %283 : vector<2x128xf32>
    %286 = arith.divf %284, %285 : vector<2x128xf32>
    %287 = math.tanh %281 : vector<2x128xf32>
    %288 = vector.extract_strided_slice %286 {offsets = [0, 0], sizes = [2, 32], strides = [1, 1]} : vector<2x128xf32> to vector<2x32xf32>
    %289 = vector.extract_strided_slice %286 {offsets = [0, 32], sizes = [2, 32], strides = [1, 1]} : vector<2x128xf32> to vector<2x32xf32>
    %290 = vector.extract_strided_slice %287 {offsets = [0, 64], sizes = [2, 32], strides = [1, 1]} : vector<2x128xf32> to vector<2x32xf32>
    %291 = vector.extract_strided_slice %286 {offsets = [0, 96], sizes = [2, 32], strides = [1, 1]} : vector<2x128xf32> to vector<2x32xf32>
    %292 = arith.mulf %289, %265 : vector<2x32xf32>
    %293 = arith.mulf %288, %290 : vector<2x32xf32>
    %294 = arith.addf %292, %293 : vector<2x32xf32>
    %295 = math.tanh %294 : vector<2x32xf32>
    %296 = arith.mulf %291, %295 : vector<2x32xf32>
    %297 = vector.extract_strided_slice %296 {offsets = [0, 0], sizes = [1, 32], strides = [1, 1]} : vector<2x32xf32> to vector<1x32xf32>
    %c0_i32_107 = arith.constant 0 : i32
    %298 = arith.addi %c0_i32_107, %c6_i32 : i32
    %299 = arith.index_cast %298 : i32 to index
    %c0_108 = arith.constant 0 : index
    %300 = vector.load %arg29[%299, %c0_108] : memref<16x32xf32, #tpu.memory_space<vmem>>, vector<1x32xf32>
    tpu.vector_store %arg29[%299, %c0_108], %297 {strides = array<i32>} : memref<16x32xf32, #tpu.memory_space<vmem>>, vector<1x32xf32>,
    %301 = vector.extract_strided_slice %296 {offsets = [1, 0], sizes = [1, 32], strides = [1, 1]} : vector<2x32xf32> to vector<1x32xf32>
    %c8_i32_109 = arith.constant 8 : i32
    %302 = arith.addi %c8_i32_109, %c6_i32 : i32
    %303 = arith.index_cast %302 : i32 to index
    %c0_110 = arith.constant 0 : index
    %304 = vector.load %arg29[%303, %c0_110] : memref<16x32xf32, #tpu.memory_space<vmem>>, vector<1x32xf32>
    tpu.vector_store %arg29[%303, %c0_110], %301 {strides = array<i32>} : memref<16x32xf32, #tpu.memory_space<vmem>>, vector<1x32xf32>,
    %c7_i32 = arith.constant 7 : i32
    %c2_i32_111 = arith.constant 2 : i32
    %305 = arith.muli %c7_i32, %c2_i32_111 : i32
    %306 = tpu.assume_multiple %305, 2 : i32
    %307 = arith.index_cast %306 : i32 to index
    %c0_112 = arith.constant 0 : index
    %308 = vector.load %arg28[%307, %c0_112] : memref<16x128xf32, #tpu.memory_space<vmem>>, vector<2x128xf32>
    %cst_113 = arith.constant dense<0.000000e+00> : vector<2x128xf32>
    %309 = tpu.matmul %296, %101, %cst_113 {dimension_numbers = #tpu.dot_dimension_numbers<[1], [0], [0], [1], [0, 0, 1, 1], [], []>} : vector<2x32xf32>, vector<32x128xf32>, vector<2x128xf32> -> vector<2x128xf32>
    %310 = arith.addf %308, %309 : vector<2x128xf32>
    %311 = arith.negf %310 : vector<2x128xf32>
    %312 = math.exp %311 : vector<2x128xf32>
    %cst_114 = arith.constant 1.000000e+00 : f32
    %313 = vector.broadcast %cst_114 : f32 to vector<2x128xf32>
    %314 = arith.addf %313, %312 : vector<2x128xf32>
    %315 = arith.divf %313, %314 : vector<2x128xf32>
    %316 = math.tanh %310 : vector<2x128xf32>
    %317 = vector.extract_strided_slice %315 {offsets = [0, 0], sizes = [2, 32], strides = [1, 1]} : vector<2x128xf32> to vector<2x32xf32>
    %318 = vector.extract_strided_slice %315 {offsets = [0, 32], sizes = [2, 32], strides = [1, 1]} : vector<2x128xf32> to vector<2x32xf32>
    %319 = vector.extract_strided_slice %316 {offsets = [0, 64], sizes = [2, 32], strides = [1, 1]} : vector<2x128xf32> to vector<2x32xf32>
    %320 = vector.extract_strided_slice %315 {offsets = [0, 96], sizes = [2, 32], strides = [1, 1]} : vector<2x128xf32> to vector<2x32xf32>
    %321 = arith.mulf %318, %294 : vector<2x32xf32>
    %322 = arith.mulf %317, %319 : vector<2x32xf32>
    %323 = arith.addf %321, %322 : vector<2x32xf32>
    %324 = math.tanh %323 : vector<2x32xf32>
    %325 = arith.mulf %320, %324 : vector<2x32xf32>
    %326 = vector.extract_strided_slice %325 {offsets = [0, 0], sizes = [1, 32], strides = [1, 1]} : vector<2x32xf32> to vector<1x32xf32>
    %c0_i32_115 = arith.constant 0 : i32
    %327 = arith.addi %c0_i32_115, %c7_i32 : i32
    %328 = arith.index_cast %327 : i32 to index
    %c0_116 = arith.constant 0 : index
    %329 = vector.load %arg29[%328, %c0_116] : memref<16x32xf32, #tpu.memory_space<vmem>>, vector<1x32xf32>
    tpu.vector_store %arg29[%328, %c0_116], %326 {strides = array<i32>} : memref<16x32xf32, #tpu.memory_space<vmem>>, vector<1x32xf32>,
    %330 = vector.extract_strided_slice %325 {offsets = [1, 0], sizes = [1, 32], strides = [1, 1]} : vector<2x32xf32> to vector<1x32xf32>
    %c8_i32_117 = arith.constant 8 : i32
    %331 = arith.addi %c8_i32_117, %c7_i32 : i32
    %332 = arith.index_cast %331 : i32 to index
    %c0_118 = arith.constant 0 : index
    %333 = vector.load %arg29[%332, %c0_118] : memref<16x32xf32, #tpu.memory_space<vmem>>, vector<1x32xf32>
    tpu.vector_store %arg29[%332, %c0_118], %330 {strides = array<i32>} : memref<16x32xf32, #tpu.memory_space<vmem>>, vector<1x32xf32>,
    %c8_i32_119 = arith.constant 8 : i32
    %c0_120 = arith.constant 0 : index
    %c0_121 = arith.constant 0 : index
    %334 = vector.load %arg29[%c0_120, %c0_121] : memref<16x32xf32, #tpu.memory_space<vmem>>, vector<16x32xf32>
    %c0_122 = arith.constant 0 : index
    %c0_123 = arith.constant 0 : index
    %335 = vector.load %arg19[%c0_122, %c0_123] : memref<32x96xf32, #tpu.memory_space<vmem>>, vector<32x96xf32>
    %cst_124 = arith.constant dense<0.000000e+00> : vector<16x96xf32>
    %336 = tpu.matmul %334, %335, %cst_124 {dimension_numbers = #tpu.dot_dimension_numbers<[1], [0], [0], [1], [0, 0, 1, 1], [], []>} : vector<16x32xf32>, vector<32x96xf32>, vector<16x96xf32> -> vector<16x96xf32>
    %c0_125 = arith.constant 0 : index
    %c0_126 = arith.constant 0 : index
    %337 = vector.load %arg20[%c0_125, %c0_126] : memref<1x96xf32, #tpu.memory_space<vmem>>, vector<1x96xf32>
    %338 = vector.broadcast %337 : vector<1x96xf32> to vector<16x96xf32>
    %339 = arith.addf %336, %338 : vector<16x96xf32>
    %c0_127 = arith.constant 0 : index
    %c0_128 = arith.constant 0 : index
    %c0_129 = arith.constant 0 : index
    %340 = vector.load %arg21[%c0_127, %c0_128, %c0_129] : memref<8x4x32xf32, #tpu.memory_space<vmem>>, vector<8x4x32xf32>
    %c0_130 = arith.constant 0 : index
    %c0_131 = arith.constant 0 : index
    %341 = vector.load %arg22[%c0_130, %c0_131] : memref<1x32xf32, #tpu.memory_space<vmem>>, vector<1x32xf32>
    %c0_132 = arith.constant 0 : index
    %c0_133 = arith.constant 0 : index
    %342 = vector.load %arg23[%c0_132, %c0_133] : memref<1x32xf32, #tpu.memory_space<vmem>>, vector<1x32xf32>
    %c0_134 = arith.constant 0 : index
    %c0_135 = arith.constant 0 : index
    %343 = vector.load %arg24[%c0_134, %c0_135] : memref<1x32xf32, #tpu.memory_space<vmem>>, vector<1x32xf32>
    %344 = tpu.iota {dimensions = array<i32: 2>} : vector<1x1x8xi32>
    %345 = tpu.iota {dimensions = array<i32: 0>} : vector<8x1xi32>
    %c0_136 = arith.constant 0 : index
    %346 = memref.load %arg1[%c0_136] : memref<2xi32, #tpu.memory_space<smem>>
    %347 = vector.extract_strided_slice %334 {offsets = [0, 0], sizes = [8, 32], strides = [1, 1]} : vector<16x32xf32> to vector<8x32xf32>
    %348 = vector.extract_strided_slice %339 {offsets = [0, 0], sizes = [8, 96], strides = [1, 1]} : vector<16x96xf32> to vector<8x96xf32>
    %349 = vector.extract_strided_slice %348 {offsets = [0, 0], sizes = [8, 4], strides = [1, 1]} : vector<8x96xf32> to vector<8x4xf32>
    %350 = vector.extract_strided_slice %348 {offsets = [0, 4], sizes = [8, 4], strides = [1, 1]} : vector<8x96xf32> to vector<8x4xf32>
    %351 = vector.extract_strided_slice %348 {offsets = [0, 8], sizes = [8, 4], strides = [1, 1]} : vector<8x96xf32> to vector<8x4xf32>
    %352 = vector.extract_strided_slice %348 {offsets = [0, 12], sizes = [8, 4], strides = [1, 1]} : vector<8x96xf32> to vector<8x4xf32>
    %353 = vector.extract_strided_slice %348 {offsets = [0, 16], sizes = [8, 4], strides = [1, 1]} : vector<8x96xf32> to vector<8x4xf32>
    %354 = vector.extract_strided_slice %348 {offsets = [0, 20], sizes = [8, 4], strides = [1, 1]} : vector<8x96xf32> to vector<8x4xf32>
    %355 = vector.extract_strided_slice %348 {offsets = [0, 24], sizes = [8, 4], strides = [1, 1]} : vector<8x96xf32> to vector<8x4xf32>
    %356 = vector.extract_strided_slice %348 {offsets = [0, 28], sizes = [8, 4], strides = [1, 1]} : vector<8x96xf32> to vector<8x4xf32>
    %357 = vector.shape_cast %349 : vector<8x4xf32> to vector<1x8x4xf32>
    %358 = vector.shape_cast %350 : vector<8x4xf32> to vector<1x8x4xf32>
    %359 = vector.shape_cast %351 : vector<8x4xf32> to vector<1x8x4xf32>
    %360 = vector.shape_cast %352 : vector<8x4xf32> to vector<1x8x4xf32>
    %361 = vector.shape_cast %353 : vector<8x4xf32> to vector<1x8x4xf32>
    %362 = vector.shape_cast %354 : vector<8x4xf32> to vector<1x8x4xf32>
    %363 = vector.shape_cast %355 : vector<8x4xf32> to vector<1x8x4xf32>
    %364 = vector.shape_cast %356 : vector<8x4xf32> to vector<1x8x4xf32>
    %365 = tpu.concatenate %357, %358, %359, %360, %361, %362, %363, %364 in 0 : vector<1x8x4xf32>, vector<1x8x4xf32>, vector<1x8x4xf32>, vector<1x8x4xf32>, vector<1x8x4xf32>, vector<1x8x4xf32>, vector<1x8x4xf32>, vector<1x8x4xf32> -> vector<8x8x4xf32>
    %366 = vector.extract_strided_slice %348 {offsets = [0, 32], sizes = [8, 4], strides = [1, 1]} : vector<8x96xf32> to vector<8x4xf32>
    %367 = vector.extract_strided_slice %348 {offsets = [0, 36], sizes = [8, 4], strides = [1, 1]} : vector<8x96xf32> to vector<8x4xf32>
    %368 = vector.extract_strided_slice %348 {offsets = [0, 40], sizes = [8, 4], strides = [1, 1]} : vector<8x96xf32> to vector<8x4xf32>
    %369 = vector.extract_strided_slice %348 {offsets = [0, 44], sizes = [8, 4], strides = [1, 1]} : vector<8x96xf32> to vector<8x4xf32>
    %370 = vector.extract_strided_slice %348 {offsets = [0, 48], sizes = [8, 4], strides = [1, 1]} : vector<8x96xf32> to vector<8x4xf32>
    %371 = vector.extract_strided_slice %348 {offsets = [0, 52], sizes = [8, 4], strides = [1, 1]} : vector<8x96xf32> to vector<8x4xf32>
    %372 = vector.extract_strided_slice %348 {offsets = [0, 56], sizes = [8, 4], strides = [1, 1]} : vector<8x96xf32> to vector<8x4xf32>
    %373 = vector.extract_strided_slice %348 {offsets = [0, 60], sizes = [8, 4], strides = [1, 1]} : vector<8x96xf32> to vector<8x4xf32>
    %374 = vector.shape_cast %366 : vector<8x4xf32> to vector<1x8x4xf32>
    %375 = vector.shape_cast %367 : vector<8x4xf32> to vector<1x8x4xf32>
    %376 = vector.shape_cast %368 : vector<8x4xf32> to vector<1x8x4xf32>
    %377 = vector.shape_cast %369 : vector<8x4xf32> to vector<1x8x4xf32>
    %378 = vector.shape_cast %370 : vector<8x4xf32> to vector<1x8x4xf32>
    %379 = vector.shape_cast %371 : vector<8x4xf32> to vector<1x8x4xf32>
    %380 = vector.shape_cast %372 : vector<8x4xf32> to vector<1x8x4xf32>
    %381 = vector.shape_cast %373 : vector<8x4xf32> to vector<1x8x4xf32>
    %382 = tpu.concatenate %374, %375, %376, %377, %378, %379, %380, %381 in 0 : vector<1x8x4xf32>, vector<1x8x4xf32>, vector<1x8x4xf32>, vector<1x8x4xf32>, vector<1x8x4xf32>, vector<1x8x4xf32>, vector<1x8x4xf32>, vector<1x8x4xf32> -> vector<8x8x4xf32>
    %383 = vector.extract_strided_slice %348 {offsets = [0, 64], sizes = [8, 4], strides = [1, 1]} : vector<8x96xf32> to vector<8x4xf32>
    %384 = vector.extract_strided_slice %348 {offsets = [0, 68], sizes = [8, 4], strides = [1, 1]} : vector<8x96xf32> to vector<8x4xf32>
    %385 = vector.extract_strided_slice %348 {offsets = [0, 72], sizes = [8, 4], strides = [1, 1]} : vector<8x96xf32> to vector<8x4xf32>
    %386 = vector.extract_strided_slice %348 {offsets = [0, 76], sizes = [8, 4], strides = [1, 1]} : vector<8x96xf32> to vector<8x4xf32>
    %387 = vector.extract_strided_slice %348 {offsets = [0, 80], sizes = [8, 4], strides = [1, 1]} : vector<8x96xf32> to vector<8x4xf32>
    %388 = vector.extract_strided_slice %348 {offsets = [0, 84], sizes = [8, 4], strides = [1, 1]} : vector<8x96xf32> to vector<8x4xf32>
    %389 = vector.extract_strided_slice %348 {offsets = [0, 88], sizes = [8, 4], strides = [1, 1]} : vector<8x96xf32> to vector<8x4xf32>
    %390 = vector.extract_strided_slice %348 {offsets = [0, 92], sizes = [8, 4], strides = [1, 1]} : vector<8x96xf32> to vector<8x4xf32>
    %391 = vector.shape_cast %383 : vector<8x4xf32> to vector<1x8x4xf32>
    %392 = vector.shape_cast %384 : vector<8x4xf32> to vector<1x8x4xf32>
    %393 = vector.shape_cast %385 : vector<8x4xf32> to vector<1x8x4xf32>
    %394 = vector.shape_cast %386 : vector<8x4xf32> to vector<1x8x4xf32>
    %395 = vector.shape_cast %387 : vector<8x4xf32> to vector<1x8x4xf32>
    %396 = vector.shape_cast %388 : vector<8x4xf32> to vector<1x8x4xf32>
    %397 = vector.shape_cast %389 : vector<8x4xf32> to vector<1x8x4xf32>
    %398 = vector.shape_cast %390 : vector<8x4xf32> to vector<1x8x4xf32>
    %399 = tpu.concatenate %391, %392, %393, %394, %395, %396, %397, %398 in 0 : vector<1x8x4xf32>, vector<1x8x4xf32>, vector<1x8x4xf32>, vector<1x8x4xf32>, vector<1x8x4xf32>, vector<1x8x4xf32>, vector<1x8x4xf32>, vector<1x8x4xf32> -> vector<8x8x4xf32>
    "tpu.trace_start"() <{level = 10 : i32, message = "hqd,hkd->hqk"}> : () -> ()
    %cst_137 = arith.constant dense<0.000000e+00> : vector<8x8x8xf32>
    %400 = tpu.matmul %365, %382, %cst_137 {dimension_numbers = #tpu.dot_dimension_numbers<[2], [2], [1], [1], [0, 0, 0, 1, 1, 1], [0], [0]>} : vector<8x8x4xf32>, vector<8x8x4xf32>, vector<8x8x8xf32> -> vector<8x8x8xf32>
    "tpu.trace_stop"() : () -> ()
    %cst_138 = arith.constant 5.000000e-01 : f32
    %401 = vector.broadcast %cst_138 : f32 to vector<8x8x8xf32>
    %402 = arith.mulf %400, %401 : vector<8x8x8xf32>
    %403 = vector.broadcast %346 : i32 to vector<1x1x8xi32>
    %404 = arith.cmpi slt, %344, %403 : vector<1x1x8xi32>
    %cst_139 = arith.constant 0.000000e+00 : f32
    %cst_140 = arith.constant -1.000000e+09 : f32
    %405 = vector.broadcast %cst_139 : f32 to vector<1x1x8xf32>
    %406 = vector.broadcast %cst_140 : f32 to vector<1x1x8xf32>
    %407 = arith.select %404, %405, %406 : vector<1x1x8xi1>, vector<1x1x8xf32>
    %408 = vector.broadcast %407 : vector<1x1x8xf32> to vector<8x8x8xf32>
    %409 = arith.addf %402, %408 : vector<8x8x8xf32>
    %cst_141 = arith.constant dense<0xFF800000> : vector<8x8xf32>
    %410 = vector.multi_reduction <maximumf>, %409, %cst_141 [2] : vector<8x8x8xf32> to vector<8x8xf32>
    %411 = vector.shape_cast %410 : vector<8x8xf32> to vector<8x8x1xf32>
    %412 = vector.broadcast %411 : vector<8x8x1xf32> to vector<8x8x8xf32>
    %413 = arith.subf %409, %412 : vector<8x8x8xf32>
    %414 = math.exp %413 : vector<8x8x8xf32>
    %cst_142 = arith.constant dense<0.000000e+00> : vector<8x8xf32>
    %415 = vector.multi_reduction <add>, %414, %cst_142 [2] : vector<8x8x8xf32> to vector<8x8xf32>
    %416 = vector.shape_cast %415 : vector<8x8xf32> to vector<8x8x1xf32>
    %417 = vector.broadcast %416 : vector<8x8x1xf32> to vector<8x8x8xf32>
    %418 = arith.divf %414, %417 : vector<8x8x8xf32>
    "tpu.trace_start"() <{level = 10 : i32, message = "hqk,hkd->hqd"}> : () -> ()
    %cst_143 = arith.constant dense<0.000000e+00> : vector<8x8x4xf32>
    %419 = tpu.matmul %418, %399, %cst_143 {dimension_numbers = #tpu.dot_dimension_numbers<[2], [1], [1], [2], [0, 0, 0, 1, 1, 2], [0], [0]>} : vector<8x8x8xf32>, vector<8x8x4xf32>, vector<8x8x4xf32> -> vector<8x8x4xf32>
    "tpu.trace_stop"() : () -> ()
    "tpu.trace_start"() <{level = 10 : i32, message = "hqd,hdk->hqk"}> : () -> ()
    %cst_144 = arith.constant dense<0.000000e+00> : vector<8x8x32xf32>
    %420 = tpu.matmul %419, %340, %cst_144 {dimension_numbers = #tpu.dot_dimension_numbers<[2], [1], [1], [2], [0, 0, 0, 1, 1, 2], [0], [0]>} : vector<8x8x4xf32>, vector<8x4x32xf32>, vector<8x8x32xf32> -> vector<8x8x32xf32>
    "tpu.trace_stop"() : () -> ()
    %cst_145 = arith.constant dense<0.000000e+00> : vector<8x32xf32>
    %421 = vector.multi_reduction <add>, %420, %cst_145 [0] : vector<8x8x32xf32> to vector<8x32xf32>
    %422 = vector.broadcast %341 : vector<1x32xf32> to vector<8x32xf32>
    %423 = arith.addf %421, %422 : vector<8x32xf32>
    %424 = arith.addf %347, %423 : vector<8x32xf32>
    %cst_146 = arith.constant dense<0.000000e+00> : vector<8xf32>
    %425 = vector.multi_reduction <add>, %424, %cst_146 [1] : vector<8x32xf32> to vector<8xf32>
    %426 = vector.shape_cast %425 : vector<8xf32> to vector<8x1xf32>
    %cst_147 = arith.constant 3.200000e+01 : f32
    %427 = vector.broadcast %cst_147 : f32 to vector<8x1xf32>
    %428 = arith.divf %426, %427 : vector<8x1xf32>
    %429 = vector.broadcast %428 : vector<8x1xf32> to vector<8x32xf32>
    %430 = arith.subf %424, %429 : vector<8x32xf32>
    %431 = arith.mulf %430, %430 : vector<8x32xf32>
    %cst_148 = arith.constant dense<0.000000e+00> : vector<8xf32>
    %432 = vector.multi_reduction <add>, %431, %cst_148 [1] : vector<8x32xf32> to vector<8xf32>
    %433 = vector.shape_cast %432 : vector<8xf32> to vector<8x1xf32>
    %cst_149 = arith.constant 3.200000e+01 : f32
    %434 = vector.broadcast %cst_149 : f32 to vector<8x1xf32>
    %435 = arith.divf %433, %434 : vector<8x1xf32>
    %436 = vector.broadcast %428 : vector<8x1xf32> to vector<8x32xf32>
    %437 = arith.subf %424, %436 : vector<8x32xf32>
    %cst_150 = arith.constant 9.99999974E-6 : f32
    %438 = vector.broadcast %cst_150 : f32 to vector<8x1xf32>
    %439 = arith.addf %435, %438 : vector<8x1xf32>
    %440 = math.rsqrt %439 : vector<8x1xf32>
    %441 = vector.broadcast %440 : vector<8x1xf32> to vector<8x32xf32>
    %442 = arith.mulf %437, %441 : vector<8x32xf32>
    %443 = vector.broadcast %342 : vector<1x32xf32> to vector<8x32xf32>
    %444 = arith.mulf %442, %443 : vector<8x32xf32>
    %445 = vector.broadcast %343 : vector<1x32xf32> to vector<8x32xf32>
    %446 = arith.addf %444, %445 : vector<8x32xf32>
    %c1_i32_151 = arith.constant 1 : i32
    %447 = arith.subi %346, %c1_i32_151 : i32
    %c0_i32_152 = arith.constant 0 : i32
    %448 = arith.maxsi %447, %c0_i32_152 : i32
    %449 = vector.broadcast %448 : i32 to vector<8x1xi32>
    %450 = arith.cmpi eq, %345, %449 : vector<8x1xi32>
    %c0_i32_153 = arith.constant 0 : i32
    %451 = arith.cmpi sgt, %346, %c0_i32_153 : i32
    %452 = vector.broadcast %451 : i1 to vector<8x1xi1>
    %453 = arith.andi %450, %452 : vector<8x1xi1>
    %cst_154 = arith.constant 1.000000e+00 : f32
    %cst_155 = arith.constant 0.000000e+00 : f32
    %454 = vector.broadcast %cst_154 : f32 to vector<8x1xf32>
    %455 = vector.broadcast %cst_155 : f32 to vector<8x1xf32>
    %456 = arith.select %453, %454, %455 : vector<8x1xi1>, vector<8x1xf32>
    %457 = vector.broadcast %456 : vector<8x1xf32> to vector<8x32xf32>
    %458 = arith.mulf %446, %457 : vector<8x32xf32>
    %cst_156 = arith.constant dense<0.000000e+00> : vector<32xf32>
    %459 = vector.multi_reduction <add>, %458, %cst_156 [0] : vector<8x32xf32> to vector<32xf32>
    %460 = vector.shape_cast %459 : vector<32xf32> to vector<1x32xf32>
    %c1 = arith.constant 1 : index
    %461 = memref.load %arg1[%c1] : memref<2xi32, #tpu.memory_space<smem>>
    %462 = vector.extract_strided_slice %334 {offsets = [8, 0], sizes = [8, 32], strides = [1, 1]} : vector<16x32xf32> to vector<8x32xf32>
    %463 = vector.extract_strided_slice %339 {offsets = [8, 0], sizes = [8, 96], strides = [1, 1]} : vector<16x96xf32> to vector<8x96xf32>
    %464 = vector.extract_strided_slice %463 {offsets = [0, 0], sizes = [8, 4], strides = [1, 1]} : vector<8x96xf32> to vector<8x4xf32>
    %465 = vector.extract_strided_slice %463 {offsets = [0, 4], sizes = [8, 4], strides = [1, 1]} : vector<8x96xf32> to vector<8x4xf32>
    %466 = vector.extract_strided_slice %463 {offsets = [0, 8], sizes = [8, 4], strides = [1, 1]} : vector<8x96xf32> to vector<8x4xf32>
    %467 = vector.extract_strided_slice %463 {offsets = [0, 12], sizes = [8, 4], strides = [1, 1]} : vector<8x96xf32> to vector<8x4xf32>
    %468 = vector.extract_strided_slice %463 {offsets = [0, 16], sizes = [8, 4], strides = [1, 1]} : vector<8x96xf32> to vector<8x4xf32>
    %469 = vector.extract_strided_slice %463 {offsets = [0, 20], sizes = [8, 4], strides = [1, 1]} : vector<8x96xf32> to vector<8x4xf32>
    %470 = vector.extract_strided_slice %463 {offsets = [0, 24], sizes = [8, 4], strides = [1, 1]} : vector<8x96xf32> to vector<8x4xf32>
    %471 = vector.extract_strided_slice %463 {offsets = [0, 28], sizes = [8, 4], strides = [1, 1]} : vector<8x96xf32> to vector<8x4xf32>
    %472 = vector.shape_cast %464 : vector<8x4xf32> to vector<1x8x4xf32>
    %473 = vector.shape_cast %465 : vector<8x4xf32> to vector<1x8x4xf32>
    %474 = vector.shape_cast %466 : vector<8x4xf32> to vector<1x8x4xf32>
    %475 = vector.shape_cast %467 : vector<8x4xf32> to vector<1x8x4xf32>
    %476 = vector.shape_cast %468 : vector<8x4xf32> to vector<1x8x4xf32>
    %477 = vector.shape_cast %469 : vector<8x4xf32> to vector<1x8x4xf32>
    %478 = vector.shape_cast %470 : vector<8x4xf32> to vector<1x8x4xf32>
    %479 = vector.shape_cast %471 : vector<8x4xf32> to vector<1x8x4xf32>
    %480 = tpu.concatenate %472, %473, %474, %475, %476, %477, %478, %479 in 0 : vector<1x8x4xf32>, vector<1x8x4xf32>, vector<1x8x4xf32>, vector<1x8x4xf32>, vector<1x8x4xf32>, vector<1x8x4xf32>, vector<1x8x4xf32>, vector<1x8x4xf32> -> vector<8x8x4xf32>
    %481 = vector.extract_strided_slice %463 {offsets = [0, 32], sizes = [8, 4], strides = [1, 1]} : vector<8x96xf32> to vector<8x4xf32>
    %482 = vector.extract_strided_slice %463 {offsets = [0, 36], sizes = [8, 4], strides = [1, 1]} : vector<8x96xf32> to vector<8x4xf32>
    %483 = vector.extract_strided_slice %463 {offsets = [0, 40], sizes = [8, 4], strides = [1, 1]} : vector<8x96xf32> to vector<8x4xf32>
    %484 = vector.extract_strided_slice %463 {offsets = [0, 44], sizes = [8, 4], strides = [1, 1]} : vector<8x96xf32> to vector<8x4xf32>
    %485 = vector.extract_strided_slice %463 {offsets = [0, 48], sizes = [8, 4], strides = [1, 1]} : vector<8x96xf32> to vector<8x4xf32>
    %486 = vector.extract_strided_slice %463 {offsets = [0, 52], sizes = [8, 4], strides = [1, 1]} : vector<8x96xf32> to vector<8x4xf32>
    %487 = vector.extract_strided_slice %463 {offsets = [0, 56], sizes = [8, 4], strides = [1, 1]} : vector<8x96xf32> to vector<8x4xf32>
    %488 = vector.extract_strided_slice %463 {offsets = [0, 60], sizes = [8, 4], strides = [1, 1]} : vector<8x96xf32> to vector<8x4xf32>
    %489 = vector.shape_cast %481 : vector<8x4xf32> to vector<1x8x4xf32>
    %490 = vector.shape_cast %482 : vector<8x4xf32> to vector<1x8x4xf32>
    %491 = vector.shape_cast %483 : vector<8x4xf32> to vector<1x8x4xf32>
    %492 = vector.shape_cast %484 : vector<8x4xf32> to vector<1x8x4xf32>
    %493 = vector.shape_cast %485 : vector<8x4xf32> to vector<1x8x4xf32>
    %494 = vector.shape_cast %486 : vector<8x4xf32> to vector<1x8x4xf32>
    %495 = vector.shape_cast %487 : vector<8x4xf32> to vector<1x8x4xf32>
    %496 = vector.shape_cast %488 : vector<8x4xf32> to vector<1x8x4xf32>
    %497 = tpu.concatenate %489, %490, %491, %492, %493, %494, %495, %496 in 0 : vector<1x8x4xf32>, vector<1x8x4xf32>, vector<1x8x4xf32>, vector<1x8x4xf32>, vector<1x8x4xf32>, vector<1x8x4xf32>, vector<1x8x4xf32>, vector<1x8x4xf32> -> vector<8x8x4xf32>
    %498 = vector.extract_strided_slice %463 {offsets = [0, 64], sizes = [8, 4], strides = [1, 1]} : vector<8x96xf32> to vector<8x4xf32>
    %499 = vector.extract_strided_slice %463 {offsets = [0, 68], sizes = [8, 4], strides = [1, 1]} : vector<8x96xf32> to vector<8x4xf32>
    %500 = vector.extract_strided_slice %463 {offsets = [0, 72], sizes = [8, 4], strides = [1, 1]} : vector<8x96xf32> to vector<8x4xf32>
    %501 = vector.extract_strided_slice %463 {offsets = [0, 76], sizes = [8, 4], strides = [1, 1]} : vector<8x96xf32> to vector<8x4xf32>
    %502 = vector.extract_strided_slice %463 {offsets = [0, 80], sizes = [8, 4], strides = [1, 1]} : vector<8x96xf32> to vector<8x4xf32>
    %503 = vector.extract_strided_slice %463 {offsets = [0, 84], sizes = [8, 4], strides = [1, 1]} : vector<8x96xf32> to vector<8x4xf32>
    %504 = vector.extract_strided_slice %463 {offsets = [0, 88], sizes = [8, 4], strides = [1, 1]} : vector<8x96xf32> to vector<8x4xf32>
    %505 = vector.extract_strided_slice %463 {offsets = [0, 92], sizes = [8, 4], strides = [1, 1]} : vector<8x96xf32> to vector<8x4xf32>
    %506 = vector.shape_cast %498 : vector<8x4xf32> to vector<1x8x4xf32>
    %507 = vector.shape_cast %499 : vector<8x4xf32> to vector<1x8x4xf32>
    %508 = vector.shape_cast %500 : vector<8x4xf32> to vector<1x8x4xf32>
    %509 = vector.shape_cast %501 : vector<8x4xf32> to vector<1x8x4xf32>
    %510 = vector.shape_cast %502 : vector<8x4xf32> to vector<1x8x4xf32>
    %511 = vector.shape_cast %503 : vector<8x4xf32> to vector<1x8x4xf32>
    %512 = vector.shape_cast %504 : vector<8x4xf32> to vector<1x8x4xf32>
    %513 = vector.shape_cast %505 : vector<8x4xf32> to vector<1x8x4xf32>
    %514 = tpu.concatenate %506, %507, %508, %509, %510, %511, %512, %513 in 0 : vector<1x8x4xf32>, vector<1x8x4xf32>, vector<1x8x4xf32>, vector<1x8x4xf32>, vector<1x8x4xf32>, vector<1x8x4xf32>, vector<1x8x4xf32>, vector<1x8x4xf32> -> vector<8x8x4xf32>
    "tpu.trace_start"() <{level = 10 : i32, message = "hqd,hkd->hqk"}> : () -> ()
    %cst_157 = arith.constant dense<0.000000e+00> : vector<8x8x8xf32>
    %515 = tpu.matmul %480, %497, %cst_157 {dimension_numbers = #tpu.dot_dimension_numbers<[2], [2], [1], [1], [0, 0, 0, 1, 1, 1], [0], [0]>} : vector<8x8x4xf32>, vector<8x8x4xf32>, vector<8x8x8xf32> -> vector<8x8x8xf32>
    "tpu.trace_stop"() : () -> ()
    %cst_158 = arith.constant 5.000000e-01 : f32
    %516 = vector.broadcast %cst_158 : f32 to vector<8x8x8xf32>
    %517 = arith.mulf %515, %516 : vector<8x8x8xf32>
    %518 = vector.broadcast %461 : i32 to vector<1x1x8xi32>
    %519 = arith.cmpi slt, %344, %518 : vector<1x1x8xi32>
    %cst_159 = arith.constant 0.000000e+00 : f32
    %cst_160 = arith.constant -1.000000e+09 : f32
    %520 = vector.broadcast %cst_159 : f32 to vector<1x1x8xf32>
    %521 = vector.broadcast %cst_160 : f32 to vector<1x1x8xf32>
    %522 = arith.select %519, %520, %521 : vector<1x1x8xi1>, vector<1x1x8xf32>
    %523 = vector.broadcast %522 : vector<1x1x8xf32> to vector<8x8x8xf32>
    %524 = arith.addf %517, %523 : vector<8x8x8xf32>
    %cst_161 = arith.constant dense<0xFF800000> : vector<8x8xf32>
    %525 = vector.multi_reduction <maximumf>, %524, %cst_161 [2] : vector<8x8x8xf32> to vector<8x8xf32>
    %526 = vector.shape_cast %525 : vector<8x8xf32> to vector<8x8x1xf32>
    %527 = vector.broadcast %526 : vector<8x8x1xf32> to vector<8x8x8xf32>
    %528 = arith.subf %524, %527 : vector<8x8x8xf32>
    %529 = math.exp %528 : vector<8x8x8xf32>
    %cst_162 = arith.constant dense<0.000000e+00> : vector<8x8xf32>
    %530 = vector.multi_reduction <add>, %529, %cst_162 [2] : vector<8x8x8xf32> to vector<8x8xf32>
    %531 = vector.shape_cast %530 : vector<8x8xf32> to vector<8x8x1xf32>
    %532 = vector.broadcast %531 : vector<8x8x1xf32> to vector<8x8x8xf32>
    %533 = arith.divf %529, %532 : vector<8x8x8xf32>
    "tpu.trace_start"() <{level = 10 : i32, message = "hqk,hkd->hqd"}> : () -> ()
    %cst_163 = arith.constant dense<0.000000e+00> : vector<8x8x4xf32>
    %534 = tpu.matmul %533, %514, %cst_163 {dimension_numbers = #tpu.dot_dimension_numbers<[2], [1], [1], [2], [0, 0, 0, 1, 1, 2], [0], [0]>} : vector<8x8x8xf32>, vector<8x8x4xf32>, vector<8x8x4xf32> -> vector<8x8x4xf32>
    "tpu.trace_stop"() : () -> ()
    "tpu.trace_start"() <{level = 10 : i32, message = "hqd,hdk->hqk"}> : () -> ()
    %cst_164 = arith.constant dense<0.000000e+00> : vector<8x8x32xf32>
    %535 = tpu.matmul %534, %340, %cst_164 {dimension_numbers = #tpu.dot_dimension_numbers<[2], [1], [1], [2], [0, 0, 0, 1, 1, 2], [0], [0]>} : vector<8x8x4xf32>, vector<8x4x32xf32>, vector<8x8x32xf32> -> vector<8x8x32xf32>
    "tpu.trace_stop"() : () -> ()
    %cst_165 = arith.constant dense<0.000000e+00> : vector<8x32xf32>
    %536 = vector.multi_reduction <add>, %535, %cst_165 [0] : vector<8x8x32xf32> to vector<8x32xf32>
    %537 = vector.broadcast %341 : vector<1x32xf32> to vector<8x32xf32>
    %538 = arith.addf %536, %537 : vector<8x32xf32>
    %539 = arith.addf %462, %538 : vector<8x32xf32>
    %cst_166 = arith.constant dense<0.000000e+00> : vector<8xf32>
    %540 = vector.multi_reduction <add>, %539, %cst_166 [1] : vector<8x32xf32> to vector<8xf32>
    %541 = vector.shape_cast %540 : vector<8xf32> to vector<8x1xf32>
    %cst_167 = arith.constant 3.200000e+01 : f32
    %542 = vector.broadcast %cst_167 : f32 to vector<8x1xf32>
    %543 = arith.divf %541, %542 : vector<8x1xf32>
    %544 = vector.broadcast %543 : vector<8x1xf32> to vector<8x32xf32>
    %545 = arith.subf %539, %544 : vector<8x32xf32>
    %546 = arith.mulf %545, %545 : vector<8x32xf32>
    %cst_168 = arith.constant dense<0.000000e+00> : vector<8xf32>
    %547 = vector.multi_reduction <add>, %546, %cst_168 [1] : vector<8x32xf32> to vector<8xf32>
    %548 = vector.shape_cast %547 : vector<8xf32> to vector<8x1xf32>
    %cst_169 = arith.constant 3.200000e+01 : f32
    %549 = vector.broadcast %cst_169 : f32 to vector<8x1xf32>
    %550 = arith.divf %548, %549 : vector<8x1xf32>
    %551 = vector.broadcast %543 : vector<8x1xf32> to vector<8x32xf32>
    %552 = arith.subf %539, %551 : vector<8x32xf32>
    %cst_170 = arith.constant 9.99999974E-6 : f32
    %553 = vector.broadcast %cst_170 : f32 to vector<8x1xf32>
    %554 = arith.addf %550, %553 : vector<8x1xf32>
    %555 = math.rsqrt %554 : vector<8x1xf32>
    %556 = vector.broadcast %555 : vector<8x1xf32> to vector<8x32xf32>
    %557 = arith.mulf %552, %556 : vector<8x32xf32>
    %558 = vector.broadcast %342 : vector<1x32xf32> to vector<8x32xf32>
    %559 = arith.mulf %557, %558 : vector<8x32xf32>
    %560 = vector.broadcast %343 : vector<1x32xf32> to vector<8x32xf32>
    %561 = arith.addf %559, %560 : vector<8x32xf32>
    %c1_i32_171 = arith.constant 1 : i32
    %562 = arith.subi %461, %c1_i32_171 : i32
    %c0_i32_172 = arith.constant 0 : i32
    %563 = arith.maxsi %562, %c0_i32_172 : i32
    %564 = vector.broadcast %563 : i32 to vector<8x1xi32>
    %565 = arith.cmpi eq, %345, %564 : vector<8x1xi32>
    %c0_i32_173 = arith.constant 0 : i32
    %566 = arith.cmpi sgt, %461, %c0_i32_173 : i32
    %567 = vector.broadcast %566 : i1 to vector<8x1xi1>
    %568 = arith.andi %565, %567 : vector<8x1xi1>
    %cst_174 = arith.constant 1.000000e+00 : f32
    %cst_175 = arith.constant 0.000000e+00 : f32
    %569 = vector.broadcast %cst_174 : f32 to vector<8x1xf32>
    %570 = vector.broadcast %cst_175 : f32 to vector<8x1xf32>
    %571 = arith.select %568, %569, %570 : vector<8x1xi1>, vector<8x1xf32>
    %572 = vector.broadcast %571 : vector<8x1xf32> to vector<8x32xf32>
    %573 = arith.mulf %561, %572 : vector<8x32xf32>
    %cst_176 = arith.constant dense<0.000000e+00> : vector<32xf32>
    %574 = vector.multi_reduction <add>, %573, %cst_176 [0] : vector<8x32xf32> to vector<32xf32>
    %575 = vector.shape_cast %574 : vector<32xf32> to vector<1x32xf32>
    %576 = tpu.concatenate %460, %575 in 0 : vector<1x32xf32>, vector<1x32xf32> -> vector<2x32xf32>
    %c0_177 = arith.constant 0 : index
    %c0_178 = arith.constant 0 : index
    %577 = vector.load %arg25[%c0_177, %c0_178] : memref<32x256xf32, #tpu.memory_space<vmem>>, vector<32x256xf32>
    %cst_179 = arith.constant dense<0.000000e+00> : vector<2x256xf32>
    %578 = tpu.matmul %576, %577, %cst_179 {dimension_numbers = #tpu.dot_dimension_numbers<[1], [0], [0], [1], [0, 0, 1, 1], [], []>} : vector<2x32xf32>, vector<32x256xf32>, vector<2x256xf32> -> vector<2x256xf32>
    %c0_180 = arith.constant 0 : index
    %c0_181 = arith.constant 0 : index
    %579 = vector.load %arg26[%c0_180, %c0_181] : memref<1x256xf32, #tpu.memory_space<vmem>>, vector<1x256xf32>
    %580 = vector.broadcast %579 : vector<1x256xf32> to vector<2x256xf32>
    %581 = arith.addf %578, %580 : vector<2x256xf32>
    %c0_182 = arith.constant 0 : index
    %c0_183 = arith.constant 0 : index
    %582 = vector.load %arg27[%c0_182, %c0_183] : memref<2x256xf32, #tpu.memory_space<vmem>>, vector<2x256xf32>
    tpu.vector_store %arg27[%c0_182, %c0_183], %581 {strides = array<i32>} : memref<2x256xf32, #tpu.memory_space<vmem>>, vector<2x256xf32>,
    return
  }
  func.func @transform_0(%arg0: i32, %arg1: memref<2xi32, #tpu.memory_space<smem>>) -> (i32, i32) {
    %c0_i32 = arith.constant 0 : i32
    %c0_i32_0 = arith.constant 0 : i32
    %c0_i32_1 = arith.constant 0 : i32
    return %c0_i32, %c0_i32_0 : i32, i32
  }
  func.func @transform_1(%arg0: i32, %arg1: memref<2xi32, #tpu.memory_space<smem>>) -> (i32, i32) {
    %c0_i32 = arith.constant 0 : i32
    %c0_i32_0 = arith.constant 0 : i32
    %c0_i32_1 = arith.constant 0 : i32
    return %c0_i32, %c0_i32_0 : i32, i32
  }
  func.func @transform_2(%arg0: i32, %arg1: memref<2xi32, #tpu.memory_space<smem>>) -> (i32, i32) {
    %c0_i32 = arith.constant 0 : i32
    %c0_i32_0 = arith.constant 0 : i32
    %c0_i32_1 = arith.constant 0 : i32
    return %c0_i32, %c0_i32_0 : i32, i32
  }
  func.func @transform_3(%arg0: i32, %arg1: memref<2xi32, #tpu.memory_space<smem>>) -> (i32, i32) {
    %c0_i32 = arith.constant 0 : i32
    %c0_i32_0 = arith.constant 0 : i32
    %c0_i32_1 = arith.constant 0 : i32
    return %c0_i32, %c0_i32_0 : i32, i32
  }
  func.func @transform_4(%arg0: i32, %arg1: memref<2xi32, #tpu.memory_space<smem>>) -> (i32, i32) {
    %c0_i32 = arith.constant 0 : i32
    %c0_i32_0 = arith.constant 0 : i32
    %c0_i32_1 = arith.constant 0 : i32
    return %c0_i32, %c0_i32_0 : i32, i32
  }
  func.func @transform_5(%arg0: i32, %arg1: memref<2xi32, #tpu.memory_space<smem>>) -> (i32, i32) {
    %c0_i32 = arith.constant 0 : i32
    %c0_i32_0 = arith.constant 0 : i32
    %c0_i32_1 = arith.constant 0 : i32
    return %c0_i32, %c0_i32_0 : i32, i32
  }
  func.func @transform_6(%arg0: i32, %arg1: memref<2xi32, #tpu.memory_space<smem>>) -> (i32, i32) {
    %c0_i32 = arith.constant 0 : i32
    %c0_i32_0 = arith.constant 0 : i32
    %c0_i32_1 = arith.constant 0 : i32
    return %c0_i32, %c0_i32_0 : i32, i32
  }
  func.func @transform_7(%arg0: i32, %arg1: memref<2xi32, #tpu.memory_space<smem>>) -> (i32, i32) {
    %c0_i32 = arith.constant 0 : i32
    %c0_i32_0 = arith.constant 0 : i32
    %c0_i32_1 = arith.constant 0 : i32
    return %c0_i32, %c0_i32_0 : i32, i32
  }
  func.func @transform_8(%arg0: i32, %arg1: memref<2xi32, #tpu.memory_space<smem>>) -> (i32, i32) {
    %c0_i32 = arith.constant 0 : i32
    %c0_i32_0 = arith.constant 0 : i32
    %c0_i32_1 = arith.constant 0 : i32
    return %c0_i32, %c0_i32_0 : i32, i32
  }
  func.func @transform_9(%arg0: i32, %arg1: memref<2xi32, #tpu.memory_space<smem>>) -> (i32, i32) {
    %c0_i32 = arith.constant 0 : i32
    %c0_i32_0 = arith.constant 0 : i32
    %c0_i32_1 = arith.constant 0 : i32
    return %c0_i32, %c0_i32_0 : i32, i32
  }
  func.func @transform_10(%arg0: i32, %arg1: memref<2xi32, #tpu.memory_space<smem>>) -> (i32, i32) {
    %c0_i32 = arith.constant 0 : i32
    %c0_i32_0 = arith.constant 0 : i32
    %c0_i32_1 = arith.constant 0 : i32
    return %c0_i32, %c0_i32_0 : i32, i32
  }
  func.func @transform_11(%arg0: i32, %arg1: memref<2xi32, #tpu.memory_space<smem>>) -> (i32, i32) {
    %c0_i32 = arith.constant 0 : i32
    %c0_i32_0 = arith.constant 0 : i32
    %c0_i32_1 = arith.constant 0 : i32
    return %c0_i32, %c0_i32_0 : i32, i32
  }
  func.func @transform_12(%arg0: i32, %arg1: memref<2xi32, #tpu.memory_space<smem>>) -> (i32, i32) {
    %c0_i32 = arith.constant 0 : i32
    %c0_i32_0 = arith.constant 0 : i32
    %c0_i32_1 = arith.constant 0 : i32
    return %c0_i32, %c0_i32_0 : i32, i32
  }
  func.func @transform_13(%arg0: i32, %arg1: memref<2xi32, #tpu.memory_space<smem>>) -> (i32, i32) {
    %c0_i32 = arith.constant 0 : i32
    %c0_i32_0 = arith.constant 0 : i32
    %c0_i32_1 = arith.constant 0 : i32
    return %c0_i32, %c0_i32_0 : i32, i32
  }
  func.func @transform_14(%arg0: i32, %arg1: memref<2xi32, #tpu.memory_space<smem>>) -> (i32, i32) {
    %c0_i32 = arith.constant 0 : i32
    %c0_i32_0 = arith.constant 0 : i32
    %c0_i32_1 = arith.constant 0 : i32
    return %c0_i32, %c0_i32_0 : i32, i32
  }
  func.func @transform_15(%arg0: i32, %arg1: memref<2xi32, #tpu.memory_space<smem>>) -> (i32, i32) {
    %c0_i32 = arith.constant 0 : i32
    %c0_i32_0 = arith.constant 0 : i32
    %c0_i32_1 = arith.constant 0 : i32
    return %c0_i32, %c0_i32_0 : i32, i32
  }
  func.func @transform_16(%arg0: i32, %arg1: memref<2xi32, #tpu.memory_space<smem>>) -> (i32, i32) {
    %c0_i32 = arith.constant 0 : i32
    %c0_i32_0 = arith.constant 0 : i32
    %c0_i32_1 = arith.constant 0 : i32
    return %c0_i32, %c0_i32_0 : i32, i32
  }
  func.func @transform_17(%arg0: i32, %arg1: memref<2xi32, #tpu.memory_space<smem>>) -> (i32, i32) {
    %c0_i32 = arith.constant 0 : i32
    %c0_i32_0 = arith.constant 0 : i32
    %c0_i32_1 = arith.constant 0 : i32
    return %c0_i32, %c0_i32_0 : i32, i32
  }
  func.func @transform_18(%arg0: i32, %arg1: memref<2xi32, #tpu.memory_space<smem>>) -> (i32, i32) {
    %c0_i32 = arith.constant 0 : i32
    %c0_i32_0 = arith.constant 0 : i32
    %c0_i32_1 = arith.constant 0 : i32
    return %c0_i32, %c0_i32_0 : i32, i32
  }
  func.func @transform_19(%arg0: i32, %arg1: memref<2xi32, #tpu.memory_space<smem>>) -> (i32, i32, i32) {
    %c0_i32 = arith.constant 0 : i32
    %c0_i32_0 = arith.constant 0 : i32
    %c0_i32_1 = arith.constant 0 : i32
    %c0_i32_2 = arith.constant 0 : i32
    return %c0_i32, %c0_i32_0, %c0_i32_1 : i32, i32, i32
  }
  func.func @transform_20(%arg0: i32, %arg1: memref<2xi32, #tpu.memory_space<smem>>) -> (i32, i32) {
    %c0_i32 = arith.constant 0 : i32
    %c0_i32_0 = arith.constant 0 : i32
    %c0_i32_1 = arith.constant 0 : i32
    return %c0_i32, %c0_i32_0 : i32, i32
  }
  func.func @transform_21(%arg0: i32, %arg1: memref<2xi32, #tpu.memory_space<smem>>) -> (i32, i32) {
    %c0_i32 = arith.constant 0 : i32
    %c0_i32_0 = arith.constant 0 : i32
    %c0_i32_1 = arith.constant 0 : i32
    return %c0_i32, %c0_i32_0 : i32, i32
  }
  func.func @transform_22(%arg0: i32, %arg1: memref<2xi32, #tpu.memory_space<smem>>) -> (i32, i32) {
    %c0_i32 = arith.constant 0 : i32
    %c0_i32_0 = arith.constant 0 : i32
    %c0_i32_1 = arith.constant 0 : i32
    return %c0_i32, %c0_i32_0 : i32, i32
  }
  func.func @transform_23(%arg0: i32, %arg1: memref<2xi32, #tpu.memory_space<smem>>) -> (i32, i32) {
    %c0_i32 = arith.constant 0 : i32
    %c0_i32_0 = arith.constant 0 : i32
    %c0_i32_1 = arith.constant 0 : i32
    return %c0_i32, %c0_i32_0 : i32, i32
  }
  func.func @transform_24(%arg0: i32, %arg1: memref<2xi32, #tpu.memory_space<smem>>) -> (i32, i32) {
    %c0_i32 = arith.constant 0 : i32
    %c0_i32_0 = arith.constant 0 : i32
    %c0_i32_1 = arith.constant 0 : i32
    return %c0_i32, %c0_i32_0 : i32, i32
  }
  func.func @transform_25(%arg0: i32, %arg1: memref<2xi32, #tpu.memory_space<smem>>) -> (i32, i32) {
    %c0_i32 = arith.constant 0 : i32
    %c0_i32_0 = arith.constant 0 : i32
    %c0_i32_1 = arith.constant 0 : i32
    return %c0_i32, %c0_i32_0 : i32, i32
  }
}

</mosaic_0001>

<llo_original>
// kernel: tpu_custom_call.1
$region0: #{tpu_custom_call.1}
  #allocation0 [shape = 'u32[]', space=smem, size = 0x4, offset = 0x4, fixed_abs, tag = 'smem constant byte address 0x4 - core index']
  #allocation1 [shape = 'u32[72,128]{1,0:T(1,128)}', space=vmem, size = 0x9000, scoped, tag = 'internal scratch']
  #allocation2 [shape = 'f32[16,128]{1,0:T(8,128)}', space=vmem, size = 0x2000, scoped, tag = 'scratch operand']
  #allocation3 [shape = 'f32[16,32]{1,0:T(8,128)}', space=vmem, size = 0x2000, scoped, tag = 'scratch operand']
  #allocation4 [shape = 's32[1]{0}', space=sflag, size = 0x4, scoped, tag = 'scoped memory for tpu_custom_call.1']
  #allocation5 [shape = 'u8[512]{0}', space=smem, size = 0x200, scoped, tag = 'prefetched SMEM operand 0']
  %s0 = inlined_call_operand.hbm [shape: s32[2], index: 0, kind: input, shape index: {}]
  %s1 = inlined_call_operand.hbm [shape: f32[2,16], index: 1, kind: input, shape index: {}]
  %s2 = inlined_call_operand.hbm [shape: f32[16,24], index: 2, kind: input, shape index: {}]
  %s3 = inlined_call_operand.hbm [shape: f32[16,32], index: 3, kind: input, shape index: {}]
  %s4 = inlined_call_operand.vmem [shape: f32[1,32], index: 4, kind: input, shape index: {}]
  %s5 = inlined_call_operand.vmem [shape: f32[1,32], index: 5, kind: input, shape index: {}]
  %s6 = inlined_call_operand.vmem [shape: f32[1,32], index: 6, kind: input, shape index: {}]
  %s7 = inlined_call_operand.hbm [shape: f32[16,32], index: 7, kind: input, shape index: {}]
  %s8 = inlined_call_operand.vmem [shape: f32[1,32], index: 8, kind: input, shape index: {}]
  %s9 = inlined_call_operand.vmem [shape: f32[1,32], index: 9, kind: input, shape index: {}]
  %s10 = inlined_call_operand.vmem [shape: f32[1,32], index: 10, kind: input, shape index: {}]
  %s11 = inlined_call_operand.hbm [shape: f32[24,32], index: 11, kind: input, shape index: {}]
  %s12 = inlined_call_operand.vmem [shape: f32[1,32], index: 12, kind: input, shape index: {}]
  %s13 = inlined_call_operand.vmem [shape: f32[1,32], index: 13, kind: input, shape index: {}]
  %s14 = inlined_call_operand.vmem [shape: f32[1,32], index: 14, kind: input, shape index: {}]
  %s15 = inlined_call_operand.hbm [shape: f32[32,128], index: 15, kind: input, shape index: {}]
  %s16 = inlined_call_operand.hbm [shape: f32[32,128], index: 16, kind: input, shape index: {}]
  %s17 = inlined_call_operand.vmem [shape: f32[1,128], index: 17, kind: input, shape index: {}]
  %s18 = inlined_call_operand.hbm [shape: f32[32,96], index: 18, kind: input, shape index: {}]
  %s19 = inlined_call_operand.vmem [shape: f32[1,96], index: 19, kind: input, shape index: {}]
  %s20 = inlined_call_operand.hbm [shape: f32[8,4,32], index: 20, kind: input, shape index: {}]
  %s21 = inlined_call_operand.vmem [shape: f32[1,32], index: 21, kind: input, shape index: {}]
  %s22 = inlined_call_operand.vmem [shape: f32[1,32], index: 22, kind: input, shape index: {}]
  %s23 = inlined_call_operand.vmem [shape: f32[1,32], index: 23, kind: input, shape index: {}]
  %s24 = inlined_call_operand.hbm [shape: f32[32,256], index: 24, kind: input, shape index: {}]
  %s25 = inlined_call_operand.vmem [shape: f32[1,256], index: 25, kind: input, shape index: {}]
  %s26 = inlined_call_operand.hbm [shape: f32[2,256], index: 26, kind: output, shape index: {}]
  %s27 = sld [smem:[#allocation0]]
  $region150: #{tpu_custom_call.1} parent=0
    _
  %s29 = ssub.s32 1, %s27
  %s30 = scalar_select 0, %s29, %s27
  %s32 = sshll.u32 %s0, 4
  %s33 = int_to_ptr.hbm [resolvable:$true] %s32
  %35 = dma.hbm_to_smem %s33, 16, [#allocation5], [#allocation4]
  %37 = dma.done [#allocation4], 16
  %38 = sfence
  $region1: #{tpu_custom_call.1} parent=0
    #allocation6 [shape = 'u8[1024]{0}', space=vmem, size = 0x400, scoped, tag = 'input window, operand 1, single buffered']
    #allocation7 [shape = 's32[1]{0}', space=sflag, size = 0x4, scoped, tag = 'scoped memory for tpu_custom_call.1']
    #allocation8 [shape = 's32[1]{0}', space=sflag, size = 0x4, scoped, tag = 'scoped memory for tpu_custom_call.1']
    #allocation9 [shape = 'u8[8192]{0}', space=vmem, size = 0x2000, scoped, tag = 'input window, operand 2, single buffered']
    #allocation10 [shape = 's32[1]{0}', space=sflag, size = 0x4, scoped, tag = 'scoped memory for tpu_custom_call.1']
    #allocation11 [shape = 'u8[8192]{0}', space=vmem, size = 0x2000, scoped, tag = 'input window, operand 3, single buffered']
    #allocation12 [shape = 'u8[8192]{0}', space=vmem, size = 0x2000, scoped, tag = 'input window, operand 7, single buffered']
    #allocation13 [shape = 's32[1]{0}', space=sflag, size = 0x4, scoped, tag = 'scoped memory for tpu_custom_call.1']
    #allocation14 [shape = 'u8[12288]{0}', space=vmem, size = 0x3000, scoped, tag = 'input window, operand 11, single buffered']
    #allocation15 [shape = 'u8[16384]{0}', space=vmem, size = 0x4000, scoped, tag = 'input window, operand 15, single buffered']
    #allocation16 [shape = 's32[1]{0}', space=sflag, size = 0x4, scoped, tag = 'scoped memory for tpu_custom_call.1']
    #allocation17 [shape = 'u8[16384]{0}', space=vmem, size = 0x4000, scoped, tag = 'input window, operand 16, single buffered']
    #allocation18 [shape = 'u8[16384]{0}', space=vmem, size = 0x4000, scoped, tag = 'input window, operand 18, single buffered']
    #allocation19 [shape = 's32[1]{0}', space=sflag, size = 0x4, scoped, tag = 'scoped memory for tpu_custom_call.1']
    #allocation20 [shape = 'u8[16384]{0}', space=vmem, size = 0x4000, scoped, tag = 'input window, operand 20, single buffered']
    #allocation21 [shape = 'u8[32768]{0}', space=vmem, size = 0x8000, scoped, tag = 'input window, operand 24, single buffered']
    #allocation22 [shape = 's32[1]{0}', space=sflag, size = 0x4, scoped, tag = 'scoped memory for tpu_custom_call.1']
    #allocation23 [shape = 'u8[2048]{0}', space=vmem, size = 0x800, scoped, tag = 'output window, operand 0, single buffered']
    %39 = vsyncpa [#allocation7], 0
    %40 = vsyncpa [#allocation10], 0
    %41 = vsyncpa [#allocation13], 0
    %42 = vsyncpa [#allocation16], 0
    %43 = vsyncpa [#allocation19], 0
    %44 = vsyncpa [#allocation22], 0
    %45 = vsyncpa [#allocation8], 0
    // Predicated region
    $region2: #{tpu_custom_call.1} parent=1 // pred_check
      _
    $region3: #{tpu_custom_call.1} parent=1 // pred_check_branch
      %47 = sbr.rel (0) target = $region5
    $region4: #{tpu_custom_call.1} parent=1 // pred_region
      %49 = vsyncadd [#allocation7], 0
      %s51 = sshll.u32 %s1, 4
      %s52 = int_to_ptr.hbm [resolvable:$true] %s51
      %s53 = sshll.u32 [#allocation6], 4
      %s54 = int_to_ptr.vmem [resolvable:$true] %s53
      %56 = dma.hbm_to_vmem [thread:$0]  %s52, 32, %s54, [#allocation7]
    $region5: #{tpu_custom_call.1} parent=1 // pred_fallthru
      _
    // Predicated region
    $region6: #{tpu_custom_call.1} parent=1 // pred_check
      _
    $region7: #{tpu_custom_call.1} parent=1 // pred_check_branch
      %58 = sbr.rel (0) target = $region9
    $region8: #{tpu_custom_call.1} parent=1 // pred_region
      %60 = vsyncadd [#allocation10], 0
      %s61 = sshll.u32 %s2, 4
      %s62 = int_to_ptr.hbm [resolvable:$true] %s61
      %s63 = sshll.u32 [#allocation9], 4
      %s64 = int_to_ptr.vmem [resolvable:$true] %s63
      %69 = dma.hbm_to_vmem [thread:$0]  %s62, 256, %s64, [#allocation10], 128, 128, 8
    $region9: #{tpu_custom_call.1} parent=1 // pred_fallthru
      _
    // Predicated region
    $region10: #{tpu_custom_call.1} parent=1 // pred_check
      _
    $region11: #{tpu_custom_call.1} parent=1 // pred_check_branch
      %71 = sbr.rel (0) target = $region13
    $region12: #{tpu_custom_call.1} parent=1 // pred_region
      %73 = vsyncadd [#allocation10], 0
      %s74 = sshll.u32 %s3, 4
      %s75 = int_to_ptr.hbm [resolvable:$true] %s74
      %s76 = sshll.u32 [#allocation11], 4
      %s77 = int_to_ptr.vmem [resolvable:$true] %s76
      %82 = dma.hbm_to_vmem [thread:$0]  %s75, 256, %s77, [#allocation10], 128, 128, 8
    $region13: #{tpu_custom_call.1} parent=1 // pred_fallthru
      _
    // Predicated region
    $region14: #{tpu_custom_call.1} parent=1 // pred_check
      _
    $region15: #{tpu_custom_call.1} parent=1 // pred_check_branch
      %84 = sbr.rel (0) target = $region17
    $region16: #{tpu_custom_call.1} parent=1 // pred_region
      _
    $region17: #{tpu_custom_call.1} parent=1 // pred_fallthru
      _
    // Predicated region
    $region18: #{tpu_custom_call.1} parent=1 // pred_check
      _
    $region19: #{tpu_custom_call.1} parent=1 // pred_check_branch
      %86 = sbr.rel (0) target = $region21
    $region20: #{tpu_custom_call.1} parent=1 // pred_region
      _
    $region21: #{tpu_custom_call.1} parent=1 // pred_fallthru
      _
    // Predicated region
    $region22: #{tpu_custom_call.1} parent=1 // pred_check
      _
    $region23: #{tpu_custom_call.1} parent=1 // pred_check_branch
      %88 = sbr.rel (0) target = $region25
    $region24: #{tpu_custom_call.1} parent=1 // pred_region
      _
    $region25: #{tpu_custom_call.1} parent=1 // pred_fallthru
      _
    // Predicated region
    $region26: #{tpu_custom_call.1} parent=1 // pred_check
      _
    $region27: #{tpu_custom_call.1} parent=1 // pred_check_branch
      %90 = sbr.rel (0) target = $region29
    $region28: #{tpu_custom_call.1} parent=1 // pred_region
      %92 = vsyncadd [#allocation13], 0
      %s93 = sshll.u32 %s7, 4
      %s94 = int_to_ptr.hbm [resolvable:$true] %s93
      %s95 = sshll.u32 [#allocation12], 4
      %s96 = int_to_ptr.vmem [resolvable:$true] %s95
      %101 = dma.hbm_to_vmem [thread:$0]  %s94, 256, %s96, [#allocation13], 128, 128, 8
    $region29: #{tpu_custom_call.1} parent=1 // pred_fallthru
      _
    // Predicated region
    $region30: #{tpu_custom_call.1} parent=1 // pred_check
      _
    $region31: #{tpu_custom_call.1} parent=1 // pred_check_branch
      %103 = sbr.rel (0) target = $region33
    $region32: #{tpu_custom_call.1} parent=1 // pred_region
      _
    $region33: #{tpu_custom_call.1} parent=1 // pred_fallthru
      _
    // Predicated region
    $region34: #{tpu_custom_call.1} parent=1 // pred_check
      _
    $region35: #{tpu_custom_call.1} parent=1 // pred_check_branch
      %105 = sbr.rel (0) target = $region37
    $region36: #{tpu_custom_call.1} parent=1 // pred_region
      _
    $region37: #{tpu_custom_call.1} parent=1 // pred_fallthru
      _
    // Predicated region
    $region38: #{tpu_custom_call.1} parent=1 // pred_check
      _
    $region39: #{tpu_custom_call.1} parent=1 // pred_check_branch
      %107 = sbr.rel (0) target = $region41
    $region40: #{tpu_custom_call.1} parent=1 // pred_region
      _
    $region41: #{tpu_custom_call.1} parent=1 // pred_fallthru
      _
    // Predicated region
    $region42: #{tpu_custom_call.1} parent=1 // pred_check
      _
    $region43: #{tpu_custom_call.1} parent=1 // pred_check_branch
      %109 = sbr.rel (0) target = $region45
    $region44: #{tpu_custom_call.1} parent=1 // pred_region
      %111 = vsyncadd [#allocation13], 0
      %s112 = sshll.u32 %s11, 4
      %s113 = int_to_ptr.hbm [resolvable:$true] %s112
      %s114 = sshll.u32 [#allocation14], 4
      %s115 = int_to_ptr.vmem [resolvable:$true] %s114
      %120 = dma.hbm_to_vmem [thread:$0]  %s113, 384, %s115, [#allocation13], 128, 128, 8
    $region45: #{tpu_custom_call.1} parent=1 // pred_fallthru
      _
    // Predicated region
    $region46: #{tpu_custom_call.1} parent=1 // pred_check
      _
    $region47: #{tpu_custom_call.1} parent=1 // pred_check_branch
      %122 = sbr.rel (0) target = $region49
    $region48: #{tpu_custom_call.1} parent=1 // pred_region
      _
    $region49: #{tpu_custom_call.1} parent=1 // pred_fallthru
      _
    // Predicated region
    $region50: #{tpu_custom_call.1} parent=1 // pred_check
      _
    $region51: #{tpu_custom_call.1} parent=1 // pred_check_branch
      %124 = sbr.rel (0) target = $region53
    $region52: #{tpu_custom_call.1} parent=1 // pred_region
      _
    $region53: #{tpu_custom_call.1} parent=1 // pred_fallthru
      _
    // Predicated region
    $region54: #{tpu_custom_call.1} parent=1 // pred_check
      _
    $region55: #{tpu_custom_call.1} parent=1 // pred_check_branch
      %126 = sbr.rel (0) target = $region57
    $region56: #{tpu_custom_call.1} parent=1 // pred_region
      _
    $region57: #{tpu_custom_call.1} parent=1 // pred_fallthru
      _
    // Predicated region
    $region58: #{tpu_custom_call.1} parent=1 // pred_check
      _
    $region59: #{tpu_custom_call.1} parent=1 // pred_check_branch
      %128 = sbr.rel (0) target = $region61
    $region60: #{tpu_custom_call.1} parent=1 // pred_region
      %130 = vsyncadd [#allocation16], 0
      %s131 = sshll.u32 %s15, 4
      %s132 = int_to_ptr.hbm [resolvable:$true] %s131
      %s133 = sshll.u32 [#allocation15], 4
      %s134 = int_to_ptr.vmem [resolvable:$true] %s133
      %139 = dma.hbm_to_vmem [thread:$0]  %s132, 512, %s134, [#allocation16], 128, 128, 8
    $region61: #{tpu_custom_call.1} parent=1 // pred_fallthru
      _
    // Predicated region
    $region62: #{tpu_custom_call.1} parent=1 // pred_check
      _
    $region63: #{tpu_custom_call.1} parent=1 // pred_check_branch
      %141 = sbr.rel (0) target = $region65
    $region64: #{tpu_custom_call.1} parent=1 // pred_region
      %143 = vsyncadd [#allocation16], 0
      %s144 = sshll.u32 %s16, 4
      %s145 = int_to_ptr.hbm [resolvable:$true] %s144
      %s146 = sshll.u32 [#allocation17], 4
      %s147 = int_to_ptr.vmem [resolvable:$true] %s146
      %152 = dma.hbm_to_vmem [thread:$0]  %s145, 512, %s147, [#allocation16], 128, 128, 8
    $region65: #{tpu_custom_call.1} parent=1 // pred_fallthru
      _
    // Predicated region
    $region66: #{tpu_custom_call.1} parent=1 // pred_check
      _
    $region67: #{tpu_custom_call.1} parent=1 // pred_check_branch
      %154 = sbr.rel (0) target = $region69
    $region68: #{tpu_custom_call.1} parent=1 // pred_region
      _
    $region69: #{tpu_custom_call.1} parent=1 // pred_fallthru
      _
    // Predicated region
    $region70: #{tpu_custom_call.1} parent=1 // pred_check
      _
    $region71: #{tpu_custom_call.1} parent=1 // pred_check_branch
      %156 = sbr.rel (0) target = $region73
    $region72: #{tpu_custom_call.1} parent=1 // pred_region
      %158 = vsyncadd [#allocation19], 0
      %s159 = sshll.u32 %s18, 4
      %s160 = int_to_ptr.hbm [resolvable:$true] %s159
      %s161 = sshll.u32 [#allocation18], 4
      %s162 = int_to_ptr.vmem [resolvable:$true] %s161
      %167 = dma.hbm_to_vmem [thread:$0]  %s160, 512, %s162, [#allocation19], 128, 128, 8
    $region73: #{tpu_custom_call.1} parent=1 // pred_fallthru
      _
    // Predicated region
    $region74: #{tpu_custom_call.1} parent=1 // pred_check
      _
    $region75: #{tpu_custom_call.1} parent=1 // pred_check_branch
      %169 = sbr.rel (0) target = $region77
    $region76: #{tpu_custom_call.1} parent=1 // pred_region
      _
    $region77: #{tpu_custom_call.1} parent=1 // pred_fallthru
      _
    // Predicated region
    $region78: #{tpu_custom_call.1} parent=1 // pred_check
      _
    $region79: #{tpu_custom_call.1} parent=1 // pred_check_branch
      %171 = sbr.rel (0) target = $region81
    $region80: #{tpu_custom_call.1} parent=1 // pred_region
      %173 = vsyncadd [#allocation19], 0
      %s174 = sshll.u32 %s20, 4
      %s175 = int_to_ptr.hbm [resolvable:$true] %s174
      %s176 = sshll.u32 [#allocation20], 4
      %s177 = int_to_ptr.vmem [resolvable:$true] %s176
      %182 = dma.hbm_to_vmem [thread:$0]  %s175, 512, %s177, [#allocation19], 64, 64, 4
    $region81: #{tpu_custom_call.1} parent=1 // pred_fallthru
      _
    // Predicated region
    $region82: #{tpu_custom_call.1} parent=1 // pred_check
      _
    $region83: #{tpu_custom_call.1} parent=1 // pred_check_branch
      %184 = sbr.rel (0) target = $region85
    $region84: #{tpu_custom_call.1} parent=1 // pred_region
      _
    $region85: #{tpu_custom_call.1} parent=1 // pred_fallthru
      _
    // Predicated region
    $region86: #{tpu_custom_call.1} parent=1 // pred_check
      _
    $region87: #{tpu_custom_call.1} parent=1 // pred_check_branch
      %186 = sbr.rel (0) target = $region89
    $region88: #{tpu_custom_call.1} parent=1 // pred_region
      _
    $region89: #{tpu_custom_call.1} parent=1 // pred_fallthru
      _
    // Predicated region
    $region90: #{tpu_custom_call.1} parent=1 // pred_check
      _
    $region91: #{tpu_custom_call.1} parent=1 // pred_check_branch
      %188 = sbr.rel (0) target = $region93
    $region92: #{tpu_custom_call.1} parent=1 // pred_region
      _
    $region93: #{tpu_custom_call.1} parent=1 // pred_fallthru
      _
    // Predicated region
    $region94: #{tpu_custom_call.1} parent=1 // pred_check
      _
    $region95: #{tpu_custom_call.1} parent=1 // pred_check_branch
      %190 = sbr.rel (0) target = $region97
    $region96: #{tpu_custom_call.1} parent=1 // pred_region
      %192 = vsyncadd [#allocation22], 0
      %s193 = sshll.u32 %s24, 4
      %s194 = int_to_ptr.hbm [resolvable:$true] %s193
      %s195 = sshll.u32 [#allocation21], 4
      %s196 = int_to_ptr.vmem [resolvable:$true] %s195
      %201 = dma.hbm_to_vmem [thread:$0]  %s194, 1024, %s196, [#allocation22], 256, 256, 16
    $region97: #{tpu_custom_call.1} parent=1 // pred_fallthru
      _
    // Predicated region
    $region98: #{tpu_custom_call.1} parent=1 // pred_check
      _
    $region99: #{tpu_custom_call.1} parent=1 // pred_check_branch
      %203 = sbr.rel (0) target = $region101
    $region100: #{tpu_custom_call.1} parent=1 // pred_region
      _
    $region101: #{tpu_custom_call.1} parent=1 // pred_fallthru
      _
    // Predicated region
    $region102: #{tpu_custom_call.1} parent=1 // pred_check
      _
    $region103: #{tpu_custom_call.1} parent=1 // pred_check_branch
      %205 = sbr.rel (0) target = $region105
    $region104: #{tpu_custom_call.1} parent=1 // pred_region
      %207 = dma.done [#allocation7], 32
    $region105: #{tpu_custom_call.1} parent=1 // pred_fallthru
      _
    // Predicated region
    $region106: #{tpu_custom_call.1} parent=1 // pred_check
      _
    $region107: #{tpu_custom_call.1} parent=1 // pred_check_branch
      %209 = sbr.rel (0) target = $region109
    $region108: #{tpu_custom_call.1} parent=1 // pred_region
      %211 = dma.done [#allocation10], 256
    $region109: #{tpu_custom_call.1} parent=1 // pred_fallthru
      _
    // Predicated region
    $region110: #{tpu_custom_call.1} parent=1 // pred_check
      _
    $region111: #{tpu_custom_call.1} parent=1 // pred_check_branch
      %213 = sbr.rel (0) target = $region113
    $region112: #{tpu_custom_call.1} parent=1 // pred_region
      %215 = dma.done [#allocation10], 256
    $region113: #{tpu_custom_call.1} parent=1 // pred_fallthru
      _
    // Predicated region
    $region114: #{tpu_custom_call.1} parent=1 // pred_check
      _
    $region115: #{tpu_custom_call.1} parent=1 // pred_check_branch
      %217 = sbr.rel (0) target = $region117
    $region116: #{tpu_custom_call.1} parent=1 // pred_region
      %219 = dma.done [#allocation13], 256
    $region117: #{tpu_custom_call.1} parent=1 // pred_fallthru
      _
    // Predicated region
    $region118: #{tpu_custom_call.1} parent=1 // pred_check
      _
    $region119: #{tpu_custom_call.1} parent=1 // pred_check_branch
      %221 = sbr.rel (0) target = $region121
    $region120: #{tpu_custom_call.1} parent=1 // pred_region
      %223 = dma.done [#allocation13], 384
    $region121: #{tpu_custom_call.1} parent=1 // pred_fallthru
      _
    // Predicated region
    $region122: #{tpu_custom_call.1} parent=1 // pred_check
      _
    $region123: #{tpu_custom_call.1} parent=1 // pred_check_branch
      %225 = sbr.rel (0) target = $region125
    $region124: #{tpu_custom_call.1} parent=1 // pred_region
      %227 = dma.done [#allocation16], 512
    $region125: #{tpu_custom_call.1} parent=1 // pred_fallthru
      _
    // Predicated region
    $region126: #{tpu_custom_call.1} parent=1 // pred_check
      _
    $region127: #{tpu_custom_call.1} parent=1 // pred_check_branch
      %229 = sbr.rel (0) target = $region129
    $region128: #{tpu_custom_call.1} parent=1 // pred_region
      %231 = dma.done [#allocation16], 512
    $region129: #{tpu_custom_call.1} parent=1 // pred_fallthru
      _
    // Predicated region
    $region130: #{tpu_custom_call.1} parent=1 // pred_check
      _
    $region131: #{tpu_custom_call.1} parent=1 // pred_check_branch
      %233 = sbr.rel (0) target = $region133
    $region132: #{tpu_custom_call.1} parent=1 // pred_region
      %235 = dma.done [#allocation19], 512
    $region133: #{tpu_custom_call.1} parent=1 // pred_fallthru
      _
    // Predicated region
    $region134: #{tpu_custom_call.1} parent=1 // pred_check
      _
    $region135: #{tpu_custom_call.1} parent=1 // pred_check_branch
      %237 = sbr.rel (0) target = $region137
    $region136: #{tpu_custom_call.1} parent=1 // pred_region
      %239 = dma.done [#allocation19], 512
    $region137: #{tpu_custom_call.1} parent=1 // pred_fallthru
      _
    // Predicated region
    $region138: #{tpu_custom_call.1} parent=1 // pred_check
      _
    $region139: #{tpu_custom_call.1} parent=1 // pred_check_branch
      %241 = sbr.rel (0) target = $region141
    $region140: #{tpu_custom_call.1} parent=1 // pred_region
      %243 = dma.done [#allocation22], 1024
    $region141: #{tpu_custom_call.1} parent=1 // pred_fallthru
      _
    %v244 = vld [vmem:[#allocation6] sm:$0x3]
    %v245 = vld [vmem:[#allocation11] sm:$0xff]
    %v246 = vld [vmem:[#allocation11 + $0x8] sm:$0xff]
    %v247 = vld [vmem:[%s4] sm:$0x1]
    %v249 = vperm.slane %v247, 0
    %vm251 = vcmask 130048
    %v253 = vsel %vm251, %v244, 0
    %255 = vmatpush.msra.mxu0 0.0
    %256 = vmatpush.msra.mxu0 0.0
    %257 = vmatpush.msra.mxu0 0.0
    %258 = vmatpush.msra.mxu0 0.0
    %259 = vmatpush.msra.mxu0 0.0
    %260 = vmatpush.msra.mxu0 0.0
    %261 = vmatpush.msra.mxu0 0.0
    %262 = vmatpush.msra.mxu0 0.0
    %263 = vmatpush.msra.mxu0 0.0
    %264 = vmatpush.msra.mxu0 0.0
    %265 = vmatpush.msra.mxu0 0.0
    %266 = vmatpush.msra.mxu0 0.0
    %267 = vmatpush.msra.mxu0 0.0
    %268 = vmatpush.msra.mxu0 0.0
    %269 = vmatpush.msra.mxu0 %v246
    %270 = vmatpush.msra.mxu0 %v245
    %271 = vmatmul.f32.gmra.mxu0 %v253
    %v272 = vpop.f32.mrf.mxu0
    %v273 = vadd.f32 %v249, %v272
    %274 = vdwg.mxu0
    %v275 = vld [vmem:[%s5] sm:$0x1]
    %v276 = vld [vmem:[%s6] sm:$0x1]
    %vm277 = vcmask 254976
    %v278 = vsel %vm277, %v273, 0.0
    %279 = vadd.xlane.f32.xlu0 %v278
    %v280 = vpop.xlane.xlu0 %279
    %v281 = vrcp.pop 32.0
    %v282 = vmul.f32 32.0, %v281
    %v283 = vsub.f32 1.0, %v282
    %v284 = vmul.f32 %v281, %v283
    %v285 = vadd.f32 %v281, %v284
    %vm286 = vweird.f32 %v281
    %v287 = vsel %vm286, %v281, %v285
    %v288 = vmul.f32 %v280, %v287
    %v289 = vsub.f32 %v273, %v288
    %v290 = vmul.f32 %v289, %v289
    %v291 = vsel %vm277, %v290, 0.0
    %292 = vadd.xlane.f32.xlu0 %v291
    %v293 = vpop.xlane.xlu0 %292
    %v294 = vmul.f32 %v293, %v287
    %v295 = vadd.f32 %v294, 1e-05
    %v296 = vrsqrt.pop %v295
    %v297 = vmul.f32 %v296, %v295
    %v298 = vmul.f32 %v297, %v296
    %v299 = vmul.f32 0.5, %v298
    %v300 = vsub.f32 1.5, %v299
    %v301 = vmul.f32 %v296, %v300
    %vm302 = vweird.f32 %v295
    %vm303 = vweird.f32 %v296
    %vm304 = vmor %vm302, %vm303
    %v305 = vsel %vm304, %v296, %v301
    %v306 = vmul.f32 %v289, %v305
    %v308 = vperm.slane %v275, 0
    %v310 = vmul.f32 %v306, %v308
    %v312 = vperm.slane %v276, 0
    %v314 = vadd.f32 %v310, %v312
    %v315 = vmax.f32 %v314, 0.0
    %v316 = vld [vmem:[#allocation12] sm:$0xff]
    %v317 = vld [vmem:[#allocation12 + $0x8] sm:$0xff]
    %v318 = vld [vmem:[%s8] sm:$0x1]
    %v320 = vperm.slane %v318, 0
    %322 = vmatpush.msra.mxu0 0.0
    %323 = vmatpush.msra.mxu0 0.0
    %324 = vmatpush.msra.mxu0 0.0
    %325 = vmatpush.msra.mxu0 0.0
    %326 = vmatpush.msra.mxu0 0.0
    %327 = vmatpush.msra.mxu0 0.0
    %328 = vmatpush.msra.mxu0 0.0
    %329 = vmatpush.msra.mxu0 0.0
    %330 = vmatpush.msra.mxu0 0.0
    %331 = vmatpush.msra.mxu0 0.0
    %332 = vmatpush.msra.mxu0 0.0
    %333 = vmatpush.msra.mxu0 0.0
    %334 = vmatpush.msra.mxu0 0.0
    %335 = vmatpush.msra.mxu0 0.0
    %336 = vmatpush.msra.mxu0 %v317
    %337 = vmatpush.msra.mxu0 %v316
    %338 = vmatmul.f32.gmra.mxu0 %v253
    %v339 = vpop.f32.mrf.mxu0
    %v340 = vadd.f32 %v320, %v339
    %341 = vdwg.mxu0
    %v342 = vld [vmem:[%s9] sm:$0x1]
    %v343 = vld [vmem:[%s10] sm:$0x1]
    %v344 = vsel %vm277, %v340, 0.0
    %345 = vadd.xlane.f32.xlu0 %v344
    %v346 = vpop.xlane.xlu0 %345
    %v347 = vmul.f32 %v346, %v287
    %v348 = vsub.f32 %v340, %v347
    %v349 = vmul.f32 %v348, %v348
    %v350 = vsel %vm277, %v349, 0.0
    %351 = vadd.xlane.f32.xlu0 %v350
    %v352 = vpop.xlane.xlu0 %351
    %v353 = vmul.f32 %v352, %v287
    %v354 = vadd.f32 %v353, 1e-05
    %v355 = vrsqrt.pop %v354
    %v356 = vmul.f32 %v355, %v354
    %v357 = vmul.f32 %v356, %v355
    %v358 = vmul.f32 0.5, %v357
    %v359 = vsub.f32 1.5, %v358
    %v360 = vmul.f32 %v355, %v359
    %vm361 = vweird.f32 %v354
    %vm362 = vweird.f32 %v355
    %vm363 = vmor %vm361, %vm362
    %v364 = vsel %vm363, %v355, %v360
    %v365 = vmul.f32 %v348, %v364
    %v367 = vperm.slane %v342, 0
    %v369 = vmul.f32 %v365, %v367
    %v371 = vperm.slane %v343, 0
    %v373 = vadd.f32 %v369, %v371
    %v374 = vmax.f32 %v373, 0.0
    %v375 = vld [vmem:[#allocation9] sm:$0xff]
    %v376 = vld [vmem:[#allocation9 + $0x8] sm:$0xff]
    %v377 = vld [vmem:[#allocation14] sm:$0xff]
    %v378 = vld [vmem:[#allocation14 + $0x8] sm:$0xff]
    %v379 = vld [vmem:[#allocation14 + $0x10] sm:$0xff]
    %v380 = vld [vmem:[%s12] sm:$0x1]
    %v382 = vperm.slane %v380, 0
    %vm384 = vcmask 195584
    %v386 = vsel %vm384, %v375, 0
    %v389 = vsel %vm384, %v376, 0
    %391 = vmatpush.msra.mxu0 0.0
    %392 = vmatpush.msra.mxu0 0.0
    %393 = vmatpush.msra.mxu0 0.0
    %394 = vmatpush.msra.mxu0 0.0
    %395 = vmatpush.msra.mxu0 0.0
    %396 = vmatpush.msra.mxu0 0.0
    %397 = vmatpush.msra.mxu0 0.0
    %398 = vmatpush.msra.mxu0 0.0
    %399 = vmatpush.msra.mxu0 0.0
    %400 = vmatpush.msra.mxu0 0.0
    %401 = vmatpush.msra.mxu0 0.0
    %402 = vmatpush.msra.mxu0 0.0
    %403 = vmatpush.msra.mxu0 0.0
    %404 = vmatpush.msra.mxu0 %v379
    %405 = vmatpush.msra.mxu0 %v378
    %406 = vmatpush.msra.mxu0 %v377
    %407 = vmatmul.f32.gmra.mxu0 %v386
    %v408 = vpop.f32.mrf.mxu0
    %v409 = vadd.f32 %v382, %v408
    %410 = vmatmul.f32.gmra.mxu0 %v389
    %v411 = vpop.f32.mrf.mxu0
    %v412 = vadd.f32 %v382, %v411
    %413 = vdwg.mxu0
    %v414 = vld [vmem:[%s13] sm:$0x1]
    %v415 = vld [vmem:[%s14] sm:$0x1]
    %vm416 = vcmask 261120
    %v417 = vsel %vm416, %v409, 0.0
    %418 = vadd.xlane.f32.xlu0 %v417
    %v419 = vpop.xlane.xlu0 %418
    %v420 = vsel %vm416, %v412, 0.0
    %421 = vadd.xlane.f32.xlu0 %v420
    %v422 = vpop.xlane.xlu0 %421
    %v423 = vmul.f32 %v419, %v287
    %v424 = vmul.f32 %v422, %v287
    %v425 = vsub.f32 %v409, %v423
    %v426 = vsub.f32 %v412, %v424
    %v427 = vmul.f32 %v425, %v425
    %v428 = vmul.f32 %v426, %v426
    %v429 = vsel %vm416, %v427, 0.0
    %430 = vadd.xlane.f32.xlu0 %v429
    %v431 = vpop.xlane.xlu0 %430
    %v432 = vsel %vm416, %v428, 0.0
    %433 = vadd.xlane.f32.xlu0 %v432
    %v434 = vpop.xlane.xlu0 %433
    %v435 = vmul.f32 %v431, %v287
    %v436 = vmul.f32 %v434, %v287
    %v437 = vadd.f32 %v435, 1e-05
    %v438 = vadd.f32 %v436, 1e-05
    %v439 = vrsqrt.pop %v437
    %v440 = vmul.f32 %v439, %v437
    %v441 = vmul.f32 %v440, %v439
    %v442 = vmul.f32 0.5, %v441
    %v443 = vsub.f32 1.5, %v442
    %v444 = vmul.f32 %v439, %v443
    %vm445 = vweird.f32 %v437
    %vm446 = vweird.f32 %v439
    %vm447 = vmor %vm445, %vm446
    %v448 = vsel %vm447, %v439, %v444
    %v449 = vrsqrt.pop %v438
    %v450 = vmul.f32 %v449, %v438
    %v451 = vmul.f32 %v450, %v449
    %v452 = vmul.f32 0.5, %v451
    %v453 = vsub.f32 1.5, %v452
    %v454 = vmul.f32 %v449, %v453
    %vm455 = vweird.f32 %v438
    %vm456 = vweird.f32 %v449
    %vm457 = vmor %vm455, %vm456
    %v458 = vsel %vm457, %v449, %v454
    %v459 = vmul.f32 %v425, %v448
    %v460 = vmul.f32 %v426, %v458
    %v462 = vperm.slane %v414, 0
    %v464 = vmul.f32 %v459, %v462
    %v465 = vmul.f32 %v460, %v462
    %v467 = vperm.slane %v415, 0
    %v469 = vadd.f32 %v464, %v467
    %v470 = vadd.f32 %v465, %v467
    %v471 = vmax.f32 %v469, 0.0
    %v472 = vmax.f32 %v470, 0.0
    %v473 = vld [vmem:[#allocation15] sm:$0xff]
    %v474 = vld [vmem:[#allocation15 + $0x8] sm:$0xff]
    %v475 = vld [vmem:[#allocation15 + $0x10] sm:$0xff]
    %v476 = vld [vmem:[#allocation15 + $0x18] sm:$0xff]
    %v477 = vld [vmem:[%s17] sm:$0x1]
    %v479 = vperm.slane %v477, 0
    %v482 = vsel %vm416, %v471, 0
    %v485 = vsel %vm416, %v472, 0
    %487 = vmatpush.msra.mxu0 0.0
    %488 = vmatpush.msra.mxu0 0.0
    %489 = vmatpush.msra.mxu0 0.0
    %490 = vmatpush.msra.mxu0 0.0
    %491 = vmatpush.msra.mxu0 0.0
    %492 = vmatpush.msra.mxu0 0.0
    %493 = vmatpush.msra.mxu0 0.0
    %494 = vmatpush.msra.mxu0 0.0
    %495 = vmatpush.msra.mxu0 0.0
    %496 = vmatpush.msra.mxu0 0.0
    %497 = vmatpush.msra.mxu0 0.0
    %498 = vmatpush.msra.mxu0 0.0
    %499 = vmatpush.msra.mxu0 %v476
    %500 = vmatpush.msra.mxu0 %v475
    %501 = vmatpush.msra.mxu0 %v474
    %502 = vmatpush.msra.mxu0 %v473
    %503 = vmatmul.f32.gmra.mxu0 %v482
    %v504 = vpop.f32.mrf.mxu0
    %v505 = vadd.f32 %v479, %v504
    %506 = vmatmul.f32.gmra.mxu0 %v485
    %v507 = vpop.f32.mrf.mxu0
    %v508 = vadd.f32 %v479, %v507
    %509 = vdwg.mxu0
    %510 = vst [vmem:[#allocation2] sm:$0xff] %v505
    %511 = vst [vmem:[#allocation2 + $0x8] sm:$0xff] %v508
    %v512 = vld [vmem:[#allocation17] sm:$0xff]
    %v513 = vld [vmem:[#allocation17 + $0x8] sm:$0xff]
    %v514 = vld [vmem:[#allocation17 + $0x10] sm:$0xff]
    %v515 = vld [vmem:[#allocation17 + $0x18] sm:$0xff]
    %v516 = vld [vmem:[#allocation2] sm:$0x3]
    %v518 = vsel %vm416, %v315, 0
    %520 = vmatpush.msra.mxu0 0.0
    %521 = vmatpush.msra.mxu0 0.0
    %522 = vmatpush.msra.mxu0 0.0
    %523 = vmatpush.msra.mxu0 0.0
    %524 = vmatpush.msra.mxu0 0.0
    %525 = vmatpush.msra.mxu0 0.0
    %526 = vmatpush.msra.mxu0 0.0
    %527 = vmatpush.msra.mxu0 0.0
    %528 = vmatpush.msra.mxu0 0.0
    %529 = vmatpush.msra.mxu0 0.0
    %530 = vmatpush.msra.mxu0 0.0
    %531 = vmatpush.msra.mxu0 0.0
    %532 = vmatpush.msra.mxu0 %v515
    %533 = vmatpush.msra.mxu0 %v514
    %534 = vmatpush.msra.mxu0 %v513
    %535 = vmatpush.msra.mxu0 %v512
    %536 = vmatmul.f32.gmra.mxu0 %v518
    %v537 = vpop.f32.mrf.mxu0
    %v538 = vadd.f32 0.0, %v537
    %539 = vdwg.mxu0
    %v540 = vadd.f32 %v516, %v538
    %v541 = vxor.u32 %v540, 2147483648
    %v542 = vmul.f32 %v541, 1.442695
    %v543 = vpow.pop %v542
    %v544 = vadd.f32 %v543, 1.0
    %v545 = vrcp.pop %v544
    %v546 = vmul.f32 %v544, %v545
    %v547 = vsub.f32 1.0, %v546
    %v548 = vmul.f32 %v545, %v547
    %v549 = vadd.f32 %v545, %v548
    %vm550 = vweird.f32 %v544
    %vm551 = vweird.f32 %v545
    %vm552 = vmor %vm550, %vm551
    %v553 = vsel %vm552, %v545, %v549
    %v554 = vand.u32 2147483647, %v544
    %vm555 = vcmp.eq.f32.partialorder %v554, 8.507059e+37
    %v556 = vand.u32 %v544, 2147483648
    %v557 = vor.u32 1.1754944e-38, %v556
    %v558 = vsel %vm555, %v557, %v553
    %v559 = vmul.f32 1.0, %v558
    %v560 = vtanh.pop %v540
    %562 = vrot.lane.b32.xlu0 %v374, 32
    %v563 = vpop.permute.xlu0 %562
    %v565 = vmul.f32 %v559, %v563
    %567 = vrot.lane.b32.xlu0 %v560, 64
    %v568 = vpop.permute.xlu0 %567
    %v570 = vmul.f32 %v559, %v568
    %572 = vrot.lane.b32.xlu0 %v570, 32
    %v573 = vpop.permute.xlu0 %572
    %v575 = vadd.f32 %v565, %v573
    %v576 = vtanh.pop %v575
    %578 = vrot.lane.b32.xlu0 %v576, 64
    %v579 = vpop.permute.xlu0 %578
    %v581 = vmul.f32 %v559, %v579
    %583 = vrot.lane.b32.xlu0 %v581, 32
    %v584 = vpop.permute.xlu0 %583
    %vm586 = vcmask 253952
    %587 = vst.msk [vmem:[#allocation3] sm:$0x1] %vm586, %v584
    %vm588 = vcmask 254977
    %589 = vst.msk [vmem:[#allocation3 + $0x7] sm:$0x2] %vm588, %v584
    %s590 = scalar_lea.vmem [#allocation2], 2
    %v591 = vld [vmem:[%s590] sm:$0x3]
    %v592 = vsel %vm416, %v584, 0
    %594 = vmatpush.msra.mxu0 0.0
    %595 = vmatpush.msra.mxu0 0.0
    %596 = vmatpush.msra.mxu0 0.0
    %597 = vmatpush.msra.mxu0 0.0
    %598 = vmatpush.msra.mxu0 0.0
    %599 = vmatpush.msra.mxu0 0.0
    %600 = vmatpush.msra.mxu0 0.0
    %601 = vmatpush.msra.mxu0 0.0
    %602 = vmatpush.msra.mxu0 0.0
    %603 = vmatpush.msra.mxu0 0.0
    %604 = vmatpush.msra.mxu0 0.0
    %605 = vmatpush.msra.mxu0 0.0
    %606 = vmatpush.msra.mxu0 %v515
    %607 = vmatpush.msra.mxu0 %v514
    %608 = vmatpush.msra.mxu0 %v513
    %609 = vmatpush.msra.mxu0 %v512
    %610 = vmatmul.f32.gmra.mxu0 %v592
    %v611 = vpop.f32.mrf.mxu0
    %v612 = vadd.f32 0.0, %v611
    %613 = vdwg.mxu0
    %v614 = vadd.f32 %v591, %v612
    %v615 = vxor.u32 %v614, 2147483648
    %v616 = vmul.f32 %v615, 1.442695
    %v617 = vpow.pop %v616
    %v618 = vadd.f32 %v617, 1.0
    %v619 = vrcp.pop %v618
    %v620 = vmul.f32 %v618, %v619
    %v621 = vsub.f32 1.0, %v620
    %v622 = vmul.f32 %v619, %v621
    %v623 = vadd.f32 %v619, %v622
    %vm624 = vweird.f32 %v618
    %vm625 = vweird.f32 %v619
    %vm626 = vmor %vm624, %vm625
    %v627 = vsel %vm626, %v619, %v623
    %v628 = vand.u32 2147483647, %v618
    %vm629 = vcmp.eq.f32.partialorder %v628, 8.507059e+37
    %v630 = vand.u32 %v618, 2147483648
    %v631 = vor.u32 1.1754944e-38, %v630
    %v632 = vsel %vm629, %v631, %v627
    %v633 = vmul.f32 1.0, %v632
    %v634 = vtanh.pop %v614
    %v635 = vmul.f32 %v633, %v575
    %637 = vrot.lane.b32.xlu0 %v634, 64
    %v638 = vpop.permute.xlu0 %637
    %v640 = vmul.f32 %v633, %v638
    %642 = vrot.lane.b32.xlu0 %v640, 32
    %v643 = vpop.permute.xlu0 %642
    %v645 = vadd.f32 %v635, %v643
    %v646 = vtanh.pop %v645
    %648 = vrot.lane.b32.xlu0 %v646, 64
    %v649 = vpop.permute.xlu0 %648
    %v651 = vmul.f32 %v633, %v649
    %653 = vrot.lane.b32.xlu0 %v651, 32
    %v654 = vpop.permute.xlu0 %653
    %656 = vst.msk [vmem:[#allocation3 + $0x1] sm:$0x1] %vm586, %v654
    %657 = vst.msk [vmem:[#allocation3 + $0x8] sm:$0x2] %vm588, %v654
    %s658 = scalar_lea.vmem [#allocation2], 4
    %v659 = vld [vmem:[%s658] sm:$0x3]
    %v660 = vsel %vm416, %v654, 0
    %662 = vmatpush.msra.mxu0 0.0
    %663 = vmatpush.msra.mxu0 0.0
    %664 = vmatpush.msra.mxu0 0.0
    %665 = vmatpush.msra.mxu0 0.0
    %666 = vmatpush.msra.mxu0 0.0
    %667 = vmatpush.msra.mxu0 0.0
    %668 = vmatpush.msra.mxu0 0.0
    %669 = vmatpush.msra.mxu0 0.0
    %670 = vmatpush.msra.mxu0 0.0
    %671 = vmatpush.msra.mxu0 0.0
    %672 = vmatpush.msra.mxu0 0.0
    %673 = vmatpush.msra.mxu0 0.0
    %674 = vmatpush.msra.mxu0 %v515
    %675 = vmatpush.msra.mxu0 %v514
    %676 = vmatpush.msra.mxu0 %v513
    %677 = vmatpush.msra.mxu0 %v512
    %678 = vmatmul.f32.gmra.mxu0 %v660
    %v679 = vpop.f32.mrf.mxu0
    %v680 = vadd.f32 0.0, %v679
    %681 = vdwg.mxu0
    %v682 = vadd.f32 %v659, %v680
    %v683 = vxor.u32 %v682, 2147483648
    %v684 = vmul.f32 %v683, 1.442695
    %v685 = vpow.pop %v684
    %v686 = vadd.f32 %v685, 1.0
    %v687 = vrcp.pop %v686
    %v688 = vmul.f32 %v686, %v687
    %v689 = vsub.f32 1.0, %v688
    %v690 = vmul.f32 %v687, %v689
    %v691 = vadd.f32 %v687, %v690
    %vm692 = vweird.f32 %v686
    %vm693 = vweird.f32 %v687
    %vm694 = vmor %vm692, %vm693
    %v695 = vsel %vm694, %v687, %v691
    %v696 = vand.u32 2147483647, %v686
    %vm697 = vcmp.eq.f32.partialorder %v696, 8.507059e+37
    %v698 = vand.u32 %v686, 2147483648
    %v699 = vor.u32 1.1754944e-38, %v698
    %v700 = vsel %vm697, %v699, %v695
    %v701 = vmul.f32 1.0, %v700
    %v702 = vtanh.pop %v682
    %v703 = vmul.f32 %v701, %v645
    %705 = vrot.lane.b32.xlu0 %v702, 64
    %v706 = vpop.permute.xlu0 %705
    %v708 = vmul.f32 %v701, %v706
    %710 = vrot.lane.b32.xlu0 %v708, 32
    %v711 = vpop.permute.xlu0 %710
    %v713 = vadd.f32 %v703, %v711
    %v714 = vtanh.pop %v713
    %716 = vrot.lane.b32.xlu0 %v714, 64
    %v717 = vpop.permute.xlu0 %716
    %v719 = vmul.f32 %v701, %v717
    %721 = vrot.lane.b32.xlu0 %v719, 32
    %v722 = vpop.permute.xlu0 %721
    %724 = vst.msk [vmem:[#allocation3 + $0x2] sm:$0x1] %vm586, %v722
    %725 = vst.msk [vmem:[#allocation3 + $0x9] sm:$0x2] %vm588, %v722
    %s726 = scalar_lea.vmem [#allocation2], 6
    %v727 = vld [vmem:[%s726] sm:$0x3]
    %v728 = vsel %vm416, %v722, 0
    %730 = vmatpush.msra.mxu0 0.0
    %731 = vmatpush.msra.mxu0 0.0
    %732 = vmatpush.msra.mxu0 0.0
    %733 = vmatpush.msra.mxu0 0.0
    %734 = vmatpush.msra.mxu0 0.0
    %735 = vmatpush.msra.mxu0 0.0
    %736 = vmatpush.msra.mxu0 0.0
    %737 = vmatpush.msra.mxu0 0.0
    %738 = vmatpush.msra.mxu0 0.0
    %739 = vmatpush.msra.mxu0 0.0
    %740 = vmatpush.msra.mxu0 0.0
    %741 = vmatpush.msra.mxu0 0.0
    %742 = vmatpush.msra.mxu0 %v515
    %743 = vmatpush.msra.mxu0 %v514
    %744 = vmatpush.msra.mxu0 %v513
    %745 = vmatpush.msra.mxu0 %v512
    %746 = vmatmul.f32.gmra.mxu0 %v728
    %v747 = vpop.f32.mrf.mxu0
    %v748 = vadd.f32 0.0, %v747
    %749 = vdwg.mxu0
    %v750 = vadd.f32 %v727, %v748
    %v751 = vxor.u32 %v750, 2147483648
    %v752 = vmul.f32 %v751, 1.442695
    %v753 = vpow.pop %v752
    %v754 = vadd.f32 %v753, 1.0
    %v755 = vrcp.pop %v754
    %v756 = vmul.f32 %v754, %v755
    %v757 = vsub.f32 1.0, %v756
    %v758 = vmul.f32 %v755, %v757
    %v759 = vadd.f32 %v755, %v758
    %vm760 = vweird.f32 %v754
    %vm761 = vweird.f32 %v755
    %vm762 = vmor %vm760, %vm761
    %v763 = vsel %vm762, %v755, %v759
    %v764 = vand.u32 2147483647, %v754
    %vm765 = vcmp.eq.f32.partialorder %v764, 8.507059e+37
    %v766 = vand.u32 %v754, 2147483648
    %v767 = vor.u32 1.1754944e-38, %v766
    %v768 = vsel %vm765, %v767, %v763
    %v769 = vmul.f32 1.0, %v768
    %v770 = vtanh.pop %v750
    %v771 = vmul.f32 %v769, %v713
    %773 = vrot.lane.b32.xlu0 %v770, 64
    %v774 = vpop.permute.xlu0 %773
    %v776 = vmul.f32 %v769, %v774
    %778 = vrot.lane.b32.xlu0 %v776, 32
    %v779 = vpop.permute.xlu0 %778
    %v781 = vadd.f32 %v771, %v779
    %v782 = vtanh.pop %v781
    %784 = vrot.lane.b32.xlu0 %v782, 64
    %v785 = vpop.permute.xlu0 %784
    %v787 = vmul.f32 %v769, %v785
    %789 = vrot.lane.b32.xlu0 %v787, 32
    %v790 = vpop.permute.xlu0 %789
    %792 = vst.msk [vmem:[#allocation3 + $0x3] sm:$0x1] %vm586, %v790
    %793 = vst.msk [vmem:[#allocation3 + $0xa] sm:$0x2] %vm588, %v790
    %s794 = scalar_lea.vmem [#allocation2], 8
    %v795 = vld [vmem:[%s794] sm:$0x3]
    %v796 = vsel %vm416, %v790, 0
    %798 = vmatpush.msra.mxu0 0.0
    %799 = vmatpush.msra.mxu0 0.0
    %800 = vmatpush.msra.mxu0 0.0
    %801 = vmatpush.msra.mxu0 0.0
    %802 = vmatpush.msra.mxu0 0.0
    %803 = vmatpush.msra.mxu0 0.0
    %804 = vmatpush.msra.mxu0 0.0
    %805 = vmatpush.msra.mxu0 0.0
    %806 = vmatpush.msra.mxu0 0.0
    %807 = vmatpush.msra.mxu0 0.0
    %808 = vmatpush.msra.mxu0 0.0
    %809 = vmatpush.msra.mxu0 0.0
    %810 = vmatpush.msra.mxu0 %v515
    %811 = vmatpush.msra.mxu0 %v514
    %812 = vmatpush.msra.mxu0 %v513
    %813 = vmatpush.msra.mxu0 %v512
    %814 = vmatmul.f32.gmra.mxu0 %v796
    %v815 = vpop.f32.mrf.mxu0
    %v816 = vadd.f32 0.0, %v815
    %817 = vdwg.mxu0
    %v818 = vadd.f32 %v795, %v816
    %v819 = vxor.u32 %v818, 2147483648
    %v820 = vmul.f32 %v819, 1.442695
    %v821 = vpow.pop %v820
    %v822 = vadd.f32 %v821, 1.0
    %v823 = vrcp.pop %v822
    %v824 = vmul.f32 %v822, %v823
    %v825 = vsub.f32 1.0, %v824
    %v826 = vmul.f32 %v823, %v825
    %v827 = vadd.f32 %v823, %v826
    %vm828 = vweird.f32 %v822
    %vm829 = vweird.f32 %v823
    %vm830 = vmor %vm828, %vm829
    %v831 = vsel %vm830, %v823, %v827
    %v832 = vand.u32 2147483647, %v822
    %vm833 = vcmp.eq.f32.partialorder %v832, 8.507059e+37
    %v834 = vand.u32 %v822, 2147483648
    %v835 = vor.u32 1.1754944e-38, %v834
    %v836 = vsel %vm833, %v835, %v831
    %v837 = vmul.f32 1.0, %v836
    %v838 = vtanh.pop %v818
    %v839 = vmul.f32 %v837, %v781
    %841 = vrot.lane.b32.xlu0 %v838, 64
    %v842 = vpop.permute.xlu0 %841
    %v844 = vmul.f32 %v837, %v842
    %846 = vrot.lane.b32.xlu0 %v844, 32
    %v847 = vpop.permute.xlu0 %846
    %v849 = vadd.f32 %v839, %v847
    %v850 = vtanh.pop %v849
    %852 = vrot.lane.b32.xlu0 %v850, 64
    %v853 = vpop.permute.xlu0 %852
    %v855 = vmul.f32 %v837, %v853
    %857 = vrot.lane.b32.xlu0 %v855, 32
    %v858 = vpop.permute.xlu0 %857
    %860 = vst.msk [vmem:[#allocation3 + $0x4] sm:$0x1] %vm586, %v858
    %861 = vst.msk [vmem:[#allocation3 + $0xb] sm:$0x2] %vm588, %v858
    %s862 = scalar_lea.vmem [#allocation2], 10
    %v863 = vld [vmem:[%s862] sm:$0x3]
    %v864 = vsel %vm416, %v858, 0
    %866 = vmatpush.msra.mxu0 0.0
    %867 = vmatpush.msra.mxu0 0.0
    %868 = vmatpush.msra.mxu0 0.0
    %869 = vmatpush.msra.mxu0 0.0
    %870 = vmatpush.msra.mxu0 0.0
    %871 = vmatpush.msra.mxu0 0.0
    %872 = vmatpush.msra.mxu0 0.0
    %873 = vmatpush.msra.mxu0 0.0
    %874 = vmatpush.msra.mxu0 0.0
    %875 = vmatpush.msra.mxu0 0.0
    %876 = vmatpush.msra.mxu0 0.0
    %877 = vmatpush.msra.mxu0 0.0
    %878 = vmatpush.msra.mxu0 %v515
    %879 = vmatpush.msra.mxu0 %v514
    %880 = vmatpush.msra.mxu0 %v513
    %881 = vmatpush.msra.mxu0 %v512
    %882 = vmatmul.f32.gmra.mxu0 %v864
    %v883 = vpop.f32.mrf.mxu0
    %v884 = vadd.f32 0.0, %v883
    %885 = vdwg.mxu0
    %v886 = vadd.f32 %v863, %v884
    %v887 = vxor.u32 %v886, 2147483648
    %v888 = vmul.f32 %v887, 1.442695
    %v889 = vpow.pop %v888
    %v890 = vadd.f32 %v889, 1.0
    %v891 = vrcp.pop %v890
    %v892 = vmul.f32 %v890, %v891
    %v893 = vsub.f32 1.0, %v892
    %v894 = vmul.f32 %v891, %v893
    %v895 = vadd.f32 %v891, %v894
    %vm896 = vweird.f32 %v890
    %vm897 = vweird.f32 %v891
    %vm898 = vmor %vm896, %vm897
    %v899 = vsel %vm898, %v891, %v895
    %v900 = vand.u32 2147483647, %v890
    %vm901 = vcmp.eq.f32.partialorder %v900, 8.507059e+37
    %v902 = vand.u32 %v890, 2147483648
    %v903 = vor.u32 1.1754944e-38, %v902
    %v904 = vsel %vm901, %v903, %v899
    %v905 = vmul.f32 1.0, %v904
    %v906 = vtanh.pop %v886
    %v907 = vmul.f32 %v905, %v849
    %909 = vrot.lane.b32.xlu0 %v906, 64
    %v910 = vpop.permute.xlu0 %909
    %v912 = vmul.f32 %v905, %v910
    %914 = vrot.lane.b32.xlu0 %v912, 32
    %v915 = vpop.permute.xlu0 %914
    %v917 = vadd.f32 %v907, %v915
    %v918 = vtanh.pop %v917
    %920 = vrot.lane.b32.xlu0 %v918, 64
    %v921 = vpop.permute.xlu0 %920
    %v923 = vmul.f32 %v905, %v921
    %925 = vrot.lane.b32.xlu0 %v923, 32
    %v926 = vpop.permute.xlu0 %925
    %928 = vst.msk [vmem:[#allocation3 + $0x5] sm:$0x1] %vm586, %v926
    %929 = vst.msk [vmem:[#allocation3 + $0xc] sm:$0x2] %vm588, %v926
    %s930 = scalar_lea.vmem [#allocation2], 12
    %v931 = vld [vmem:[%s930] sm:$0x3]
    %v932 = vsel %vm416, %v926, 0
    %934 = vmatpush.msra.mxu0 0.0
    %935 = vmatpush.msra.mxu0 0.0
    %936 = vmatpush.msra.mxu0 0.0
    %937 = vmatpush.msra.mxu0 0.0
    %938 = vmatpush.msra.mxu0 0.0
    %939 = vmatpush.msra.mxu0 0.0
    %940 = vmatpush.msra.mxu0 0.0
    %941 = vmatpush.msra.mxu0 0.0
    %942 = vmatpush.msra.mxu0 0.0
    %943 = vmatpush.msra.mxu0 0.0
    %944 = vmatpush.msra.mxu0 0.0
    %945 = vmatpush.msra.mxu0 0.0
    %946 = vmatpush.msra.mxu0 %v515
    %947 = vmatpush.msra.mxu0 %v514
    %948 = vmatpush.msra.mxu0 %v513
    %949 = vmatpush.msra.mxu0 %v512
    %950 = vmatmul.f32.gmra.mxu0 %v932
    %v951 = vpop.f32.mrf.mxu0
    %v952 = vadd.f32 0.0, %v951
    %953 = vdwg.mxu0
    %v954 = vadd.f32 %v931, %v952
    %v955 = vxor.u32 %v954, 2147483648
    %v956 = vmul.f32 %v955, 1.442695
    %v957 = vpow.pop %v956
    %v958 = vadd.f32 %v957, 1.0
    %v959 = vrcp.pop %v958
    %v960 = vmul.f32 %v958, %v959
    %v961 = vsub.f32 1.0, %v960
    %v962 = vmul.f32 %v959, %v961
    %v963 = vadd.f32 %v959, %v962
    %vm964 = vweird.f32 %v958
    %vm965 = vweird.f32 %v959
    %vm966 = vmor %vm964, %vm965
    %v967 = vsel %vm966, %v959, %v963
    %v968 = vand.u32 2147483647, %v958
    %vm969 = vcmp.eq.f32.partialorder %v968, 8.507059e+37
    %v970 = vand.u32 %v958, 2147483648
    %v971 = vor.u32 1.1754944e-38, %v970
    %v972 = vsel %vm969, %v971, %v967
    %v973 = vmul.f32 1.0, %v972
    %v974 = vtanh.pop %v954
    %v975 = vmul.f32 %v973, %v917
    %977 = vrot.lane.b32.xlu0 %v974, 64
    %v978 = vpop.permute.xlu0 %977
    %v980 = vmul.f32 %v973, %v978
    %982 = vrot.lane.b32.xlu0 %v980, 32
    %v983 = vpop.permute.xlu0 %982
    %v985 = vadd.f32 %v975, %v983
    %v986 = vtanh.pop %v985
    %988 = vrot.lane.b32.xlu0 %v986, 64
    %v989 = vpop.permute.xlu0 %988
    %v991 = vmul.f32 %v973, %v989
    %993 = vrot.lane.b32.xlu0 %v991, 32
    %v994 = vpop.permute.xlu0 %993
    %996 = vst.msk [vmem:[#allocation3 + $0x6] sm:$0x1] %vm586, %v994
    %997 = vst.msk [vmem:[#allocation3 + $0xd] sm:$0x2] %vm588, %v994
    %s998 = scalar_lea.vmem [#allocation2], 14
    %v999 = vld [vmem:[%s998] sm:$0x3]
    %v1000 = vsel %vm416, %v994, 0
    %1002 = vmatpush.msra.mxu0 0.0
    %1003 = vmatpush.msra.mxu0 0.0
    %1004 = vmatpush.msra.mxu0 0.0
    %1005 = vmatpush.msra.mxu0 0.0
    %1006 = vmatpush.msra.mxu0 0.0
    %1007 = vmatpush.msra.mxu0 0.0
    %1008 = vmatpush.msra.mxu0 0.0
    %1009 = vmatpush.msra.mxu0 0.0
    %1010 = vmatpush.msra.mxu0 0.0
    %1011 = vmatpush.msra.mxu0 0.0
    %1012 = vmatpush.msra.mxu0 0.0
    %1013 = vmatpush.msra.mxu0 0.0
    %1014 = vmatpush.msra.mxu0 %v515
    %1015 = vmatpush.msra.mxu0 %v514
    %1016 = vmatpush.msra.mxu0 %v513
    %1017 = vmatpush.msra.mxu0 %v512
    %1018 = vmatmul.f32.gmra.mxu0 %v1000
    %v1019 = vpop.f32.mrf.mxu0
    %v1020 = vadd.f32 0.0, %v1019
    %1021 = vdwg.mxu0
    %v1022 = vadd.f32 %v999, %v1020
    %v1023 = vxor.u32 %v1022, 2147483648
    %v1024 = vmul.f32 %v1023, 1.442695
    %v1025 = vpow.pop %v1024
    %v1026 = vadd.f32 %v1025, 1.0
    %v1027 = vrcp.pop %v1026
    %v1028 = vmul.f32 %v1026, %v1027
    %v1029 = vsub.f32 1.0, %v1028
    %v1030 = vmul.f32 %v1027, %v1029
    %v1031 = vadd.f32 %v1027, %v1030
    %vm1032 = vweird.f32 %v1026
    %vm1033 = vweird.f32 %v1027
    %vm1034 = vmor %vm1032, %vm1033
    %v1035 = vsel %vm1034, %v1027, %v1031
    %v1036 = vand.u32 2147483647, %v1026
    %vm1037 = vcmp.eq.f32.partialorder %v1036, 8.507059e+37
    %v1038 = vand.u32 %v1026, 2147483648
    %v1039 = vor.u32 1.1754944e-38, %v1038
    %v1040 = vsel %vm1037, %v1039, %v1035
    %v1041 = vmul.f32 1.0, %v1040
    %v1042 = vtanh.pop %v1022
    %v1043 = vmul.f32 %v1041, %v985
    %1045 = vrot.lane.b32.xlu0 %v1042, 64
    %v1046 = vpop.permute.xlu0 %1045
    %v1048 = vmul.f32 %v1041, %v1046
    %1050 = vrot.lane.b32.xlu0 %v1048, 32
    %v1051 = vpop.permute.xlu0 %1050
    %v1053 = vadd.f32 %v1043, %v1051
    %v1054 = vtanh.pop %v1053
    %1056 = vrot.lane.b32.xlu0 %v1054, 64
    %v1057 = vpop.permute.xlu0 %1056
    %v1059 = vmul.f32 %v1041, %v1057
    %1061 = vrot.lane.b32.xlu0 %v1059, 32
    %v1062 = vpop.permute.xlu0 %1061
    %1064 = vst.msk [vmem:[#allocation3 + $0x7] sm:$0x1] %vm586, %v1062
    %1065 = vst.msk [vmem:[#allocation3 + $0xe] sm:$0x2] %vm588, %v1062
    %v1066 = vld [vmem:[#allocation3] sm:$0xff]
    %v1067 = vld [vmem:[#allocation3 + $0x8] sm:$0xff]
    %v1068 = vld [vmem:[#allocation18] sm:$0xff]
    %v1069 = vld [vmem:[#allocation18 + $0x8] sm:$0xff]
    %v1070 = vld [vmem:[#allocation18 + $0x10] sm:$0xff]
    %v1071 = vld [vmem:[#allocation18 + $0x18] sm:$0xff]
    %v1072 = vld [vmem:[%s19] sm:$0x1]
    %v1074 = vperm.slane %v1072, 0
    %v1077 = vsel %vm416, %v1066, 0
    %v1080 = vsel %vm416, %v1067, 0
    %1082 = vmatpush.msra.mxu0 0.0
    %1083 = vmatpush.msra.mxu0 0.0
    %1084 = vmatpush.msra.mxu0 0.0
    %1085 = vmatpush.msra.mxu0 0.0
    %1086 = vmatpush.msra.mxu0 0.0
    %1087 = vmatpush.msra.mxu0 0.0
    %1088 = vmatpush.msra.mxu0 0.0
    %1089 = vmatpush.msra.mxu0 0.0
    %1090 = vmatpush.msra.mxu0 0.0
    %1091 = vmatpush.msra.mxu0 0.0
    %1092 = vmatpush.msra.mxu0 0.0
    %1093 = vmatpush.msra.mxu0 0.0
    %1094 = vmatpush.msra.mxu0 %v1071
    %1095 = vmatpush.msra.mxu0 %v1070
    %1096 = vmatpush.msra.mxu0 %v1069
    %1097 = vmatpush.msra.mxu0 %v1068
    %1098 = vmatmul.f32.gmra.mxu0 %v1077
    %v1099 = vpop.f32.mrf.mxu0
    %v1100 = vadd.f32 %v1074, %v1099
    %1101 = vmatmul.f32.gmra.mxu0 %v1080
    %v1102 = vpop.f32.mrf.mxu0
    %v1103 = vadd.f32 %v1074, %v1102
    %1104 = vdwg.mxu0
    %v1105 = vld [vmem:[#allocation20] sm:$0xf]
    %v1106 = vld [vmem:[#allocation20 + $0x4] sm:$0xf]
    %v1107 = vld [vmem:[#allocation20 + $0x8] sm:$0xf]
    %v1108 = vld [vmem:[#allocation20 + $0xc] sm:$0xf]
    %v1109 = vld [vmem:[#allocation20 + $0x10] sm:$0xf]
    %v1110 = vld [vmem:[#allocation20 + $0x14] sm:$0xf]
    %v1111 = vld [vmem:[#allocation20 + $0x18] sm:$0xf]
    %v1112 = vld [vmem:[#allocation20 + $0x1c] sm:$0xf]
    %v1113 = vld [vmem:[%s21] sm:$0x1]
    %v1114 = vld [vmem:[%s22] sm:$0x1]
    %v1115 = vld [vmem:[%s23] sm:$0x1]
    %v1116 = vlaneseq
    %v1117 = vand.u32 %v1116, 127
    %v1118 = vlaneseq
    %v1119 = vshrl.u32 %v1118, 7
    %s1120 = sld [smem:[#allocation5]]
    %1122 = vrot.lane.b32.xlu0 %v1100, 124
    %v1123 = vpop.permute.xlu0 %1122
    %1124 = vrot.lane.b32.xlu0 %v1100, 120
    %v1125 = vpop.permute.xlu0 %1124
    %1126 = vrot.lane.b32.xlu0 %v1100, 116
    %v1127 = vpop.permute.xlu0 %1126
    %1128 = vrot.lane.b32.xlu0 %v1100, 112
    %v1129 = vpop.permute.xlu0 %1128
    %1130 = vrot.lane.b32.xlu0 %v1100, 108
    %v1131 = vpop.permute.xlu0 %1130
    %1132 = vrot.lane.b32.xlu0 %v1100, 104
    %v1133 = vpop.permute.xlu0 %1132
    %1134 = vrot.lane.b32.xlu0 %v1100, 100
    %v1135 = vpop.permute.xlu0 %1134
    %1136 = vrot.lane.b32.xlu0 %v1100, 96
    %v1137 = vpop.permute.xlu0 %1136
    %vm1138 = vcmask 31744
    %v1139 = vsel %vm1138, %v1100, 0
    %v1141 = vsel %vm1138, %v1137, 0
    %1143 = vmatpush.xpose.msra.mxu0 0.0
    %1144 = vmatpush.xpose.msra.mxu0 0.0
    %1145 = vmatpush.xpose.msra.mxu0 0.0
    %1146 = vmatpush.xpose.msra.mxu0 0.0
    %1147 = vmatpush.xpose.msra.mxu0 0.0
    %1148 = vmatpush.xpose.msra.mxu0 0.0
    %1149 = vmatpush.xpose.msra.mxu0 0.0
    %1150 = vmatpush.xpose.msra.mxu0 0.0
    %1151 = vmatpush.xpose.msra.mxu0 0.0
    %1152 = vmatpush.xpose.msra.mxu0 0.0
    %1153 = vmatpush.xpose.msra.mxu0 0.0
    %1154 = vmatpush.xpose.msra.mxu0 0.0
    %1155 = vmatpush.xpose.msra.mxu0 0.0
    %1156 = vmatpush.xpose.msra.mxu0 0.0
    %1157 = vmatpush.xpose.msra.mxu0 0.0
    %1158 = vmatpush.xpose.msra.mxu0 %v1141
    %1159 = vmatmul.f32.gmra.mxu0 %v1139
    %v1160 = vpop.f32.mrf.mxu0
    %v1161 = vadd.f32 0.0, %v1160
    %1162 = vdwg.mxu0
    %1163 = vrot.lane.b32.xlu0 %v1123, 96
    %v1164 = vpop.permute.xlu0 %1163
    %v1165 = vsel %vm1138, %v1123, 0
    %v1167 = vsel %vm1138, %v1164, 0
    %1169 = vmatpush.xpose.msra.mxu0 0.0
    %1170 = vmatpush.xpose.msra.mxu0 0.0
    %1171 = vmatpush.xpose.msra.mxu0 0.0
    %1172 = vmatpush.xpose.msra.mxu0 0.0
    %1173 = vmatpush.xpose.msra.mxu0 0.0
    %1174 = vmatpush.xpose.msra.mxu0 0.0
    %1175 = vmatpush.xpose.msra.mxu0 0.0
    %1176 = vmatpush.xpose.msra.mxu0 0.0
    %1177 = vmatpush.xpose.msra.mxu0 0.0
    %1178 = vmatpush.xpose.msra.mxu0 0.0
    %1179 = vmatpush.xpose.msra.mxu0 0.0
    %1180 = vmatpush.xpose.msra.mxu0 0.0
    %1181 = vmatpush.xpose.msra.mxu0 0.0
    %1182 = vmatpush.xpose.msra.mxu0 0.0
    %1183 = vmatpush.xpose.msra.mxu0 0.0
    %1184 = vmatpush.xpose.msra.mxu0 %v1167
    %1185 = vmatmul.f32.gmra.mxu0 %v1165
    %v1186 = vpop.f32.mrf.mxu0
    %v1187 = vadd.f32 0.0, %v1186
    %1188 = vdwg.mxu0
    %1189 = vrot.lane.b32.xlu0 %v1125, 96
    %v1190 = vpop.permute.xlu0 %1189
    %v1191 = vsel %vm1138, %v1125, 0
    %v1193 = vsel %vm1138, %v1190, 0
    %1195 = vmatpush.xpose.msra.mxu0 0.0
    %1196 = vmatpush.xpose.msra.mxu0 0.0
    %1197 = vmatpush.xpose.msra.mxu0 0.0
    %1198 = vmatpush.xpose.msra.mxu0 0.0
    %1199 = vmatpush.xpose.msra.mxu0 0.0
    %1200 = vmatpush.xpose.msra.mxu0 0.0
    %1201 = vmatpush.xpose.msra.mxu0 0.0
    %1202 = vmatpush.xpose.msra.mxu0 0.0
    %1203 = vmatpush.xpose.msra.mxu0 0.0
    %1204 = vmatpush.xpose.msra.mxu0 0.0
    %1205 = vmatpush.xpose.msra.mxu0 0.0
    %1206 = vmatpush.xpose.msra.mxu0 0.0
    %1207 = vmatpush.xpose.msra.mxu0 0.0
    %1208 = vmatpush.xpose.msra.mxu0 0.0
    %1209 = vmatpush.xpose.msra.mxu0 0.0
    %1210 = vmatpush.xpose.msra.mxu0 %v1193
    %1211 = vmatmul.f32.gmra.mxu0 %v1191
    %v1212 = vpop.f32.mrf.mxu0
    %v1213 = vadd.f32 0.0, %v1212
    %1214 = vdwg.mxu0
    %1215 = vrot.lane.b32.xlu0 %v1127, 96
    %v1216 = vpop.permute.xlu0 %1215
    %v1217 = vsel %vm1138, %v1127, 0
    %v1219 = vsel %vm1138, %v1216, 0
    %1221 = vmatpush.xpose.msra.mxu0 0.0
    %1222 = vmatpush.xpose.msra.mxu0 0.0
    %1223 = vmatpush.xpose.msra.mxu0 0.0
    %1224 = vmatpush.xpose.msra.mxu0 0.0
    %1225 = vmatpush.xpose.msra.mxu0 0.0
    %1226 = vmatpush.xpose.msra.mxu0 0.0
    %1227 = vmatpush.xpose.msra.mxu0 0.0
    %1228 = vmatpush.xpose.msra.mxu0 0.0
    %1229 = vmatpush.xpose.msra.mxu0 0.0
    %1230 = vmatpush.xpose.msra.mxu0 0.0
    %1231 = vmatpush.xpose.msra.mxu0 0.0
    %1232 = vmatpush.xpose.msra.mxu0 0.0
    %1233 = vmatpush.xpose.msra.mxu0 0.0
    %1234 = vmatpush.xpose.msra.mxu0 0.0
    %1235 = vmatpush.xpose.msra.mxu0 0.0
    %1236 = vmatpush.xpose.msra.mxu0 %v1219
    %1237 = vmatmul.f32.gmra.mxu0 %v1217
    %v1238 = vpop.f32.mrf.mxu0
    %v1239 = vadd.f32 0.0, %v1238
    %1240 = vdwg.mxu0
    %1241 = vrot.lane.b32.xlu0 %v1129, 96
    %v1242 = vpop.permute.xlu0 %1241
    %v1243 = vsel %vm1138, %v1129, 0
    %v1245 = vsel %vm1138, %v1242, 0
    %1247 = vmatpush.xpose.msra.mxu0 0.0
    %1248 = vmatpush.xpose.msra.mxu0 0.0
    %1249 = vmatpush.xpose.msra.mxu0 0.0
    %1250 = vmatpush.xpose.msra.mxu0 0.0
    %1251 = vmatpush.xpose.msra.mxu0 0.0
    %1252 = vmatpush.xpose.msra.mxu0 0.0
    %1253 = vmatpush.xpose.msra.mxu0 0.0
    %1254 = vmatpush.xpose.msra.mxu0 0.0
    %1255 = vmatpush.xpose.msra.mxu0 0.0
    %1256 = vmatpush.xpose.msra.mxu0 0.0
    %1257 = vmatpush.xpose.msra.mxu0 0.0
    %1258 = vmatpush.xpose.msra.mxu0 0.0
    %1259 = vmatpush.xpose.msra.mxu0 0.0
    %1260 = vmatpush.xpose.msra.mxu0 0.0
    %1261 = vmatpush.xpose.msra.mxu0 0.0
    %1262 = vmatpush.xpose.msra.mxu0 %v1245
    %1263 = vmatmul.f32.gmra.mxu0 %v1243
    %v1264 = vpop.f32.mrf.mxu0
    %v1265 = vadd.f32 0.0, %v1264
    %1266 = vdwg.mxu0
    %1267 = vrot.lane.b32.xlu0 %v1131, 96
    %v1268 = vpop.permute.xlu0 %1267
    %v1269 = vsel %vm1138, %v1131, 0
    %v1271 = vsel %vm1138, %v1268, 0
    %1273 = vmatpush.xpose.msra.mxu0 0.0
    %1274 = vmatpush.xpose.msra.mxu0 0.0
    %1275 = vmatpush.xpose.msra.mxu0 0.0
    %1276 = vmatpush.xpose.msra.mxu0 0.0
    %1277 = vmatpush.xpose.msra.mxu0 0.0
    %1278 = vmatpush.xpose.msra.mxu0 0.0
    %1279 = vmatpush.xpose.msra.mxu0 0.0
    %1280 = vmatpush.xpose.msra.mxu0 0.0
    %1281 = vmatpush.xpose.msra.mxu0 0.0
    %1282 = vmatpush.xpose.msra.mxu0 0.0
    %1283 = vmatpush.xpose.msra.mxu0 0.0
    %1284 = vmatpush.xpose.msra.mxu0 0.0
    %1285 = vmatpush.xpose.msra.mxu0 0.0
    %1286 = vmatpush.xpose.msra.mxu0 0.0
    %1287 = vmatpush.xpose.msra.mxu0 0.0
    %1288 = vmatpush.xpose.msra.mxu0 %v1271
    %1289 = vmatmul.f32.gmra.mxu0 %v1269
    %v1290 = vpop.f32.mrf.mxu0
    %v1291 = vadd.f32 0.0, %v1290
    %1292 = vdwg.mxu0
    %1293 = vrot.lane.b32.xlu0 %v1133, 96
    %v1294 = vpop.permute.xlu0 %1293
    %v1295 = vsel %vm1138, %v1133, 0
    %v1297 = vsel %vm1138, %v1294, 0
    %1299 = vmatpush.xpose.msra.mxu0 0.0
    %1300 = vmatpush.xpose.msra.mxu0 0.0
    %1301 = vmatpush.xpose.msra.mxu0 0.0
    %1302 = vmatpush.xpose.msra.mxu0 0.0
    %1303 = vmatpush.xpose.msra.mxu0 0.0
    %1304 = vmatpush.xpose.msra.mxu0 0.0
    %1305 = vmatpush.xpose.msra.mxu0 0.0
    %1306 = vmatpush.xpose.msra.mxu0 0.0
    %1307 = vmatpush.xpose.msra.mxu0 0.0
    %1308 = vmatpush.xpose.msra.mxu0 0.0
    %1309 = vmatpush.xpose.msra.mxu0 0.0
    %1310 = vmatpush.xpose.msra.mxu0 0.0
    %1311 = vmatpush.xpose.msra.mxu0 0.0
    %1312 = vmatpush.xpose.msra.mxu0 0.0
    %1313 = vmatpush.xpose.msra.mxu0 0.0
    %1314 = vmatpush.xpose.msra.mxu0 %v1297
    %1315 = vmatmul.f32.gmra.mxu0 %v1295
    %v1316 = vpop.f32.mrf.mxu0
    %v1317 = vadd.f32 0.0, %v1316
    %1318 = vdwg.mxu0
    %1319 = vrot.lane.b32.xlu0 %v1135, 96
    %v1320 = vpop.permute.xlu0 %1319
    %v1321 = vsel %vm1138, %v1135, 0
    %v1323 = vsel %vm1138, %v1320, 0
    %1325 = vmatpush.xpose.msra.mxu0 0.0
    %1326 = vmatpush.xpose.msra.mxu0 0.0
    %1327 = vmatpush.xpose.msra.mxu0 0.0
    %1328 = vmatpush.xpose.msra.mxu0 0.0
    %1329 = vmatpush.xpose.msra.mxu0 0.0
    %1330 = vmatpush.xpose.msra.mxu0 0.0
    %1331 = vmatpush.xpose.msra.mxu0 0.0
    %1332 = vmatpush.xpose.msra.mxu0 0.0
    %1333 = vmatpush.xpose.msra.mxu0 0.0
    %1334 = vmatpush.xpose.msra.mxu0 0.0
    %1335 = vmatpush.xpose.msra.mxu0 0.0
    %1336 = vmatpush.xpose.msra.mxu0 0.0
    %1337 = vmatpush.xpose.msra.mxu0 0.0
    %1338 = vmatpush.xpose.msra.mxu0 0.0
    %1339 = vmatpush.xpose.msra.mxu0 0.0
    %1340 = vmatpush.xpose.msra.mxu0 %v1323
    %1341 = vmatmul.f32.gmra.mxu0 %v1321
    %v1342 = vpop.f32.mrf.mxu0
    %v1343 = vadd.f32 0.0, %v1342
    %1344 = vdwg.mxu0
    %v1345 = vmul.f32 %v1161, 0.5
    %v1346 = vmul.f32 %v1187, 0.5
    %v1347 = vmul.f32 %v1213, 0.5
    %v1348 = vmul.f32 %v1239, 0.5
    %v1349 = vmul.f32 %v1265, 0.5
    %v1350 = vmul.f32 %v1291, 0.5
    %v1351 = vmul.f32 %v1317, 0.5
    %v1352 = vmul.f32 %v1343, 0.5
    %v1353 = vstv %s1120
    %vm1354 = vcmp.lt.s32.totalorder %v1117, %v1353
    %v1355 = vsel %vm1354, 0.0, -1e+09
    %v1356 = vadd.f32 %v1345, %v1355
    %v1357 = vadd.f32 %v1346, %v1355
    %v1358 = vadd.f32 %v1347, %v1355
    %v1359 = vadd.f32 %v1348, %v1355
    %v1360 = vadd.f32 %v1349, %v1355
    %v1361 = vadd.f32 %v1350, %v1355
    %v1362 = vadd.f32 %v1351, %v1355
    %v1363 = vadd.f32 %v1352, %v1355
    %vm1364 = vcmask 64512
    %v1365 = vsel %vm1364, %v1356, -inf
    %1366 = vmax.xlane.f32.xlu0 %v1365
    %v1367 = vpop.xlane.xlu0 %1366
    %v1368 = vsel %vm1364, %v1357, -inf
    %1369 = vmax.xlane.f32.xlu0 %v1368
    %v1370 = vpop.xlane.xlu0 %1369
    %v1371 = vsel %vm1364, %v1358, -inf
    %1372 = vmax.xlane.f32.xlu0 %v1371
    %v1373 = vpop.xlane.xlu0 %1372
    %v1374 = vsel %vm1364, %v1359, -inf
    %1375 = vmax.xlane.f32.xlu0 %v1374
    %v1376 = vpop.xlane.xlu0 %1375
    %v1377 = vsel %vm1364, %v1360, -inf
    %1378 = vmax.xlane.f32.xlu0 %v1377
    %v1379 = vpop.xlane.xlu0 %1378
    %v1380 = vsel %vm1364, %v1361, -inf
    %1381 = vmax.xlane.f32.xlu0 %v1380
    %v1382 = vpop.xlane.xlu0 %1381
    %v1383 = vsel %vm1364, %v1362, -inf
    %1384 = vmax.xlane.f32.xlu0 %v1383
    %v1385 = vpop.xlane.xlu0 %1384
    %v1386 = vsel %vm1364, %v1363, -inf
    %1387 = vmax.xlane.f32.xlu0 %v1386
    %v1388 = vpop.xlane.xlu0 %1387
    %v1389 = vsub.f32 %v1356, %v1367
    %v1390 = vsub.f32 %v1357, %v1370
    %v1391 = vsub.f32 %v1358, %v1373
    %v1392 = vsub.f32 %v1359, %v1376
    %v1393 = vsub.f32 %v1360, %v1379
    %v1394 = vsub.f32 %v1361, %v1382
    %v1395 = vsub.f32 %v1362, %v1385
    %v1396 = vsub.f32 %v1363, %v1388
    %v1397 = vmul.f32 %v1389, 1.442695
    %v1398 = vpow.pop %v1397
    %v1399 = vmul.f32 %v1390, 1.442695
    %v1400 = vpow.pop %v1399
    %v1401 = vmul.f32 %v1391, 1.442695
    %v1402 = vpow.pop %v1401
    %v1403 = vmul.f32 %v1392, 1.442695
    %v1404 = vpow.pop %v1403
    %v1405 = vmul.f32 %v1393, 1.442695
    %v1406 = vpow.pop %v1405
    %v1407 = vmul.f32 %v1394, 1.442695
    %v1408 = vpow.pop %v1407
    %v1409 = vmul.f32 %v1395, 1.442695
    %v1410 = vpow.pop %v1409
    %v1411 = vmul.f32 %v1396, 1.442695
    %v1412 = vpow.pop %v1411
    %v1413 = vsel %vm1364, %v1398, 0.0
    %1414 = vadd.xlane.f32.xlu0 %v1413
    %v1415 = vpop.xlane.xlu0 %1414
    %v1416 = vsel %vm1364, %v1400, 0.0
    %1417 = vadd.xlane.f32.xlu0 %v1416
    %v1418 = vpop.xlane.xlu0 %1417
    %v1419 = vsel %vm1364, %v1402, 0.0
    %1420 = vadd.xlane.f32.xlu0 %v1419
    %v1421 = vpop.xlane.xlu0 %1420
    %v1422 = vsel %vm1364, %v1404, 0.0
    %1423 = vadd.xlane.f32.xlu0 %v1422
    %v1424 = vpop.xlane.xlu0 %1423
    %v1425 = vsel %vm1364, %v1406, 0.0
    %1426 = vadd.xlane.f32.xlu0 %v1425
    %v1427 = vpop.xlane.xlu0 %1426
    %v1428 = vsel %vm1364, %v1408, 0.0
    %1429 = vadd.xlane.f32.xlu0 %v1428
    %v1430 = vpop.xlane.xlu0 %1429
    %v1431 = vsel %vm1364, %v1410, 0.0
    %1432 = vadd.xlane.f32.xlu0 %v1431
    %v1433 = vpop.xlane.xlu0 %1432
    %v1434 = vsel %vm1364, %v1412, 0.0
    %1435 = vadd.xlane.f32.xlu0 %v1434
    %v1436 = vpop.xlane.xlu0 %1435
    %v1437 = vrcp.pop %v1415
    %v1438 = vmul.f32 %v1415, %v1437
    %v1439 = vsub.f32 1.0, %v1438
    %v1440 = vmul.f32 %v1437, %v1439
    %v1441 = vadd.f32 %v1437, %v1440
    %vm1442 = vweird.f32 %v1415
    %vm1443 = vweird.f32 %v1437
    %vm1444 = vmor %vm1442, %vm1443
    %v1445 = vsel %vm1444, %v1437, %v1441
    %v1446 = vand.u32 2147483647, %v1415
    %vm1447 = vcmp.eq.f32.partialorder %v1446, 8.507059e+37
    %v1448 = vand.u32 %v1415, 2147483648
    %v1449 = vor.u32 1.1754944e-38, %v1448
    %v1450 = vsel %vm1447, %v1449, %v1445
    %v1451 = vmul.f32 %v1398, %v1450
    %v1452 = vrcp.pop %v1418
    %v1453 = vmul.f32 %v1418, %v1452
    %v1454 = vsub.f32 1.0, %v1453
    %v1455 = vmul.f32 %v1452, %v1454
    %v1456 = vadd.f32 %v1452, %v1455
    %vm1457 = vweird.f32 %v1418
    %vm1458 = vweird.f32 %v1452
    %vm1459 = vmor %vm1457, %vm1458
    %v1460 = vsel %vm1459, %v1452, %v1456
    %v1461 = vand.u32 2147483647, %v1418
    %vm1462 = vcmp.eq.f32.partialorder %v1461, 8.507059e+37
    %v1463 = vand.u32 %v1418, 2147483648
    %v1464 = vor.u32 1.1754944e-38, %v1463
    %v1465 = vsel %vm1462, %v1464, %v1460
    %v1466 = vmul.f32 %v1400, %v1465
    %v1467 = vrcp.pop %v1421
    %v1468 = vmul.f32 %v1421, %v1467
    %v1469 = vsub.f32 1.0, %v1468
    %v1470 = vmul.f32 %v1467, %v1469
    %v1471 = vadd.f32 %v1467, %v1470
    %vm1472 = vweird.f32 %v1421
    %vm1473 = vweird.f32 %v1467
    %vm1474 = vmor %vm1472, %vm1473
    %v1475 = vsel %vm1474, %v1467, %v1471
    %v1476 = vand.u32 2147483647, %v1421
    %vm1477 = vcmp.eq.f32.partialorder %v1476, 8.507059e+37
    %v1478 = vand.u32 %v1421, 2147483648
    %v1479 = vor.u32 1.1754944e-38, %v1478
    %v1480 = vsel %vm1477, %v1479, %v1475
    %v1481 = vmul.f32 %v1402, %v1480
    %v1482 = vrcp.pop %v1424
    %v1483 = vmul.f32 %v1424, %v1482
    %v1484 = vsub.f32 1.0, %v1483
    %v1485 = vmul.f32 %v1482, %v1484
    %v1486 = vadd.f32 %v1482, %v1485
    %vm1487 = vweird.f32 %v1424
    %vm1488 = vweird.f32 %v1482
    %vm1489 = vmor %vm1487, %vm1488
    %v1490 = vsel %vm1489, %v1482, %v1486
    %v1491 = vand.u32 2147483647, %v1424
    %vm1492 = vcmp.eq.f32.partialorder %v1491, 8.507059e+37
    %v1493 = vand.u32 %v1424, 2147483648
    %v1494 = vor.u32 1.1754944e-38, %v1493
    %v1495 = vsel %vm1492, %v1494, %v1490
    %v1496 = vmul.f32 %v1404, %v1495
    %v1497 = vrcp.pop %v1427
    %v1498 = vmul.f32 %v1427, %v1497
    %v1499 = vsub.f32 1.0, %v1498
    %v1500 = vmul.f32 %v1497, %v1499
    %v1501 = vadd.f32 %v1497, %v1500
    %vm1502 = vweird.f32 %v1427
    %vm1503 = vweird.f32 %v1497
    %vm1504 = vmor %vm1502, %vm1503
    %v1505 = vsel %vm1504, %v1497, %v1501
    %v1506 = vand.u32 2147483647, %v1427
    %vm1507 = vcmp.eq.f32.partialorder %v1506, 8.507059e+37
    %v1508 = vand.u32 %v1427, 2147483648
    %v1509 = vor.u32 1.1754944e-38, %v1508
    %v1510 = vsel %vm1507, %v1509, %v1505
    %v1511 = vmul.f32 %v1406, %v1510
    %v1512 = vrcp.pop %v1430
    %v1513 = vmul.f32 %v1430, %v1512
    %v1514 = vsub.f32 1.0, %v1513
    %v1515 = vmul.f32 %v1512, %v1514
    %v1516 = vadd.f32 %v1512, %v1515
    %vm1517 = vweird.f32 %v1430
    %vm1518 = vweird.f32 %v1512
    %vm1519 = vmor %vm1517, %vm1518
    %v1520 = vsel %vm1519, %v1512, %v1516
    %v1521 = vand.u32 2147483647, %v1430
    %vm1522 = vcmp.eq.f32.partialorder %v1521, 8.507059e+37
    %v1523 = vand.u32 %v1430, 2147483648
    %v1524 = vor.u32 1.1754944e-38, %v1523
    %v1525 = vsel %vm1522, %v1524, %v1520
    %v1526 = vmul.f32 %v1408, %v1525
    %v1527 = vrcp.pop %v1433
    %v1528 = vmul.f32 %v1433, %v1527
    %v1529 = vsub.f32 1.0, %v1528
    %v1530 = vmul.f32 %v1527, %v1529
    %v1531 = vadd.f32 %v1527, %v1530
    %vm1532 = vweird.f32 %v1433
    %vm1533 = vweird.f32 %v1527
    %vm1534 = vmor %vm1532, %vm1533
    %v1535 = vsel %vm1534, %v1527, %v1531
    %v1536 = vand.u32 2147483647, %v1433
    %vm1537 = vcmp.eq.f32.partialorder %v1536, 8.507059e+37
    %v1538 = vand.u32 %v1433, 2147483648
    %v1539 = vor.u32 1.1754944e-38, %v1538
    %v1540 = vsel %vm1537, %v1539, %v1535
    %v1541 = vmul.f32 %v1410, %v1540
    %v1542 = vrcp.pop %v1436
    %v1543 = vmul.f32 %v1436, %v1542
    %v1544 = vsub.f32 1.0, %v1543
    %v1545 = vmul.f32 %v1542, %v1544
    %v1546 = vadd.f32 %v1542, %v1545
    %vm1547 = vweird.f32 %v1436
    %vm1548 = vweird.f32 %v1542
    %vm1549 = vmor %vm1547, %vm1548
    %v1550 = vsel %vm1549, %v1542, %v1546
    %v1551 = vand.u32 2147483647, %v1436
    %vm1552 = vcmp.eq.f32.partialorder %v1551, 8.507059e+37
    %v1553 = vand.u32 %v1436, 2147483648
    %v1554 = vor.u32 1.1754944e-38, %v1553
    %v1555 = vsel %vm1552, %v1554, %v1550
    %v1556 = vmul.f32 %v1412, %v1555
    %1557 = vrot.lane.b32.xlu0 %v1100, 64
    %v1558 = vpop.permute.xlu0 %1557
    %v1561 = vsel %vm1364, %v1451, 0
    %1563 = vmatpush.msra.mxu0 0.0
    %1564 = vmatpush.msra.mxu0 0.0
    %1565 = vmatpush.msra.mxu0 0.0
    %1566 = vmatpush.msra.mxu0 0.0
    %1567 = vmatpush.msra.mxu0 0.0
    %1568 = vmatpush.msra.mxu0 0.0
    %1569 = vmatpush.msra.mxu0 0.0
    %1570 = vmatpush.msra.mxu0 0.0
    %1571 = vmatpush.msra.mxu0 0.0
    %1572 = vmatpush.msra.mxu0 0.0
    %1573 = vmatpush.msra.mxu0 0.0
    %1574 = vmatpush.msra.mxu0 0.0
    %1575 = vmatpush.msra.mxu0 0.0
    %1576 = vmatpush.msra.mxu0 0.0
    %1577 = vmatpush.msra.mxu0 0.0
    %1578 = vmatpush.msra.mxu0 %v1558
    %1579 = vmatmul.f32.gmra.mxu0 %v1561
    %v1580 = vpop.f32.mrf.mxu0
    %v1581 = vadd.f32 0.0, %v1580
    %1582 = vdwg.mxu0
    %1583 = vrot.lane.b32.xlu0 %v1123, 64
    %v1584 = vpop.permute.xlu0 %1583
    %v1587 = vsel %vm1364, %v1466, 0
    %1589 = vmatpush.msra.mxu0 0.0
    %1590 = vmatpush.msra.mxu0 0.0
    %1591 = vmatpush.msra.mxu0 0.0
    %1592 = vmatpush.msra.mxu0 0.0
    %1593 = vmatpush.msra.mxu0 0.0
    %1594 = vmatpush.msra.mxu0 0.0
    %1595 = vmatpush.msra.mxu0 0.0
    %1596 = vmatpush.msra.mxu0 0.0
    %1597 = vmatpush.msra.mxu0 0.0
    %1598 = vmatpush.msra.mxu0 0.0
    %1599 = vmatpush.msra.mxu0 0.0
    %1600 = vmatpush.msra.mxu0 0.0
    %1601 = vmatpush.msra.mxu0 0.0
    %1602 = vmatpush.msra.mxu0 0.0
    %1603 = vmatpush.msra.mxu0 0.0
    %1604 = vmatpush.msra.mxu0 %v1584
    %1605 = vmatmul.f32.gmra.mxu0 %v1587
    %v1606 = vpop.f32.mrf.mxu0
    %v1607 = vadd.f32 0.0, %v1606
    %1608 = vdwg.mxu0
    %1609 = vrot.lane.b32.xlu0 %v1125, 64
    %v1610 = vpop.permute.xlu0 %1609
    %v1613 = vsel %vm1364, %v1481, 0
    %1615 = vmatpush.msra.mxu0 0.0
    %1616 = vmatpush.msra.mxu0 0.0
    %1617 = vmatpush.msra.mxu0 0.0
    %1618 = vmatpush.msra.mxu0 0.0
    %1619 = vmatpush.msra.mxu0 0.0
    %1620 = vmatpush.msra.mxu0 0.0
    %1621 = vmatpush.msra.mxu0 0.0
    %1622 = vmatpush.msra.mxu0 0.0
    %1623 = vmatpush.msra.mxu0 0.0
    %1624 = vmatpush.msra.mxu0 0.0
    %1625 = vmatpush.msra.mxu0 0.0
    %1626 = vmatpush.msra.mxu0 0.0
    %1627 = vmatpush.msra.mxu0 0.0
    %1628 = vmatpush.msra.mxu0 0.0
    %1629 = vmatpush.msra.mxu0 0.0
    %1630 = vmatpush.msra.mxu0 %v1610
    %1631 = vmatmul.f32.gmra.mxu0 %v1613
    %v1632 = vpop.f32.mrf.mxu0
    %v1633 = vadd.f32 0.0, %v1632
    %1634 = vdwg.mxu0
    %1635 = vrot.lane.b32.xlu0 %v1127, 64
    %v1636 = vpop.permute.xlu0 %1635
    %v1639 = vsel %vm1364, %v1496, 0
    %1641 = vmatpush.msra.mxu0 0.0
    %1642 = vmatpush.msra.mxu0 0.0
    %1643 = vmatpush.msra.mxu0 0.0
    %1644 = vmatpush.msra.mxu0 0.0
    %1645 = vmatpush.msra.mxu0 0.0
    %1646 = vmatpush.msra.mxu0 0.0
    %1647 = vmatpush.msra.mxu0 0.0
    %1648 = vmatpush.msra.mxu0 0.0
    %1649 = vmatpush.msra.mxu0 0.0
    %1650 = vmatpush.msra.mxu0 0.0
    %1651 = vmatpush.msra.mxu0 0.0
    %1652 = vmatpush.msra.mxu0 0.0
    %1653 = vmatpush.msra.mxu0 0.0
    %1654 = vmatpush.msra.mxu0 0.0
    %1655 = vmatpush.msra.mxu0 0.0
    %1656 = vmatpush.msra.mxu0 %v1636
    %1657 = vmatmul.f32.gmra.mxu0 %v1639
    %v1658 = vpop.f32.mrf.mxu0
    %v1659 = vadd.f32 0.0, %v1658
    %1660 = vdwg.mxu0
    %1661 = vrot.lane.b32.xlu0 %v1129, 64
    %v1662 = vpop.permute.xlu0 %1661
    %v1665 = vsel %vm1364, %v1511, 0
    %1667 = vmatpush.msra.mxu0 0.0
    %1668 = vmatpush.msra.mxu0 0.0
    %1669 = vmatpush.msra.mxu0 0.0
    %1670 = vmatpush.msra.mxu0 0.0
    %1671 = vmatpush.msra.mxu0 0.0
    %1672 = vmatpush.msra.mxu0 0.0
    %1673 = vmatpush.msra.mxu0 0.0
    %1674 = vmatpush.msra.mxu0 0.0
    %1675 = vmatpush.msra.mxu0 0.0
    %1676 = vmatpush.msra.mxu0 0.0
    %1677 = vmatpush.msra.mxu0 0.0
    %1678 = vmatpush.msra.mxu0 0.0
    %1679 = vmatpush.msra.mxu0 0.0
    %1680 = vmatpush.msra.mxu0 0.0
    %1681 = vmatpush.msra.mxu0 0.0
    %1682 = vmatpush.msra.mxu0 %v1662
    %1683 = vmatmul.f32.gmra.mxu0 %v1665
    %v1684 = vpop.f32.mrf.mxu0
    %v1685 = vadd.f32 0.0, %v1684
    %1686 = vdwg.mxu0
    %1687 = vrot.lane.b32.xlu0 %v1131, 64
    %v1688 = vpop.permute.xlu0 %1687
    %v1691 = vsel %vm1364, %v1526, 0
    %1693 = vmatpush.msra.mxu0 0.0
    %1694 = vmatpush.msra.mxu0 0.0
    %1695 = vmatpush.msra.mxu0 0.0
    %1696 = vmatpush.msra.mxu0 0.0
    %1697 = vmatpush.msra.mxu0 0.0
    %1698 = vmatpush.msra.mxu0 0.0
    %1699 = vmatpush.msra.mxu0 0.0
    %1700 = vmatpush.msra.mxu0 0.0
    %1701 = vmatpush.msra.mxu0 0.0
    %1702 = vmatpush.msra.mxu0 0.0
    %1703 = vmatpush.msra.mxu0 0.0
    %1704 = vmatpush.msra.mxu0 0.0
    %1705 = vmatpush.msra.mxu0 0.0
    %1706 = vmatpush.msra.mxu0 0.0
    %1707 = vmatpush.msra.mxu0 0.0
    %1708 = vmatpush.msra.mxu0 %v1688
    %1709 = vmatmul.f32.gmra.mxu0 %v1691
    %v1710 = vpop.f32.mrf.mxu0
    %v1711 = vadd.f32 0.0, %v1710
    %1712 = vdwg.mxu0
    %1713 = vrot.lane.b32.xlu0 %v1133, 64
    %v1714 = vpop.permute.xlu0 %1713
    %v1717 = vsel %vm1364, %v1541, 0
    %1719 = vmatpush.msra.mxu0 0.0
    %1720 = vmatpush.msra.mxu0 0.0
    %1721 = vmatpush.msra.mxu0 0.0
    %1722 = vmatpush.msra.mxu0 0.0
    %1723 = vmatpush.msra.mxu0 0.0
    %1724 = vmatpush.msra.mxu0 0.0
    %1725 = vmatpush.msra.mxu0 0.0
    %1726 = vmatpush.msra.mxu0 0.0
    %1727 = vmatpush.msra.mxu0 0.0
    %1728 = vmatpush.msra.mxu0 0.0
    %1729 = vmatpush.msra.mxu0 0.0
    %1730 = vmatpush.msra.mxu0 0.0
    %1731 = vmatpush.msra.mxu0 0.0
    %1732 = vmatpush.msra.mxu0 0.0
    %1733 = vmatpush.msra.mxu0 0.0
    %1734 = vmatpush.msra.mxu0 %v1714
    %1735 = vmatmul.f32.gmra.mxu0 %v1717
    %v1736 = vpop.f32.mrf.mxu0
    %v1737 = vadd.f32 0.0, %v1736
    %1738 = vdwg.mxu0
    %1739 = vrot.lane.b32.xlu0 %v1135, 64
    %v1740 = vpop.permute.xlu0 %1739
    %v1743 = vsel %vm1364, %v1556, 0
    %1745 = vmatpush.msra.mxu0 0.0
    %1746 = vmatpush.msra.mxu0 0.0
    %1747 = vmatpush.msra.mxu0 0.0
    %1748 = vmatpush.msra.mxu0 0.0
    %1749 = vmatpush.msra.mxu0 0.0
    %1750 = vmatpush.msra.mxu0 0.0
    %1751 = vmatpush.msra.mxu0 0.0
    %1752 = vmatpush.msra.mxu0 0.0
    %1753 = vmatpush.msra.mxu0 0.0
    %1754 = vmatpush.msra.mxu0 0.0
    %1755 = vmatpush.msra.mxu0 0.0
    %1756 = vmatpush.msra.mxu0 0.0
    %1757 = vmatpush.msra.mxu0 0.0
    %1758 = vmatpush.msra.mxu0 0.0
    %1759 = vmatpush.msra.mxu0 0.0
    %1760 = vmatpush.msra.mxu0 %v1740
    %1761 = vmatmul.f32.gmra.mxu0 %v1743
    %v1762 = vpop.f32.mrf.mxu0
    %v1763 = vadd.f32 0.0, %v1762
    %1764 = vdwg.mxu0
    %v1766 = vsel %vm1138, %v1581, 0
    %vm1768 = vcmask 1043456
    %v1770 = vsel %vm1768, %v1105, 0
    %1772 = vmatpush.msra.mxu0 0.0
    %1773 = vmatpush.msra.mxu0 0.0
    %1774 = vmatpush.msra.mxu0 0.0
    %1775 = vmatpush.msra.mxu0 0.0
    %1776 = vmatpush.msra.mxu0 0.0
    %1777 = vmatpush.msra.mxu0 0.0
    %1778 = vmatpush.msra.mxu0 0.0
    %1779 = vmatpush.msra.mxu0 0.0
    %1780 = vmatpush.msra.mxu0 0.0
    %1781 = vmatpush.msra.mxu0 0.0
    %1782 = vmatpush.msra.mxu0 0.0
    %1783 = vmatpush.msra.mxu0 0.0
    %1784 = vmatpush.msra.mxu0 0.0
    %1785 = vmatpush.msra.mxu0 0.0
    %1786 = vmatpush.msra.mxu0 0.0
    %1787 = vmatpush.msra.mxu0 %v1770
    %1788 = vmatmul.f32.gmra.mxu0 %v1766
    %v1789 = vpop.f32.mrf.mxu0
    %v1790 = vadd.f32 0.0, %v1789
    %1791 = vdwg.mxu0
    %v1793 = vsel %vm1138, %v1607, 0
    %v1796 = vsel %vm1768, %v1106, 0
    %1798 = vmatpush.msra.mxu0 0.0
    %1799 = vmatpush.msra.mxu0 0.0
    %1800 = vmatpush.msra.mxu0 0.0
    %1801 = vmatpush.msra.mxu0 0.0
    %1802 = vmatpush.msra.mxu0 0.0
    %1803 = vmatpush.msra.mxu0 0.0
    %1804 = vmatpush.msra.mxu0 0.0
    %1805 = vmatpush.msra.mxu0 0.0
    %1806 = vmatpush.msra.mxu0 0.0
    %1807 = vmatpush.msra.mxu0 0.0
    %1808 = vmatpush.msra.mxu0 0.0
    %1809 = vmatpush.msra.mxu0 0.0
    %1810 = vmatpush.msra.mxu0 0.0
    %1811 = vmatpush.msra.mxu0 0.0
    %1812 = vmatpush.msra.mxu0 0.0
    %1813 = vmatpush.msra.mxu0 %v1796
    %1814 = vmatmul.f32.gmra.mxu0 %v1793
    %v1815 = vpop.f32.mrf.mxu0
    %v1816 = vadd.f32 0.0, %v1815
    %1817 = vdwg.mxu0
    %v1819 = vsel %vm1138, %v1633, 0
    %v1822 = vsel %vm1768, %v1107, 0
    %1824 = vmatpush.msra.mxu0 0.0
    %1825 = vmatpush.msra.mxu0 0.0
    %1826 = vmatpush.msra.mxu0 0.0
    %1827 = vmatpush.msra.mxu0 0.0
    %1828 = vmatpush.msra.mxu0 0.0
    %1829 = vmatpush.msra.mxu0 0.0
    %1830 = vmatpush.msra.mxu0 0.0
    %1831 = vmatpush.msra.mxu0 0.0
    %1832 = vmatpush.msra.mxu0 0.0
    %1833 = vmatpush.msra.mxu0 0.0
    %1834 = vmatpush.msra.mxu0 0.0
    %1835 = vmatpush.msra.mxu0 0.0
    %1836 = vmatpush.msra.mxu0 0.0
    %1837 = vmatpush.msra.mxu0 0.0
    %1838 = vmatpush.msra.mxu0 0.0
    %1839 = vmatpush.msra.mxu0 %v1822
    %1840 = vmatmul.f32.gmra.mxu0 %v1819
    %v1841 = vpop.f32.mrf.mxu0
    %v1842 = vadd.f32 0.0, %v1841
    %1843 = vdwg.mxu0
    %v1845 = vsel %vm1138, %v1659, 0
    %v1848 = vsel %vm1768, %v1108, 0
    %1850 = vmatpush.msra.mxu0 0.0
    %1851 = vmatpush.msra.mxu0 0.0
    %1852 = vmatpush.msra.mxu0 0.0
    %1853 = vmatpush.msra.mxu0 0.0
    %1854 = vmatpush.msra.mxu0 0.0
    %1855 = vmatpush.msra.mxu0 0.0
    %1856 = vmatpush.msra.mxu0 0.0
    %1857 = vmatpush.msra.mxu0 0.0
    %1858 = vmatpush.msra.mxu0 0.0
    %1859 = vmatpush.msra.mxu0 0.0
    %1860 = vmatpush.msra.mxu0 0.0
    %1861 = vmatpush.msra.mxu0 0.0
    %1862 = vmatpush.msra.mxu0 0.0
    %1863 = vmatpush.msra.mxu0 0.0
    %1864 = vmatpush.msra.mxu0 0.0
    %1865 = vmatpush.msra.mxu0 %v1848
    %1866 = vmatmul.f32.gmra.mxu0 %v1845
    %v1867 = vpop.f32.mrf.mxu0
    %v1868 = vadd.f32 0.0, %v1867
    %1869 = vdwg.mxu0
    %v1871 = vsel %vm1138, %v1685, 0
    %v1874 = vsel %vm1768, %v1109, 0
    %1876 = vmatpush.msra.mxu0 0.0
    %1877 = vmatpush.msra.mxu0 0.0
    %1878 = vmatpush.msra.mxu0 0.0
    %1879 = vmatpush.msra.mxu0 0.0
    %1880 = vmatpush.msra.mxu0 0.0
    %1881 = vmatpush.msra.mxu0 0.0
    %1882 = vmatpush.msra.mxu0 0.0
    %1883 = vmatpush.msra.mxu0 0.0
    %1884 = vmatpush.msra.mxu0 0.0
    %1885 = vmatpush.msra.mxu0 0.0
    %1886 = vmatpush.msra.mxu0 0.0
    %1887 = vmatpush.msra.mxu0 0.0
    %1888 = vmatpush.msra.mxu0 0.0
    %1889 = vmatpush.msra.mxu0 0.0
    %1890 = vmatpush.msra.mxu0 0.0
    %1891 = vmatpush.msra.mxu0 %v1874
    %1892 = vmatmul.f32.gmra.mxu0 %v1871
    %v1893 = vpop.f32.mrf.mxu0
    %v1894 = vadd.f32 0.0, %v1893
    %1895 = vdwg.mxu0
    %v1897 = vsel %vm1138, %v1711, 0
    %v1900 = vsel %vm1768, %v1110, 0
    %1902 = vmatpush.msra.mxu0 0.0
    %1903 = vmatpush.msra.mxu0 0.0
    %1904 = vmatpush.msra.mxu0 0.0
    %1905 = vmatpush.msra.mxu0 0.0
    %1906 = vmatpush.msra.mxu0 0.0
    %1907 = vmatpush.msra.mxu0 0.0
    %1908 = vmatpush.msra.mxu0 0.0
    %1909 = vmatpush.msra.mxu0 0.0
    %1910 = vmatpush.msra.mxu0 0.0
    %1911 = vmatpush.msra.mxu0 0.0
    %1912 = vmatpush.msra.mxu0 0.0
    %1913 = vmatpush.msra.mxu0 0.0
    %1914 = vmatpush.msra.mxu0 0.0
    %1915 = vmatpush.msra.mxu0 0.0
    %1916 = vmatpush.msra.mxu0 0.0
    %1917 = vmatpush.msra.mxu0 %v1900
    %1918 = vmatmul.f32.gmra.mxu0 %v1897
    %v1919 = vpop.f32.mrf.mxu0
    %v1920 = vadd.f32 0.0, %v1919
    %1921 = vdwg.mxu0
    %v1923 = vsel %vm1138, %v1737, 0
    %v1926 = vsel %vm1768, %v1111, 0
    %1928 = vmatpush.msra.mxu0 0.0
    %1929 = vmatpush.msra.mxu0 0.0
    %1930 = vmatpush.msra.mxu0 0.0
    %1931 = vmatpush.msra.mxu0 0.0
    %1932 = vmatpush.msra.mxu0 0.0
    %1933 = vmatpush.msra.mxu0 0.0
    %1934 = vmatpush.msra.mxu0 0.0
    %1935 = vmatpush.msra.mxu0 0.0
    %1936 = vmatpush.msra.mxu0 0.0
    %1937 = vmatpush.msra.mxu0 0.0
    %1938 = vmatpush.msra.mxu0 0.0
    %1939 = vmatpush.msra.mxu0 0.0
    %1940 = vmatpush.msra.mxu0 0.0
    %1941 = vmatpush.msra.mxu0 0.0
    %1942 = vmatpush.msra.mxu0 0.0
    %1943 = vmatpush.msra.mxu0 %v1926
    %1944 = vmatmul.f32.gmra.mxu0 %v1923
    %v1945 = vpop.f32.mrf.mxu0
    %v1946 = vadd.f32 0.0, %v1945
    %1947 = vdwg.mxu0
    %v1949 = vsel %vm1138, %v1763, 0
    %v1952 = vsel %vm1768, %v1112, 0
    %1954 = vmatpush.msra.mxu0 0.0
    %1955 = vmatpush.msra.mxu0 0.0
    %1956 = vmatpush.msra.mxu0 0.0
    %1957 = vmatpush.msra.mxu0 0.0
    %1958 = vmatpush.msra.mxu0 0.0
    %1959 = vmatpush.msra.mxu0 0.0
    %1960 = vmatpush.msra.mxu0 0.0
    %1961 = vmatpush.msra.mxu0 0.0
    %1962 = vmatpush.msra.mxu0 0.0
    %1963 = vmatpush.msra.mxu0 0.0
    %1964 = vmatpush.msra.mxu0 0.0
    %1965 = vmatpush.msra.mxu0 0.0
    %1966 = vmatpush.msra.mxu0 0.0
    %1967 = vmatpush.msra.mxu0 0.0
    %1968 = vmatpush.msra.mxu0 0.0
    %1969 = vmatpush.msra.mxu0 %v1952
    %1970 = vmatmul.f32.gmra.mxu0 %v1949
    %v1971 = vpop.f32.mrf.mxu0
    %v1972 = vadd.f32 0.0, %v1971
    %1973 = vdwg.mxu0
    %v1974 = vsel %vm416, %v1790, 0.0
    %v1975 = vsel %vm416, %v1816, 0.0
    %v1976 = vadd.f32 %v1974, %v1975
    %v1977 = vsel %vm416, %v1842, 0.0
    %v1978 = vadd.f32 %v1976, %v1977
    %v1979 = vsel %vm416, %v1868, 0.0
    %v1980 = vadd.f32 %v1978, %v1979
    %v1981 = vsel %vm416, %v1894, 0.0
    %v1982 = vadd.f32 %v1980, %v1981
    %v1983 = vsel %vm416, %v1920, 0.0
    %v1984 = vadd.f32 %v1982, %v1983
    %v1985 = vsel %vm416, %v1946, 0.0
    %v1986 = vadd.f32 %v1984, %v1985
    %v1987 = vsel %vm416, %v1972, 0.0
    %v1988 = vadd.f32 %v1986, %v1987
    %v1990 = vperm.slane %v1113, 0
    %v1992 = vadd.f32 %v1988, %v1990
    %v1993 = vadd.f32 %v1066, %v1992
    %v1994 = vsel %vm416, %v1993, 0.0
    %1995 = vadd.xlane.f32.xlu0 %v1994
    %v1996 = vpop.xlane.xlu0 %1995
    %v1997 = vmul.f32 %v1996, %v287
    %v1998 = vsub.f32 %v1993, %v1997
    %v1999 = vmul.f32 %v1998, %v1998
    %v2000 = vsel %vm416, %v1999, 0.0
    %2001 = vadd.xlane.f32.xlu0 %v2000
    %v2002 = vpop.xlane.xlu0 %2001
    %v2003 = vmul.f32 %v2002, %v287
    %v2004 = vadd.f32 %v2003, 1e-05
    %v2005 = vrsqrt.pop %v2004
    %v2006 = vmul.f32 %v2005, %v2004
    %v2007 = vmul.f32 %v2006, %v2005
    %v2008 = vmul.f32 0.5, %v2007
    %v2009 = vsub.f32 1.5, %v2008
    %v2010 = vmul.f32 %v2005, %v2009
    %vm2011 = vweird.f32 %v2004
    %vm2012 = vweird.f32 %v2005
    %vm2013 = vmor %vm2011, %vm2012
    %v2014 = vsel %vm2013, %v2005, %v2010
    %v2015 = vmul.f32 %v1998, %v2014
    %v2017 = vperm.slane %v1114, 0
    %v2019 = vmul.f32 %v2015, %v2017
    %v2021 = vperm.slane %v1115, 0
    %v2023 = vadd.f32 %v2019, %v2021
    %s2024 = ssub.s32 %s1120, 1
    %p2025 = scmp.gt.s32.totalorder %s2024, 0
    %s2026 = scalar_select %p2025, %s2024, 0
    %v2027 = vstv %s2026
    %vm2028 = vcmp.eq.s32.totalorder %v1119, %v2027
    %p2029 = scmp.gt.s32.totalorder %s1120, 0
    %s2030 = scalar_select %p2029, 1, 0
    %v2031 = vstv %s2030
    %vm2032 = vcmp.eq.s32.totalorder %v2031, 1
    %vm2033 = vmand %vm2028, %vm2032
    %v2034 = vsel %vm2033, 1.0, 0.0
    %v2035 = vmul.f32 %v2023, %v2034
    %v2036 = vsel %vm416, %v2035, 0.0
    %v2037 = vrot.slane %v2036, 4
    %v2038 = vadd.f32 %v2036, %v2037
    %v2039 = vrot.slane %v2038, 2
    %v2040 = vadd.f32 %v2038, %v2039
    %v2041 = vrot.slane %v2040, 1
    %v2042 = vadd.f32 %v2040, %v2041
    %s2043 = sld [smem:[#allocation5 + $0x1]]
    %2045 = vrot.lane.b32.xlu0 %v1103, 124
    %v2046 = vpop.permute.xlu0 %2045
    %2047 = vrot.lane.b32.xlu0 %v1103, 120
    %v2048 = vpop.permute.xlu0 %2047
    %2049 = vrot.lane.b32.xlu0 %v1103, 116
    %v2050 = vpop.permute.xlu0 %2049
    %2051 = vrot.lane.b32.xlu0 %v1103, 112
    %v2052 = vpop.permute.xlu0 %2051
    %2053 = vrot.lane.b32.xlu0 %v1103, 108
    %v2054 = vpop.permute.xlu0 %2053
    %2055 = vrot.lane.b32.xlu0 %v1103, 104
    %v2056 = vpop.permute.xlu0 %2055
    %2057 = vrot.lane.b32.xlu0 %v1103, 100
    %v2058 = vpop.permute.xlu0 %2057
    %2059 = vrot.lane.b32.xlu0 %v1103, 96
    %v2060 = vpop.permute.xlu0 %2059
    %v2061 = vsel %vm1138, %v1103, 0
    %v2063 = vsel %vm1138, %v2060, 0
    %2065 = vmatpush.xpose.msra.mxu0 0.0
    %2066 = vmatpush.xpose.msra.mxu0 0.0
    %2067 = vmatpush.xpose.msra.mxu0 0.0
    %2068 = vmatpush.xpose.msra.mxu0 0.0
    %2069 = vmatpush.xpose.msra.mxu0 0.0
    %2070 = vmatpush.xpose.msra.mxu0 0.0
    %2071 = vmatpush.xpose.msra.mxu0 0.0
    %2072 = vmatpush.xpose.msra.mxu0 0.0
    %2073 = vmatpush.xpose.msra.mxu0 0.0
    %2074 = vmatpush.xpose.msra.mxu0 0.0
    %2075 = vmatpush.xpose.msra.mxu0 0.0
    %2076 = vmatpush.xpose.msra.mxu0 0.0
    %2077 = vmatpush.xpose.msra.mxu0 0.0
    %2078 = vmatpush.xpose.msra.mxu0 0.0
    %2079 = vmatpush.xpose.msra.mxu0 0.0
    %2080 = vmatpush.xpose.msra.mxu0 %v2063
    %2081 = vmatmul.f32.gmra.mxu0 %v2061
    %v2082 = vpop.f32.mrf.mxu0
    %v2083 = vadd.f32 0.0, %v2082
    %2084 = vdwg.mxu0
    %2085 = vrot.lane.b32.xlu0 %v2046, 96
    %v2086 = vpop.permute.xlu0 %2085
    %v2087 = vsel %vm1138, %v2046, 0
    %v2089 = vsel %vm1138, %v2086, 0
    %2091 = vmatpush.xpose.msra.mxu0 0.0
    %2092 = vmatpush.xpose.msra.mxu0 0.0
    %2093 = vmatpush.xpose.msra.mxu0 0.0
    %2094 = vmatpush.xpose.msra.mxu0 0.0
    %2095 = vmatpush.xpose.msra.mxu0 0.0
    %2096 = vmatpush.xpose.msra.mxu0 0.0
    %2097 = vmatpush.xpose.msra.mxu0 0.0
    %2098 = vmatpush.xpose.msra.mxu0 0.0
    %2099 = vmatpush.xpose.msra.mxu0 0.0
    %2100 = vmatpush.xpose.msra.mxu0 0.0
    %2101 = vmatpush.xpose.msra.mxu0 0.0
    %2102 = vmatpush.xpose.msra.mxu0 0.0
    %2103 = vmatpush.xpose.msra.mxu0 0.0
    %2104 = vmatpush.xpose.msra.mxu0 0.0
    %2105 = vmatpush.xpose.msra.mxu0 0.0
    %2106 = vmatpush.xpose.msra.mxu0 %v2089
    %2107 = vmatmul.f32.gmra.mxu0 %v2087
    %v2108 = vpop.f32.mrf.mxu0
    %v2109 = vadd.f32 0.0, %v2108
    %2110 = vdwg.mxu0
    %2111 = vrot.lane.b32.xlu0 %v2048, 96
    %v2112 = vpop.permute.xlu0 %2111
    %v2113 = vsel %vm1138, %v2048, 0
    %v2115 = vsel %vm1138, %v2112, 0
    %2117 = vmatpush.xpose.msra.mxu0 0.0
    %2118 = vmatpush.xpose.msra.mxu0 0.0
    %2119 = vmatpush.xpose.msra.mxu0 0.0
    %2120 = vmatpush.xpose.msra.mxu0 0.0
    %2121 = vmatpush.xpose.msra.mxu0 0.0
    %2122 = vmatpush.xpose.msra.mxu0 0.0
    %2123 = vmatpush.xpose.msra.mxu0 0.0
    %2124 = vmatpush.xpose.msra.mxu0 0.0
    %2125 = vmatpush.xpose.msra.mxu0 0.0
    %2126 = vmatpush.xpose.msra.mxu0 0.0
    %2127 = vmatpush.xpose.msra.mxu0 0.0
    %2128 = vmatpush.xpose.msra.mxu0 0.0
    %2129 = vmatpush.xpose.msra.mxu0 0.0
    %2130 = vmatpush.xpose.msra.mxu0 0.0
    %2131 = vmatpush.xpose.msra.mxu0 0.0
    %2132 = vmatpush.xpose.msra.mxu0 %v2115
    %2133 = vmatmul.f32.gmra.mxu0 %v2113
    %v2134 = vpop.f32.mrf.mxu0
    %v2135 = vadd.f32 0.0, %v2134
    %2136 = vdwg.mxu0
    %2137 = vrot.lane.b32.xlu0 %v2050, 96
    %v2138 = vpop.permute.xlu0 %2137
    %v2139 = vsel %vm1138, %v2050, 0
    %v2141 = vsel %vm1138, %v2138, 0
    %2143 = vmatpush.xpose.msra.mxu0 0.0
    %2144 = vmatpush.xpose.msra.mxu0 0.0
    %2145 = vmatpush.xpose.msra.mxu0 0.0
    %2146 = vmatpush.xpose.msra.mxu0 0.0
    %2147 = vmatpush.xpose.msra.mxu0 0.0
    %2148 = vmatpush.xpose.msra.mxu0 0.0
    %2149 = vmatpush.xpose.msra.mxu0 0.0
    %2150 = vmatpush.xpose.msra.mxu0 0.0
    %2151 = vmatpush.xpose.msra.mxu0 0.0
    %2152 = vmatpush.xpose.msra.mxu0 0.0
    %2153 = vmatpush.xpose.msra.mxu0 0.0
    %2154 = vmatpush.xpose.msra.mxu0 0.0
    %2155 = vmatpush.xpose.msra.mxu0 0.0
    %2156 = vmatpush.xpose.msra.mxu0 0.0
    %2157 = vmatpush.xpose.msra.mxu0 0.0
    %2158 = vmatpush.xpose.msra.mxu0 %v2141
    %2159 = vmatmul.f32.gmra.mxu0 %v2139
    %v2160 = vpop.f32.mrf.mxu0
    %v2161 = vadd.f32 0.0, %v2160
    %2162 = vdwg.mxu0
    %2163 = vrot.lane.b32.xlu0 %v2052, 96
    %v2164 = vpop.permute.xlu0 %2163
    %v2165 = vsel %vm1138, %v2052, 0
    %v2167 = vsel %vm1138, %v2164, 0
    %2169 = vmatpush.xpose.msra.mxu0 0.0
    %2170 = vmatpush.xpose.msra.mxu0 0.0
    %2171 = vmatpush.xpose.msra.mxu0 0.0
    %2172 = vmatpush.xpose.msra.mxu0 0.0
    %2173 = vmatpush.xpose.msra.mxu0 0.0
    %2174 = vmatpush.xpose.msra.mxu0 0.0
    %2175 = vmatpush.xpose.msra.mxu0 0.0
    %2176 = vmatpush.xpose.msra.mxu0 0.0
    %2177 = vmatpush.xpose.msra.mxu0 0.0
    %2178 = vmatpush.xpose.msra.mxu0 0.0
    %2179 = vmatpush.xpose.msra.mxu0 0.0
    %2180 = vmatpush.xpose.msra.mxu0 0.0
    %2181 = vmatpush.xpose.msra.mxu0 0.0
    %2182 = vmatpush.xpose.msra.mxu0 0.0
    %2183 = vmatpush.xpose.msra.mxu0 0.0
    %2184 = vmatpush.xpose.msra.mxu0 %v2167
    %2185 = vmatmul.f32.gmra.mxu0 %v2165
    %v2186 = vpop.f32.mrf.mxu0
    %v2187 = vadd.f32 0.0, %v2186
    %2188 = vdwg.mxu0
    %2189 = vrot.lane.b32.xlu0 %v2054, 96
    %v2190 = vpop.permute.xlu0 %2189
    %v2191 = vsel %vm1138, %v2054, 0
    %v2193 = vsel %vm1138, %v2190, 0
    %2195 = vmatpush.xpose.msra.mxu0 0.0
    %2196 = vmatpush.xpose.msra.mxu0 0.0
    %2197 = vmatpush.xpose.msra.mxu0 0.0
    %2198 = vmatpush.xpose.msra.mxu0 0.0
    %2199 = vmatpush.xpose.msra.mxu0 0.0
    %2200 = vmatpush.xpose.msra.mxu0 0.0
    %2201 = vmatpush.xpose.msra.mxu0 0.0
    %2202 = vmatpush.xpose.msra.mxu0 0.0
    %2203 = vmatpush.xpose.msra.mxu0 0.0
    %2204 = vmatpush.xpose.msra.mxu0 0.0
    %2205 = vmatpush.xpose.msra.mxu0 0.0
    %2206 = vmatpush.xpose.msra.mxu0 0.0
    %2207 = vmatpush.xpose.msra.mxu0 0.0
    %2208 = vmatpush.xpose.msra.mxu0 0.0
    %2209 = vmatpush.xpose.msra.mxu0 0.0
    %2210 = vmatpush.xpose.msra.mxu0 %v2193
    %2211 = vmatmul.f32.gmra.mxu0 %v2191
    %v2212 = vpop.f32.mrf.mxu0
    %v2213 = vadd.f32 0.0, %v2212
    %2214 = vdwg.mxu0
    %2215 = vrot.lane.b32.xlu0 %v2056, 96
    %v2216 = vpop.permute.xlu0 %2215
    %v2217 = vsel %vm1138, %v2056, 0
    %v2219 = vsel %vm1138, %v2216, 0
    %2221 = vmatpush.xpose.msra.mxu0 0.0
    %2222 = vmatpush.xpose.msra.mxu0 0.0
    %2223 = vmatpush.xpose.msra.mxu0 0.0
    %2224 = vmatpush.xpose.msra.mxu0 0.0
    %2225 = vmatpush.xpose.msra.mxu0 0.0
    %2226 = vmatpush.xpose.msra.mxu0 0.0
    %2227 = vmatpush.xpose.msra.mxu0 0.0
    %2228 = vmatpush.xpose.msra.mxu0 0.0
    %2229 = vmatpush.xpose.msra.mxu0 0.0
    %2230 = vmatpush.xpose.msra.mxu0 0.0
    %2231 = vmatpush.xpose.msra.mxu0 0.0
    %2232 = vmatpush.xpose.msra.mxu0 0.0
    %2233 = vmatpush.xpose.msra.mxu0 0.0
    %2234 = vmatpush.xpose.msra.mxu0 0.0
    %2235 = vmatpush.xpose.msra.mxu0 0.0
    %2236 = vmatpush.xpose.msra.mxu0 %v2219
    %2237 = vmatmul.f32.gmra.mxu0 %v2217
    %v2238 = vpop.f32.mrf.mxu0
    %v2239 = vadd.f32 0.0, %v2238
    %2240 = vdwg.mxu0
    %2241 = vrot.lane.b32.xlu0 %v2058, 96
    %v2242 = vpop.permute.xlu0 %2241
    %v2243 = vsel %vm1138, %v2058, 0
    %v2245 = vsel %vm1138, %v2242, 0
    %2247 = vmatpush.xpose.msra.mxu0 0.0
    %2248 = vmatpush.xpose.msra.mxu0 0.0
    %2249 = vmatpush.xpose.msra.mxu0 0.0
    %2250 = vmatpush.xpose.msra.mxu0 0.0
    %2251 = vmatpush.xpose.msra.mxu0 0.0
    %2252 = vmatpush.xpose.msra.mxu0 0.0
    %2253 = vmatpush.xpose.msra.mxu0 0.0
    %2254 = vmatpush.xpose.msra.mxu0 0.0
    %2255 = vmatpush.xpose.msra.mxu0 0.0
    %2256 = vmatpush.xpose.msra.mxu0 0.0
    %2257 = vmatpush.xpose.msra.mxu0 0.0
    %2258 = vmatpush.xpose.msra.mxu0 0.0
    %2259 = vmatpush.xpose.msra.mxu0 0.0
    %2260 = vmatpush.xpose.msra.mxu0 0.0
    %2261 = vmatpush.xpose.msra.mxu0 0.0
    %2262 = vmatpush.xpose.msra.mxu0 %v2245
    %2263 = vmatmul.f32.gmra.mxu0 %v2243
    %v2264 = vpop.f32.mrf.mxu0
    %v2265 = vadd.f32 0.0, %v2264
    %2266 = vdwg.mxu0
    %v2267 = vmul.f32 %v2083, 0.5
    %v2268 = vmul.f32 %v2109, 0.5
    %v2269 = vmul.f32 %v2135, 0.5
    %v2270 = vmul.f32 %v2161, 0.5
    %v2271 = vmul.f32 %v2187, 0.5
    %v2272 = vmul.f32 %v2213, 0.5
    %v2273 = vmul.f32 %v2239, 0.5
    %v2274 = vmul.f32 %v2265, 0.5
    %v2275 = vstv %s2043
    %vm2276 = vcmp.lt.s32.totalorder %v1117, %v2275
    %v2277 = vsel %vm2276, 0.0, -1e+09
    %v2278 = vadd.f32 %v2267, %v2277
    %v2279 = vadd.f32 %v2268, %v2277
    %v2280 = vadd.f32 %v2269, %v2277
    %v2281 = vadd.f32 %v2270, %v2277
    %v2282 = vadd.f32 %v2271, %v2277
    %v2283 = vadd.f32 %v2272, %v2277
    %v2284 = vadd.f32 %v2273, %v2277
    %v2285 = vadd.f32 %v2274, %v2277
    %v2286 = vsel %vm1364, %v2278, -inf
    %2287 = vmax.xlane.f32.xlu0 %v2286
    %v2288 = vpop.xlane.xlu0 %2287
    %v2289 = vsel %vm1364, %v2279, -inf
    %2290 = vmax.xlane.f32.xlu0 %v2289
    %v2291 = vpop.xlane.xlu0 %2290
    %v2292 = vsel %vm1364, %v2280, -inf
    %2293 = vmax.xlane.f32.xlu0 %v2292
    %v2294 = vpop.xlane.xlu0 %2293
    %v2295 = vsel %vm1364, %v2281, -inf
    %2296 = vmax.xlane.f32.xlu0 %v2295
    %v2297 = vpop.xlane.xlu0 %2296
    %v2298 = vsel %vm1364, %v2282, -inf
    %2299 = vmax.xlane.f32.xlu0 %v2298
    %v2300 = vpop.xlane.xlu0 %2299
    %v2301 = vsel %vm1364, %v2283, -inf
    %2302 = vmax.xlane.f32.xlu0 %v2301
    %v2303 = vpop.xlane.xlu0 %2302
    %v2304 = vsel %vm1364, %v2284, -inf
    %2305 = vmax.xlane.f32.xlu0 %v2304
    %v2306 = vpop.xlane.xlu0 %2305
    %v2307 = vsel %vm1364, %v2285, -inf
    %2308 = vmax.xlane.f32.xlu0 %v2307
    %v2309 = vpop.xlane.xlu0 %2308
    %v2310 = vsub.f32 %v2278, %v2288
    %v2311 = vsub.f32 %v2279, %v2291
    %v2312 = vsub.f32 %v2280, %v2294
    %v2313 = vsub.f32 %v2281, %v2297
    %v2314 = vsub.f32 %v2282, %v2300
    %v2315 = vsub.f32 %v2283, %v2303
    %v2316 = vsub.f32 %v2284, %v2306
    %v2317 = vsub.f32 %v2285, %v2309
    %v2318 = vmul.f32 %v2310, 1.442695
    %v2319 = vpow.pop %v2318
    %v2320 = vmul.f32 %v2311, 1.442695
    %v2321 = vpow.pop %v2320
    %v2322 = vmul.f32 %v2312, 1.442695
    %v2323 = vpow.pop %v2322
    %v2324 = vmul.f32 %v2313, 1.442695
    %v2325 = vpow.pop %v2324
    %v2326 = vmul.f32 %v2314, 1.442695
    %v2327 = vpow.pop %v2326
    %v2328 = vmul.f32 %v2315, 1.442695
    %v2329 = vpow.pop %v2328
    %v2330 = vmul.f32 %v2316, 1.442695
    %v2331 = vpow.pop %v2330
    %v2332 = vmul.f32 %v2317, 1.442695
    %v2333 = vpow.pop %v2332
    %v2334 = vsel %vm1364, %v2319, 0.0
    %2335 = vadd.xlane.f32.xlu0 %v2334
    %v2336 = vpop.xlane.xlu0 %2335
    %v2337 = vsel %vm1364, %v2321, 0.0
    %2338 = vadd.xlane.f32.xlu0 %v2337
    %v2339 = vpop.xlane.xlu0 %2338
    %v2340 = vsel %vm1364, %v2323, 0.0
    %2341 = vadd.xlane.f32.xlu0 %v2340
    %v2342 = vpop.xlane.xlu0 %2341
    %v2343 = vsel %vm1364, %v2325, 0.0
    %2344 = vadd.xlane.f32.xlu0 %v2343
    %v2345 = vpop.xlane.xlu0 %2344
    %v2346 = vsel %vm1364, %v2327, 0.0
    %2347 = vadd.xlane.f32.xlu0 %v2346
    %v2348 = vpop.xlane.xlu0 %2347
    %v2349 = vsel %vm1364, %v2329, 0.0
    %2350 = vadd.xlane.f32.xlu0 %v2349
    %v2351 = vpop.xlane.xlu0 %2350
    %v2352 = vsel %vm1364, %v2331, 0.0
    %2353 = vadd.xlane.f32.xlu0 %v2352
    %v2354 = vpop.xlane.xlu0 %2353
    %v2355 = vsel %vm1364, %v2333, 0.0
    %2356 = vadd.xlane.f32.xlu0 %v2355
    %v2357 = vpop.xlane.xlu0 %2356
    %v2358 = vrcp.pop %v2336
    %v2359 = vmul.f32 %v2336, %v2358
    %v2360 = vsub.f32 1.0, %v2359
    %v2361 = vmul.f32 %v2358, %v2360
    %v2362 = vadd.f32 %v2358, %v2361
    %vm2363 = vweird.f32 %v2336
    %vm2364 = vweird.f32 %v2358
    %vm2365 = vmor %vm2363, %vm2364
    %v2366 = vsel %vm2365, %v2358, %v2362
    %v2367 = vand.u32 2147483647, %v2336
    %vm2368 = vcmp.eq.f32.partialorder %v2367, 8.507059e+37
    %v2369 = vand.u32 %v2336, 2147483648
    %v2370 = vor.u32 1.1754944e-38, %v2369
    %v2371 = vsel %vm2368, %v2370, %v2366
    %v2372 = vmul.f32 %v2319, %v2371
    %v2373 = vrcp.pop %v2339
    %v2374 = vmul.f32 %v2339, %v2373
    %v2375 = vsub.f32 1.0, %v2374
    %v2376 = vmul.f32 %v2373, %v2375
    %v2377 = vadd.f32 %v2373, %v2376
    %vm2378 = vweird.f32 %v2339
    %vm2379 = vweird.f32 %v2373
    %vm2380 = vmor %vm2378, %vm2379
    %v2381 = vsel %vm2380, %v2373, %v2377
    %v2382 = vand.u32 2147483647, %v2339
    %vm2383 = vcmp.eq.f32.partialorder %v2382, 8.507059e+37
    %v2384 = vand.u32 %v2339, 2147483648
    %v2385 = vor.u32 1.1754944e-38, %v2384
    %v2386 = vsel %vm2383, %v2385, %v2381
    %v2387 = vmul.f32 %v2321, %v2386
    %v2388 = vrcp.pop %v2342
    %v2389 = vmul.f32 %v2342, %v2388
    %v2390 = vsub.f32 1.0, %v2389
    %v2391 = vmul.f32 %v2388, %v2390
    %v2392 = vadd.f32 %v2388, %v2391
    %vm2393 = vweird.f32 %v2342
    %vm2394 = vweird.f32 %v2388
    %vm2395 = vmor %vm2393, %vm2394
    %v2396 = vsel %vm2395, %v2388, %v2392
    %v2397 = vand.u32 2147483647, %v2342
    %vm2398 = vcmp.eq.f32.partialorder %v2397, 8.507059e+37
    %v2399 = vand.u32 %v2342, 2147483648
    %v2400 = vor.u32 1.1754944e-38, %v2399
    %v2401 = vsel %vm2398, %v2400, %v2396
    %v2402 = vmul.f32 %v2323, %v2401
    %v2403 = vrcp.pop %v2345
    %v2404 = vmul.f32 %v2345, %v2403
    %v2405 = vsub.f32 1.0, %v2404
    %v2406 = vmul.f32 %v2403, %v2405
    %v2407 = vadd.f32 %v2403, %v2406
    %vm2408 = vweird.f32 %v2345
    %vm2409 = vweird.f32 %v2403
    %vm2410 = vmor %vm2408, %vm2409
    %v2411 = vsel %vm2410, %v2403, %v2407
    %v2412 = vand.u32 2147483647, %v2345
    %vm2413 = vcmp.eq.f32.partialorder %v2412, 8.507059e+37
    %v2414 = vand.u32 %v2345, 2147483648
    %v2415 = vor.u32 1.1754944e-38, %v2414
    %v2416 = vsel %vm2413, %v2415, %v2411
    %v2417 = vmul.f32 %v2325, %v2416
    %v2418 = vrcp.pop %v2348
    %v2419 = vmul.f32 %v2348, %v2418
    %v2420 = vsub.f32 1.0, %v2419
    %v2421 = vmul.f32 %v2418, %v2420
    %v2422 = vadd.f32 %v2418, %v2421
    %vm2423 = vweird.f32 %v2348
    %vm2424 = vweird.f32 %v2418
    %vm2425 = vmor %vm2423, %vm2424
    %v2426 = vsel %vm2425, %v2418, %v2422
    %v2427 = vand.u32 2147483647, %v2348
    %vm2428 = vcmp.eq.f32.partialorder %v2427, 8.507059e+37
    %v2429 = vand.u32 %v2348, 2147483648
    %v2430 = vor.u32 1.1754944e-38, %v2429
    %v2431 = vsel %vm2428, %v2430, %v2426
    %v2432 = vmul.f32 %v2327, %v2431
    %v2433 = vrcp.pop %v2351
    %v2434 = vmul.f32 %v2351, %v2433
    %v2435 = vsub.f32 1.0, %v2434
    %v2436 = vmul.f32 %v2433, %v2435
    %v2437 = vadd.f32 %v2433, %v2436
    %vm2438 = vweird.f32 %v2351
    %vm2439 = vweird.f32 %v2433
    %vm2440 = vmor %vm2438, %vm2439
    %v2441 = vsel %vm2440, %v2433, %v2437
    %v2442 = vand.u32 2147483647, %v2351
    %vm2443 = vcmp.eq.f32.partialorder %v2442, 8.507059e+37
    %v2444 = vand.u32 %v2351, 2147483648
    %v2445 = vor.u32 1.1754944e-38, %v2444
    %v2446 = vsel %vm2443, %v2445, %v2441
    %v2447 = vmul.f32 %v2329, %v2446
    %v2448 = vrcp.pop %v2354
    %v2449 = vmul.f32 %v2354, %v2448
    %v2450 = vsub.f32 1.0, %v2449
    %v2451 = vmul.f32 %v2448, %v2450
    %v2452 = vadd.f32 %v2448, %v2451
    %vm2453 = vweird.f32 %v2354
    %vm2454 = vweird.f32 %v2448
    %vm2455 = vmor %vm2453, %vm2454
    %v2456 = vsel %vm2455, %v2448, %v2452
    %v2457 = vand.u32 2147483647, %v2354
    %vm2458 = vcmp.eq.f32.partialorder %v2457, 8.507059e+37
    %v2459 = vand.u32 %v2354, 2147483648
    %v2460 = vor.u32 1.1754944e-38, %v2459
    %v2461 = vsel %vm2458, %v2460, %v2456
    %v2462 = vmul.f32 %v2331, %v2461
    %v2463 = vrcp.pop %v2357
    %v2464 = vmul.f32 %v2357, %v2463
    %v2465 = vsub.f32 1.0, %v2464
    %v2466 = vmul.f32 %v2463, %v2465
    %v2467 = vadd.f32 %v2463, %v2466
    %vm2468 = vweird.f32 %v2357
    %vm2469 = vweird.f32 %v2463
    %vm2470 = vmor %vm2468, %vm2469
    %v2471 = vsel %vm2470, %v2463, %v2467
    %v2472 = vand.u32 2147483647, %v2357
    %vm2473 = vcmp.eq.f32.partialorder %v2472, 8.507059e+37
    %v2474 = vand.u32 %v2357, 2147483648
    %v2475 = vor.u32 1.1754944e-38, %v2474
    %v2476 = vsel %vm2473, %v2475, %v2471
    %v2477 = vmul.f32 %v2333, %v2476
    %2478 = vrot.lane.b32.xlu0 %v1103, 64
    %v2479 = vpop.permute.xlu0 %2478
    %v2482 = vsel %vm1364, %v2372, 0
    %2484 = vmatpush.msra.mxu0 0.0
    %2485 = vmatpush.msra.mxu0 0.0
    %2486 = vmatpush.msra.mxu0 0.0
    %2487 = vmatpush.msra.mxu0 0.0
    %2488 = vmatpush.msra.mxu0 0.0
    %2489 = vmatpush.msra.mxu0 0.0
    %2490 = vmatpush.msra.mxu0 0.0
    %2491 = vmatpush.msra.mxu0 0.0
    %2492 = vmatpush.msra.mxu0 0.0
    %2493 = vmatpush.msra.mxu0 0.0
    %2494 = vmatpush.msra.mxu0 0.0
    %2495 = vmatpush.msra.mxu0 0.0
    %2496 = vmatpush.msra.mxu0 0.0
    %2497 = vmatpush.msra.mxu0 0.0
    %2498 = vmatpush.msra.mxu0 0.0
    %2499 = vmatpush.msra.mxu0 %v2479
    %2500 = vmatmul.f32.gmra.mxu0 %v2482
    %v2501 = vpop.f32.mrf.mxu0
    %v2502 = vadd.f32 0.0, %v2501
    %2503 = vdwg.mxu0
    %2504 = vrot.lane.b32.xlu0 %v2046, 64
    %v2505 = vpop.permute.xlu0 %2504
    %v2508 = vsel %vm1364, %v2387, 0
    %2510 = vmatpush.msra.mxu0 0.0
    %2511 = vmatpush.msra.mxu0 0.0
    %2512 = vmatpush.msra.mxu0 0.0
    %2513 = vmatpush.msra.mxu0 0.0
    %2514 = vmatpush.msra.mxu0 0.0
    %2515 = vmatpush.msra.mxu0 0.0
    %2516 = vmatpush.msra.mxu0 0.0
    %2517 = vmatpush.msra.mxu0 0.0
    %2518 = vmatpush.msra.mxu0 0.0
    %2519 = vmatpush.msra.mxu0 0.0
    %2520 = vmatpush.msra.mxu0 0.0
    %2521 = vmatpush.msra.mxu0 0.0
    %2522 = vmatpush.msra.mxu0 0.0
    %2523 = vmatpush.msra.mxu0 0.0
    %2524 = vmatpush.msra.mxu0 0.0
    %2525 = vmatpush.msra.mxu0 %v2505
    %2526 = vmatmul.f32.gmra.mxu0 %v2508
    %v2527 = vpop.f32.mrf.mxu0
    %v2528 = vadd.f32 0.0, %v2527
    %2529 = vdwg.mxu0
    %2530 = vrot.lane.b32.xlu0 %v2048, 64
    %v2531 = vpop.permute.xlu0 %2530
    %v2534 = vsel %vm1364, %v2402, 0
    %2536 = vmatpush.msra.mxu0 0.0
    %2537 = vmatpush.msra.mxu0 0.0
    %2538 = vmatpush.msra.mxu0 0.0
    %2539 = vmatpush.msra.mxu0 0.0
    %2540 = vmatpush.msra.mxu0 0.0
    %2541 = vmatpush.msra.mxu0 0.0
    %2542 = vmatpush.msra.mxu0 0.0
    %2543 = vmatpush.msra.mxu0 0.0
    %2544 = vmatpush.msra.mxu0 0.0
    %2545 = vmatpush.msra.mxu0 0.0
    %2546 = vmatpush.msra.mxu0 0.0
    %2547 = vmatpush.msra.mxu0 0.0
    %2548 = vmatpush.msra.mxu0 0.0
    %2549 = vmatpush.msra.mxu0 0.0
    %2550 = vmatpush.msra.mxu0 0.0
    %2551 = vmatpush.msra.mxu0 %v2531
    %2552 = vmatmul.f32.gmra.mxu0 %v2534
    %v2553 = vpop.f32.mrf.mxu0
    %v2554 = vadd.f32 0.0, %v2553
    %2555 = vdwg.mxu0
    %2556 = vrot.lane.b32.xlu0 %v2050, 64
    %v2557 = vpop.permute.xlu0 %2556
    %v2560 = vsel %vm1364, %v2417, 0
    %2562 = vmatpush.msra.mxu0 0.0
    %2563 = vmatpush.msra.mxu0 0.0
    %2564 = vmatpush.msra.mxu0 0.0
    %2565 = vmatpush.msra.mxu0 0.0
    %2566 = vmatpush.msra.mxu0 0.0
    %2567 = vmatpush.msra.mxu0 0.0
    %2568 = vmatpush.msra.mxu0 0.0
    %2569 = vmatpush.msra.mxu0 0.0
    %2570 = vmatpush.msra.mxu0 0.0
    %2571 = vmatpush.msra.mxu0 0.0
    %2572 = vmatpush.msra.mxu0 0.0
    %2573 = vmatpush.msra.mxu0 0.0
    %2574 = vmatpush.msra.mxu0 0.0
    %2575 = vmatpush.msra.mxu0 0.0
    %2576 = vmatpush.msra.mxu0 0.0
    %2577 = vmatpush.msra.mxu0 %v2557
    %2578 = vmatmul.f32.gmra.mxu0 %v2560
    %v2579 = vpop.f32.mrf.mxu0
    %v2580 = vadd.f32 0.0, %v2579
    %2581 = vdwg.mxu0
    %2582 = vrot.lane.b32.xlu0 %v2052, 64
    %v2583 = vpop.permute.xlu0 %2582
    %v2586 = vsel %vm1364, %v2432, 0
    %2588 = vmatpush.msra.mxu0 0.0
    %2589 = vmatpush.msra.mxu0 0.0
    %2590 = vmatpush.msra.mxu0 0.0
    %2591 = vmatpush.msra.mxu0 0.0
    %2592 = vmatpush.msra.mxu0 0.0
    %2593 = vmatpush.msra.mxu0 0.0
    %2594 = vmatpush.msra.mxu0 0.0
    %2595 = vmatpush.msra.mxu0 0.0
    %2596 = vmatpush.msra.mxu0 0.0
    %2597 = vmatpush.msra.mxu0 0.0
    %2598 = vmatpush.msra.mxu0 0.0
    %2599 = vmatpush.msra.mxu0 0.0
    %2600 = vmatpush.msra.mxu0 0.0
    %2601 = vmatpush.msra.mxu0 0.0
    %2602 = vmatpush.msra.mxu0 0.0
    %2603 = vmatpush.msra.mxu0 %v2583
    %2604 = vmatmul.f32.gmra.mxu0 %v2586
    %v2605 = vpop.f32.mrf.mxu0
    %v2606 = vadd.f32 0.0, %v2605
    %2607 = vdwg.mxu0
    %2608 = vrot.lane.b32.xlu0 %v2054, 64
    %v2609 = vpop.permute.xlu0 %2608
    %v2612 = vsel %vm1364, %v2447, 0
    %2614 = vmatpush.msra.mxu0 0.0
    %2615 = vmatpush.msra.mxu0 0.0
    %2616 = vmatpush.msra.mxu0 0.0
    %2617 = vmatpush.msra.mxu0 0.0
    %2618 = vmatpush.msra.mxu0 0.0
    %2619 = vmatpush.msra.mxu0 0.0
    %2620 = vmatpush.msra.mxu0 0.0
    %2621 = vmatpush.msra.mxu0 0.0
    %2622 = vmatpush.msra.mxu0 0.0
    %2623 = vmatpush.msra.mxu0 0.0
    %2624 = vmatpush.msra.mxu0 0.0
    %2625 = vmatpush.msra.mxu0 0.0
    %2626 = vmatpush.msra.mxu0 0.0
    %2627 = vmatpush.msra.mxu0 0.0
    %2628 = vmatpush.msra.mxu0 0.0
    %2629 = vmatpush.msra.mxu0 %v2609
    %2630 = vmatmul.f32.gmra.mxu0 %v2612
    %v2631 = vpop.f32.mrf.mxu0
    %v2632 = vadd.f32 0.0, %v2631
    %2633 = vdwg.mxu0
    %2634 = vrot.lane.b32.xlu0 %v2056, 64
    %v2635 = vpop.permute.xlu0 %2634
    %v2638 = vsel %vm1364, %v2462, 0
    %2640 = vmatpush.msra.mxu0 0.0
    %2641 = vmatpush.msra.mxu0 0.0
    %2642 = vmatpush.msra.mxu0 0.0
    %2643 = vmatpush.msra.mxu0 0.0
    %2644 = vmatpush.msra.mxu0 0.0
    %2645 = vmatpush.msra.mxu0 0.0
    %2646 = vmatpush.msra.mxu0 0.0
    %2647 = vmatpush.msra.mxu0 0.0
    %2648 = vmatpush.msra.mxu0 0.0
    %2649 = vmatpush.msra.mxu0 0.0
    %2650 = vmatpush.msra.mxu0 0.0
    %2651 = vmatpush.msra.mxu0 0.0
    %2652 = vmatpush.msra.mxu0 0.0
    %2653 = vmatpush.msra.mxu0 0.0
    %2654 = vmatpush.msra.mxu0 0.0
    %2655 = vmatpush.msra.mxu0 %v2635
    %2656 = vmatmul.f32.gmra.mxu0 %v2638
    %v2657 = vpop.f32.mrf.mxu0
    %v2658 = vadd.f32 0.0, %v2657
    %2659 = vdwg.mxu0
    %2660 = vrot.lane.b32.xlu0 %v2058, 64
    %v2661 = vpop.permute.xlu0 %2660
    %v2664 = vsel %vm1364, %v2477, 0
    %2666 = vmatpush.msra.mxu0 0.0
    %2667 = vmatpush.msra.mxu0 0.0
    %2668 = vmatpush.msra.mxu0 0.0
    %2669 = vmatpush.msra.mxu0 0.0
    %2670 = vmatpush.msra.mxu0 0.0
    %2671 = vmatpush.msra.mxu0 0.0
    %2672 = vmatpush.msra.mxu0 0.0
    %2673 = vmatpush.msra.mxu0 0.0
    %2674 = vmatpush.msra.mxu0 0.0
    %2675 = vmatpush.msra.mxu0 0.0
    %2676 = vmatpush.msra.mxu0 0.0
    %2677 = vmatpush.msra.mxu0 0.0
    %2678 = vmatpush.msra.mxu0 0.0
    %2679 = vmatpush.msra.mxu0 0.0
    %2680 = vmatpush.msra.mxu0 0.0
    %2681 = vmatpush.msra.mxu0 %v2661
    %2682 = vmatmul.f32.gmra.mxu0 %v2664
    %v2683 = vpop.f32.mrf.mxu0
    %v2684 = vadd.f32 0.0, %v2683
    %2685 = vdwg.mxu0
    %v2687 = vsel %vm1138, %v2502, 0
    %2689 = vmatpush.msra.mxu0 0.0
    %2690 = vmatpush.msra.mxu0 0.0
    %2691 = vmatpush.msra.mxu0 0.0
    %2692 = vmatpush.msra.mxu0 0.0
    %2693 = vmatpush.msra.mxu0 0.0
    %2694 = vmatpush.msra.mxu0 0.0
    %2695 = vmatpush.msra.mxu0 0.0
    %2696 = vmatpush.msra.mxu0 0.0
    %2697 = vmatpush.msra.mxu0 0.0
    %2698 = vmatpush.msra.mxu0 0.0
    %2699 = vmatpush.msra.mxu0 0.0
    %2700 = vmatpush.msra.mxu0 0.0
    %2701 = vmatpush.msra.mxu0 0.0
    %2702 = vmatpush.msra.mxu0 0.0
    %2703 = vmatpush.msra.mxu0 0.0
    %2704 = vmatpush.msra.mxu0 %v1770
    %2705 = vmatmul.f32.gmra.mxu0 %v2687
    %v2706 = vpop.f32.mrf.mxu0
    %v2707 = vadd.f32 0.0, %v2706
    %2708 = vdwg.mxu0
    %v2710 = vsel %vm1138, %v2528, 0
    %2712 = vmatpush.msra.mxu0 0.0
    %2713 = vmatpush.msra.mxu0 0.0
    %2714 = vmatpush.msra.mxu0 0.0
    %2715 = vmatpush.msra.mxu0 0.0
    %2716 = vmatpush.msra.mxu0 0.0
    %2717 = vmatpush.msra.mxu0 0.0
    %2718 = vmatpush.msra.mxu0 0.0
    %2719 = vmatpush.msra.mxu0 0.0
    %2720 = vmatpush.msra.mxu0 0.0
    %2721 = vmatpush.msra.mxu0 0.0
    %2722 = vmatpush.msra.mxu0 0.0
    %2723 = vmatpush.msra.mxu0 0.0
    %2724 = vmatpush.msra.mxu0 0.0
    %2725 = vmatpush.msra.mxu0 0.0
    %2726 = vmatpush.msra.mxu0 0.0
    %2727 = vmatpush.msra.mxu0 %v1796
    %2728 = vmatmul.f32.gmra.mxu0 %v2710
    %v2729 = vpop.f32.mrf.mxu0
    %v2730 = vadd.f32 0.0, %v2729
    %2731 = vdwg.mxu0
    %v2733 = vsel %vm1138, %v2554, 0
    %2735 = vmatpush.msra.mxu0 0.0
    %2736 = vmatpush.msra.mxu0 0.0
    %2737 = vmatpush.msra.mxu0 0.0
    %2738 = vmatpush.msra.mxu0 0.0
    %2739 = vmatpush.msra.mxu0 0.0
    %2740 = vmatpush.msra.mxu0 0.0
    %2741 = vmatpush.msra.mxu0 0.0
    %2742 = vmatpush.msra.mxu0 0.0
    %2743 = vmatpush.msra.mxu0 0.0
    %2744 = vmatpush.msra.mxu0 0.0
    %2745 = vmatpush.msra.mxu0 0.0
    %2746 = vmatpush.msra.mxu0 0.0
    %2747 = vmatpush.msra.mxu0 0.0
    %2748 = vmatpush.msra.mxu0 0.0
    %2749 = vmatpush.msra.mxu0 0.0
    %2750 = vmatpush.msra.mxu0 %v1822
    %2751 = vmatmul.f32.gmra.mxu0 %v2733
    %v2752 = vpop.f32.mrf.mxu0
    %v2753 = vadd.f32 0.0, %v2752
    %2754 = vdwg.mxu0
    %v2756 = vsel %vm1138, %v2580, 0
    %2758 = vmatpush.msra.mxu0 0.0
    %2759 = vmatpush.msra.mxu0 0.0
    %2760 = vmatpush.msra.mxu0 0.0
    %2761 = vmatpush.msra.mxu0 0.0
    %2762 = vmatpush.msra.mxu0 0.0
    %2763 = vmatpush.msra.mxu0 0.0
    %2764 = vmatpush.msra.mxu0 0.0
    %2765 = vmatpush.msra.mxu0 0.0
    %2766 = vmatpush.msra.mxu0 0.0
    %2767 = vmatpush.msra.mxu0 0.0
    %2768 = vmatpush.msra.mxu0 0.0
    %2769 = vmatpush.msra.mxu0 0.0
    %2770 = vmatpush.msra.mxu0 0.0
    %2771 = vmatpush.msra.mxu0 0.0
    %2772 = vmatpush.msra.mxu0 0.0
    %2773 = vmatpush.msra.mxu0 %v1848
    %2774 = vmatmul.f32.gmra.mxu0 %v2756
    %v2775 = vpop.f32.mrf.mxu0
    %v2776 = vadd.f32 0.0, %v2775
    %2777 = vdwg.mxu0
    %v2779 = vsel %vm1138, %v2606, 0
    %2781 = vmatpush.msra.mxu0 0.0
    %2782 = vmatpush.msra.mxu0 0.0
    %2783 = vmatpush.msra.mxu0 0.0
    %2784 = vmatpush.msra.mxu0 0.0
    %2785 = vmatpush.msra.mxu0 0.0
    %2786 = vmatpush.msra.mxu0 0.0
    %2787 = vmatpush.msra.mxu0 0.0
    %2788 = vmatpush.msra.mxu0 0.0
    %2789 = vmatpush.msra.mxu0 0.0
    %2790 = vmatpush.msra.mxu0 0.0
    %2791 = vmatpush.msra.mxu0 0.0
    %2792 = vmatpush.msra.mxu0 0.0
    %2793 = vmatpush.msra.mxu0 0.0
    %2794 = vmatpush.msra.mxu0 0.0
    %2795 = vmatpush.msra.mxu0 0.0
    %2796 = vmatpush.msra.mxu0 %v1874
    %2797 = vmatmul.f32.gmra.mxu0 %v2779
    %v2798 = vpop.f32.mrf.mxu0
    %v2799 = vadd.f32 0.0, %v2798
    %2800 = vdwg.mxu0
    %v2802 = vsel %vm1138, %v2632, 0
    %2804 = vmatpush.msra.mxu0 0.0
    %2805 = vmatpush.msra.mxu0 0.0
    %2806 = vmatpush.msra.mxu0 0.0
    %2807 = vmatpush.msra.mxu0 0.0
    %2808 = vmatpush.msra.mxu0 0.0
    %2809 = vmatpush.msra.mxu0 0.0
    %2810 = vmatpush.msra.mxu0 0.0
    %2811 = vmatpush.msra.mxu0 0.0
    %2812 = vmatpush.msra.mxu0 0.0
    %2813 = vmatpush.msra.mxu0 0.0
    %2814 = vmatpush.msra.mxu0 0.0
    %2815 = vmatpush.msra.mxu0 0.0
    %2816 = vmatpush.msra.mxu0 0.0
    %2817 = vmatpush.msra.mxu0 0.0
    %2818 = vmatpush.msra.mxu0 0.0
    %2819 = vmatpush.msra.mxu0 %v1900
    %2820 = vmatmul.f32.gmra.mxu0 %v2802
    %v2821 = vpop.f32.mrf.mxu0
    %v2822 = vadd.f32 0.0, %v2821
    %2823 = vdwg.mxu0
    %v2825 = vsel %vm1138, %v2658, 0
    %2827 = vmatpush.msra.mxu0 0.0
    %2828 = vmatpush.msra.mxu0 0.0
    %2829 = vmatpush.msra.mxu0 0.0
    %2830 = vmatpush.msra.mxu0 0.0
    %2831 = vmatpush.msra.mxu0 0.0
    %2832 = vmatpush.msra.mxu0 0.0
    %2833 = vmatpush.msra.mxu0 0.0
    %2834 = vmatpush.msra.mxu0 0.0
    %2835 = vmatpush.msra.mxu0 0.0
    %2836 = vmatpush.msra.mxu0 0.0
    %2837 = vmatpush.msra.mxu0 0.0
    %2838 = vmatpush.msra.mxu0 0.0
    %2839 = vmatpush.msra.mxu0 0.0
    %2840 = vmatpush.msra.mxu0 0.0
    %2841 = vmatpush.msra.mxu0 0.0
    %2842 = vmatpush.msra.mxu0 %v1926
    %2843 = vmatmul.f32.gmra.mxu0 %v2825
    %v2844 = vpop.f32.mrf.mxu0
    %v2845 = vadd.f32 0.0, %v2844
    %2846 = vdwg.mxu0
    %v2848 = vsel %vm1138, %v2684, 0
    %2850 = vmatpush.msra.mxu0 0.0
    %2851 = vmatpush.msra.mxu0 0.0
    %2852 = vmatpush.msra.mxu0 0.0
    %2853 = vmatpush.msra.mxu0 0.0
    %2854 = vmatpush.msra.mxu0 0.0
    %2855 = vmatpush.msra.mxu0 0.0
    %2856 = vmatpush.msra.mxu0 0.0
    %2857 = vmatpush.msra.mxu0 0.0
    %2858 = vmatpush.msra.mxu0 0.0
    %2859 = vmatpush.msra.mxu0 0.0
    %2860 = vmatpush.msra.mxu0 0.0
    %2861 = vmatpush.msra.mxu0 0.0
    %2862 = vmatpush.msra.mxu0 0.0
    %2863 = vmatpush.msra.mxu0 0.0
    %2864 = vmatpush.msra.mxu0 0.0
    %2865 = vmatpush.msra.mxu0 %v1952
    %2866 = vmatmul.f32.gmra.mxu0 %v2848
    %v2867 = vpop.f32.mrf.mxu0
    %v2868 = vadd.f32 0.0, %v2867
    %2869 = vdwg.mxu0
    %v2870 = vsel %vm416, %v2707, 0.0
    %v2871 = vsel %vm416, %v2730, 0.0
    %v2872 = vadd.f32 %v2870, %v2871
    %v2873 = vsel %vm416, %v2753, 0.0
    %v2874 = vadd.f32 %v2872, %v2873
    %v2875 = vsel %vm416, %v2776, 0.0
    %v2876 = vadd.f32 %v2874, %v2875
    %v2877 = vsel %vm416, %v2799, 0.0
    %v2878 = vadd.f32 %v2876, %v2877
    %v2879 = vsel %vm416, %v2822, 0.0
    %v2880 = vadd.f32 %v2878, %v2879
    %v2881 = vsel %vm416, %v2845, 0.0
    %v2882 = vadd.f32 %v2880, %v2881
    %v2883 = vsel %vm416, %v2868, 0.0
    %v2884 = vadd.f32 %v2882, %v2883
    %v2885 = vadd.f32 %v2884, %v1990
    %v2886 = vadd.f32 %v1067, %v2885
    %v2887 = vsel %vm416, %v2886, 0.0
    %2888 = vadd.xlane.f32.xlu0 %v2887
    %v2889 = vpop.xlane.xlu0 %2888
    %v2890 = vmul.f32 %v2889, %v287
    %v2891 = vsub.f32 %v2886, %v2890
    %v2892 = vmul.f32 %v2891, %v2891
    %v2893 = vsel %vm416, %v2892, 0.0
    %2894 = vadd.xlane.f32.xlu0 %v2893
    %v2895 = vpop.xlane.xlu0 %2894
    %v2896 = vmul.f32 %v2895, %v287
    %v2897 = vadd.f32 %v2896, 1e-05
    %v2898 = vrsqrt.pop %v2897
    %v2899 = vmul.f32 %v2898, %v2897
    %v2900 = vmul.f32 %v2899, %v2898
    %v2901 = vmul.f32 0.5, %v2900
    %v2902 = vsub.f32 1.5, %v2901
    %v2903 = vmul.f32 %v2898, %v2902
    %vm2904 = vweird.f32 %v2897
    %vm2905 = vweird.f32 %v2898
    %vm2906 = vmor %vm2904, %vm2905
    %v2907 = vsel %vm2906, %v2898, %v2903
    %v2908 = vmul.f32 %v2891, %v2907
    %v2909 = vmul.f32 %v2908, %v2017
    %v2910 = vadd.f32 %v2909, %v2021
    %s2911 = ssub.s32 %s2043, 1
    %p2912 = scmp.gt.s32.totalorder %s2911, 0
    %s2913 = scalar_select %p2912, %s2911, 0
    %v2914 = vstv %s2913
    %vm2915 = vcmp.eq.s32.totalorder %v1119, %v2914
    %p2916 = scmp.gt.s32.totalorder %s2043, 0
    %s2917 = scalar_select %p2916, 1, 0
    %v2918 = vstv %s2917
    %vm2919 = vcmp.eq.s32.totalorder %v2918, 1
    %vm2920 = vmand %vm2915, %vm2919
    %v2921 = vsel %vm2920, 1.0, 0.0
    %v2922 = vmul.f32 %v2910, %v2921
    %v2923 = vsel %vm416, %v2922, 0.0
    %v2924 = vrot.slane %v2923, 4
    %v2925 = vadd.f32 %v2923, %v2924
    %v2926 = vrot.slane %v2925, 2
    %v2927 = vadd.f32 %v2925, %v2926
    %v2928 = vrot.slane %v2927, 1
    %v2929 = vadd.f32 %v2927, %v2928
    %vm2930 = vcmask 1040384
    %v2931 = vsel %vm2930, %v2042, %v2929
    %v2932 = vld [vmem:[#allocation21] sm:$0xff]
    %v2933 = vld [vmem:[#allocation21 + $0x8] sm:$0xff]
    %v2934 = vld [vmem:[#allocation21 + $0x10] sm:$0xff]
    %v2935 = vld [vmem:[#allocation21 + $0x18] sm:$0xff]
    %v2936 = vld [vmem:[#allocation21 + $0x20] sm:$0xff]
    %v2937 = vld [vmem:[#allocation21 + $0x28] sm:$0xff]
    %v2938 = vld [vmem:[#allocation21 + $0x30] sm:$0xff]
    %v2939 = vld [vmem:[#allocation21 + $0x38] sm:$0xff]
    %v2940 = vld [vmem:[%s25] sm:$0x3]
    %v2942 = vperm.slane %v2940, 0
    %v2943 = vperm.slane %v2940, 1
    %v2947 = vsel %vm416, %v2931, 0
    %2949 = vmatpush.msra.mxu0 0.0
    %2950 = vmatpush.msra.mxu0 0.0
    %2951 = vmatpush.msra.mxu0 0.0
    %2952 = vmatpush.msra.mxu0 0.0
    %2953 = vmatpush.msra.mxu0 0.0
    %2954 = vmatpush.msra.mxu0 0.0
    %2955 = vmatpush.msra.mxu0 0.0
    %2956 = vmatpush.msra.mxu0 0.0
    %2957 = vmatpush.msra.mxu0 0.0
    %2958 = vmatpush.msra.mxu0 0.0
    %2959 = vmatpush.msra.mxu0 0.0
    %2960 = vmatpush.msra.mxu0 0.0
    %2961 = vmatpush.msra.mxu0 %v2938
    %2962 = vmatpush.msra.mxu0 %v2936
    %2963 = vmatpush.msra.mxu0 %v2934
    %2964 = vmatpush.msra.mxu0 %v2932
    %2965 = vmatmul.f32.gmra.mxu0 %v2947
    %v2966 = vpop.f32.mrf.mxu0
    %v2967 = vadd.f32 %v2942, %v2966
    %2968 = vdwg.mxu0
    %2969 = vmatpush.msra.mxu0 0.0
    %2970 = vmatpush.msra.mxu0 0.0
    %2971 = vmatpush.msra.mxu0 0.0
    %2972 = vmatpush.msra.mxu0 0.0
    %2973 = vmatpush.msra.mxu0 0.0
    %2974 = vmatpush.msra.mxu0 0.0
    %2975 = vmatpush.msra.mxu0 0.0
    %2976 = vmatpush.msra.mxu0 0.0
    %2977 = vmatpush.msra.mxu0 0.0
    %2978 = vmatpush.msra.mxu0 0.0
    %2979 = vmatpush.msra.mxu0 0.0
    %2980 = vmatpush.msra.mxu0 0.0
    %2981 = vmatpush.msra.mxu0 %v2939
    %2982 = vmatpush.msra.mxu0 %v2937
    %2983 = vmatpush.msra.mxu0 %v2935
    %2984 = vmatpush.msra.mxu0 %v2933
    %2985 = vmatmul.f32.gmra.mxu0 %v2947
    %v2986 = vpop.f32.mrf.mxu0
    %v2987 = vadd.f32 %v2943, %v2986
    %2988 = vdwg.mxu0
    %v2991 = vrot.slane %v2987, 6
    %vm2992 = vcmask 1041408
    %v2993 = vsel %vm2992, %v2967, %v2991
    %2995 = vst [vmem:[#allocation23] sm:$0xf] %v2993
    // Predicated region
    $region142: #{tpu_custom_call.1} parent=1 // pred_check
      _
    $region143: #{tpu_custom_call.1} parent=1 // pred_check_branch
      %2997 = sbr.rel (0) target = $region145
    $region144: #{tpu_custom_call.1} parent=1 // pred_region
      %2999 = vsyncadd [#allocation8], 0
      %s3001 = sshll.u32 [#allocation23], 4
      %s3002 = int_to_ptr.vmem [resolvable:$true] %s3001
      %s3003 = sshll.u32 %s26, 4
      %s3004 = int_to_ptr.hbm [resolvable:$true] %s3003
      %3006 = dma.vmem_to_hbm [thread:$0]  %s3002, 64, %s3004, [#allocation8]
    $region145: #{tpu_custom_call.1} parent=1 // pred_fallthru
      _
    // Predicated region
    $region146: #{tpu_custom_call.1} parent=1 // pred_check
      _
    $region147: #{tpu_custom_call.1} parent=1 // pred_check_branch
      %3008 = sbr.rel (0) target = $region149
    $region148: #{tpu_custom_call.1} parent=1 // pred_region
      %3010 = dma.done [#allocation8], 64
    $region149: #{tpu_custom_call.1} parent=1 // pred_fallthru
      _
    %3011 = vsyncpa [#allocation7], 1
    %3012 = vsyncpa [#allocation10], 1
    %3013 = vsyncpa [#allocation13], 1
    %3014 = vsyncpa [#allocation16], 1
    %3015 = vsyncpa [#allocation19], 1
    %3016 = vsyncpa [#allocation22], 1
    %3017 = vsyncpa [#allocation8], 1

</llo_original>
